<compile_context>
chip_gen: v7x
topology: tpu7x:2x2x1
jax: 0.10.0
libtpu: 0.0.40
codegen_flags: <defaults>
</compile_context>

<pallas_src>
import functools

import jax
import jax.numpy as jnp
from jax import lax
from jax.experimental import pallas as pl
from jax.experimental.pallas import tpu as pltpu

_EPS = 1e-5
_LANE = 128                       # TPU lane width: channel dims padded to this
_TM = 256                         # rows (N*H*W) per pointwise-matmul grid step
_VMEM_LIMIT = 32 * 1024 * 1024    # explicit scoped-VMEM budget (safe on v5e/v6e/v7x)


def _round_up(x, m):
    return ((x + m - 1) // m) * m


def _cparams(n_parallel):
    return pltpu.CompilerParams(
        dimension_semantics=("parallel",) * n_parallel,
        vmem_limit_bytes=_VMEM_LIMIT)


# ----------------------------------------------------------------------------
# Pallas kernels
# ----------------------------------------------------------------------------
def _pw_kernel(x_ref, w_ref, b_ref, o_ref, *, relu):
    """1x1 conv tile: (TM, Cin) @ (Cin, Cout) + folded-BN bias [+ relu]."""
    acc = jnp.dot(x_ref[...], w_ref[...], preferred_element_type=jnp.float32)
    acc = acc + b_ref[...]
    if relu:
        acc = jnp.maximum(acc, 0.0)
    o_ref[...] = acc.astype(o_ref.dtype)


def _pw_res_kernel(x_ref, w_ref, b_ref, s_ref, o_ref):
    """Projection 1x1 conv + BN fused with the identity-shortcut residual.

    The residual is a plain VPU add (no eye-matrix matmul)."""
    acc = jnp.dot(x_ref[...], w_ref[...], preferred_element_type=jnp.float32)
    acc = acc + b_ref[...] + s_ref[...].astype(jnp.float32)
    o_ref[...] = acc.astype(o_ref.dtype)


def _pw_add_kernel(x_ref, w_ref, b_ref, s_ref, ws_ref, bs_ref, o_ref):
    """Projection 1x1 conv + BN fused with the (1x1 conv + BN) shortcut add."""
    acc = jnp.dot(x_ref[...], w_ref[...], preferred_element_type=jnp.float32)
    acc = acc + b_ref[...]
    acc = acc + jnp.dot(s_ref[...], ws_ref[...], preferred_element_type=jnp.float32)
    acc = acc + bs_ref[...]
    o_ref[...] = acc.astype(o_ref.dtype)


def _dw_kernel(x_ref, w_ref, b_ref, o_ref, xp_ref, *, stride, Ho, Wo):
    """Depthwise 3x3 conv + folded BN + ReLU on one (image, 128-channel) tile.

    The 1-pixel 'same' padding is fused here: the tile is written into the
    interior of a zero-filled VMEM scratch, so no padded copy of the expanded
    activation round-trips HBM.
    """
    _, H, W, CT = x_ref.shape
    xp_ref[...] = jnp.zeros_like(xp_ref)
    xp_ref[:, 1:H + 1, 1:W + 1, :] = x_ref[...].astype(jnp.float32)
    xp = xp_ref[...]                                    # (1, H+2, W+2, CT) f32

    w = w_ref[...].astype(jnp.float32)                  # (3, 3, CT)
    taps = [[w[i, j, :] for j in range(3)] for i in range(3)]   # hoisted once

    acc = jnp.zeros((1, Ho, Wo, CT), jnp.float32)
    if stride == 1:
        for dh in range(3):
            for dw in range(3):
                acc = acc + xp[:, dh:dh + Ho, dw:dw + Wo, :] * taps[dh][dw]
    elif stride == 2:
        # De-interleave W into its two stride phases once (2 strided slices)
        # instead of strided-slicing the sublane axis for all 9 taps; strided
        # slicing along H (a major dim) stays cheap.
        xe = xp[:, :, 0::2, :]
        xo = xp[:, :, 1::2, :]
        col = {0: (xe, 0), 1: (xo, 0), 2: (xe, 1)}
        for dh in range(3):
            rows = slice(dh, dh + 2 * (Ho - 1) + 1, 2)
            for dw in range(3):
                src, off = col[dw]
                acc = acc + src[:, rows, off:off + Wo, :] * taps[dh][dw]
    else:   # generic stride fallback (not used by MobileNetV2)
        for dh in range(3):
            for dw in range(3):
                acc = acc + xp[:, dh:dh + (Ho - 1) * stride + 1:stride,
                                  dw:dw + (Wo - 1) * stride + 1:stride, :] * taps[dh][dw]

    o_ref[...] = jnp.maximum(acc + b_ref[...], 0.0).astype(o_ref.dtype)


# ----------------------------------------------------------------------------
# Pallas wrappers
# ----------------------------------------------------------------------------
def _pick_tm(M):
    return min(_TM, _round_up(M, 16))


def _pad_rows(a, rows):
    return a if a.shape[0] == rows else jnp.pad(a, ((0, rows - a.shape[0]), (0, 0)))


def pointwise_conv_bn(x_flat, w, b, *, relu, out_dtype):
    M, Cin = x_flat.shape
    Cout = w.shape[1]
    tm = _pick_tm(M)
    Mp = _round_up(M, tm)
    xr = _pad_rows(x_flat, Mp)
    out = pl.pallas_call(
        functools.partial(_pw_kernel, relu=relu),
        out_shape=jax.ShapeDtypeStruct((Mp, Cout), out_dtype),
        grid=(Mp // tm,),
        in_specs=[
            pl.BlockSpec((tm, Cin), lambda i: (i, 0)),
            pl.BlockSpec((Cin, Cout), lambda i: (0, 0)),
            pl.BlockSpec((1, Cout), lambda i: (0, 0)),
        ],
        out_specs=pl.BlockSpec((tm, Cout), lambda i: (i, 0)),
        compiler_params=_cparams(1),
    )(xr, w, b)
    return out[:M]


def pointwise_conv_bn_res(x_flat, w, b, s_flat):
    M, Cin = x_flat.shape
    Cout = w.shape[1]
    tm = _pick_tm(M)
    Mp = _round_up(M, tm)
    xr = _pad_rows(x_flat, Mp)
    sr = _pad_rows(s_flat, Mp)
    out = pl.pallas_call(
        _pw_res_kernel,
        out_shape=jax.ShapeDtypeStruct((Mp, Cout), jnp.float32),
        grid=(Mp // tm,),
        in_specs=[
            pl.BlockSpec((tm, Cin), lambda i: (i, 0)),
            pl.BlockSpec((Cin, Cout), lambda i: (0, 0)),
            pl.BlockSpec((1, Cout), lambda i: (0, 0)),
            pl.BlockSpec((tm, Cout), lambda i: (i, 0)),
        ],
        out_specs=pl.BlockSpec((tm, Cout), lambda i: (i, 0)),
        compiler_params=_cparams(1),
    )(xr, w, b, sr)
    return out[:M]


def pointwise_conv_bn_add(x_flat, w, b, s_flat, ws, bs):
    M, Cin = x_flat.shape
    Cout = w.shape[1]
    Cs = s_flat.shape[1]
    tm = _pick_tm(M)
    Mp = _round_up(M, tm)
    xr = _pad_rows(x_flat, Mp)
    sr = _pad_rows(s_flat, Mp)
    out = pl.pallas_call(
        _pw_add_kernel,
        out_shape=jax.ShapeDtypeStruct((Mp, Cout), jnp.float32),
        grid=(Mp // tm,),
        in_specs=[
            pl.BlockSpec((tm, Cin), lambda i: (i, 0)),
            pl.BlockSpec((Cin, Cout), lambda i: (0, 0)),
            pl.BlockSpec((1, Cout), lambda i: (0, 0)),
            pl.BlockSpec((tm, Cs), lambda i: (i, 0)),
            pl.BlockSpec((Cs, Cout), lambda i: (0, 0)),
            pl.BlockSpec((1, Cout), lambda i: (0, 0)),
        ],
        out_specs=pl.BlockSpec((tm, Cout), lambda i: (i, 0)),
        compiler_params=_cparams(1),
    )(xr, w, b, sr, ws, bs)
    return out[:M]


def depthwise_conv_bn_relu(x, w, b, stride, Ho, Wo):
    N, H, W, C = x.shape
    ct = _LANE if C % _LANE == 0 else C          # C is lane-padded upstream
    kern = functools.partial(_dw_kernel, stride=stride, Ho=Ho, Wo=Wo)
    return pl.pallas_call(
        kern,
        out_shape=jax.ShapeDtypeStruct((N, Ho, Wo, C), jnp.bfloat16),
        grid=(N, C // ct),
        in_specs=[
            pl.BlockSpec((1, H, W, ct), lambda n, c: (n, 0, 0, c)),
            pl.BlockSpec((3, 3, ct), lambda n, c: (0, 0, c)),
            pl.BlockSpec((1, ct), lambda n, c: (0, c)),
        ],
        out_specs=pl.BlockSpec((1, Ho, Wo, ct), lambda n, c: (n, 0, 0, c)),
        scratch_shapes=[pltpu.VMEM((1, H + 2, W + 2, ct), jnp.float32)],
        compiler_params=_cparams(2),
    )(x, w, b)


# ----------------------------------------------------------------------------
# Block forward (glue in plain JAX, hot paths in Pallas)
# ----------------------------------------------------------------------------
def _fold_bn(bn):
    gamma, beta, mean, var = bn
    scale = gamma / jnp.sqrt(var + _EPS)
    return scale, beta - mean * scale


def _pad1(v, n):
    return jnp.pad(v, (0, n - v.shape[0]))


def _pad2(m, r, c):
    return jnp.pad(m, ((0, r - m.shape[0]), (0, c - m.shape[1])))


def block_forward(x_nchw, params, stride):
    x = jnp.transpose(x_nchw, (0, 2, 3, 1))                      # NHWC, f32
    N, H, W, Cin = x.shape
    planes = params["w1"].shape[1]
    Cout = params["w3"].shape[1]

    cin_p = _round_up(Cin, _LANE)
    mid_p = _round_up(planes, _LANE)
    cout_p = _round_up(Cout, _LANE)

    # quant(x) treated as identity (see TODO at top of file).

    # Fold BN (eval mode) into the conv weights, zero-pad channel dims to lane
    # multiples, and cast weights/activations to bf16 (f32 accumulation).
    s1, b1 = _fold_bn(params["bn1"])
    w1 = _pad2(params["w1"] * s1[None, :], cin_p, mid_p).astype(jnp.bfloat16)
    b1 = _pad1(b1, mid_p)[None, :]

    s2, b2 = _fold_bn(params["bn2"])
    w2 = jnp.pad(params["w2"] * s2[None, None, :],
                 ((0, 0), (0, 0), (0, mid_p - planes))).astype(jnp.bfloat16)
    b2 = _pad1(b2, mid_p)[None, :]

    s3, b3 = _fold_bn(params["bn3"])
    w3 = _pad2(params["w3"] * s3[None, :], mid_p, cout_p).astype(jnp.bfloat16)
    b3 = _pad1(b3, cout_p)[None, :]

    x_lane = jnp.pad(x, ((0, 0), (0, 0), (0, 0), (0, cin_p - Cin))).astype(jnp.bfloat16)
    x_flat = x_lane.reshape(N * H * W, cin_p)

    # --- conv1 (1x1 expand) + bn1 + relu1 : row-tiled MXU matmul ---
    h1 = pointwise_conv_bn(x_flat, w1, b1, relu=True, out_dtype=jnp.bfloat16)
    h1 = h1.reshape(N, H, W, mid_p)

    # --- conv2 (3x3 depthwise, stride, pad=1) + bn2 + relu2 (pad fused) ---
    Ho = (H + 2 - 3) // stride + 1
    Wo = (W + 2 - 3) // stride + 1
    h2 = depthwise_conv_bn_relu(h1, w2, b2, stride, Ho, Wo)
    h2_flat = h2.reshape(N * Ho * Wo, mid_p)

    # --- conv3 (1x1 project) + bn3 (+ fused shortcut) ---
    if stride == 1:
        if "ws" in params:                     # conv+BN shortcut (in != out)
            ss, bs = _fold_bn(params["bns"])
            ws = _pad2(params["ws"] * ss[None, :], cin_p, cout_p).astype(jnp.bfloat16)
            bsb = _pad1(bs, cout_p)[None, :]
            out_flat = pointwise_conv_bn_add(h2_flat, w3, b3, x_flat, ws, bsb)
        else:                                  # identity shortcut (in == out)
            out_flat = pointwise_conv_bn_res(h2_flat, w3, b3, x_flat)
    else:
        out_flat = pointwise_conv_bn(h2_flat, w3, b3, relu=False,
                                     out_dtype=jnp.float32)

    out = out_flat.reshape(N, Ho, Wo, cout_p)[..., :Cout]
    return jnp.transpose(out, (0, 3, 1, 2))                      # back to NCHW


# ----------------------------------------------------------------------------
# Deterministic parameter init (synthetic, matches nn.Module shapes)
# ----------------------------------------------------------------------------
def init_params(key, in_planes, out_planes, expansion, stride):
    planes = expansion * in_planes
    ks = jax.random.split(key, 8)

    def bn_params(k, c):
        k1, k2, k3, k4 = jax.random.split(k, 4)
        gamma = 1.0 + 0.1 * jax.random.normal(k1, (c,), jnp.float32)
        beta = 0.1 * jax.random.normal(k2, (c,), jnp.float32)
        mean = 0.1 * jax.random.normal(k3, (c,), jnp.float32)
        var = jax.random.uniform(k4, (c,), jnp.float32, minval=0.5, maxval=1.5)
        return (gamma, beta, mean, var)

    p = {
        # 1x1 conv weights stored as (Cin, Cout); depthwise as (3, 3, C)
        "w1": 0.1 * jax.random.normal(ks[0], (in_planes, planes), jnp.float32),
        "w2": 0.1 * jax.random.normal(ks[1], (3, 3, planes), jnp.float32),
        "w3": 0.1 * jax.random.normal(ks[2], (planes, out_planes), jnp.float32),
        "bn1": bn_params(ks[3], planes),
        "bn2": bn_params(ks[4], planes),
        "bn3": bn_params(ks[5], out_planes),
    }
    if stride == 1 and in_planes != out_planes:
        p["ws"] = 0.1 * jax.random.normal(ks[6], (in_planes, out_planes), jnp.float32)
        p["bns"] = bn_params(ks[7], out_planes)
    return p


# ----------------------------------------------------------------------------
# Pure-JAX reference (mirrors the PyTorch forward, eval-mode BN, f32)
# ----------------------------------------------------------------------------
def reference_forward(x, params, stride):
    def bn(y, bnp):
        g, b, m, v = bnp
        inv = g / jnp.sqrt(v + _EPS)
        return (y - m[None, :, None, None]) * inv[None, :, None, None] \
            + b[None, :, None, None]

    dn = ("NCHW", "OIHW", "NCHW")
    w1 = jnp.transpose(params["w1"])[:, :, None, None]
    out = lax.conv_general_dilated(x, w1, (1, 1), "VALID", dimension_numbers=dn)
    out = jax.nn.relu(bn(out, params["bn1"]))

    w2 = jnp.transpose(params["w2"], (2, 0, 1))[:, None, :, :]
    out = lax.conv_general_dilated(out, w2, (stride, stride), ((1, 1), (1, 1)),
                                   dimension_numbers=dn,
                                   feature_group_count=w2.shape[0])
    out = jax.nn.relu(bn(out, params["bn2"]))

    w3 = jnp.transpose(params["w3"])[:, :, None, None]
    out = lax.conv_general_dilated(out, w3, (1, 1), "VALID", dimension_numbers=dn)
    out = bn(out, params["bn3"])

    if stride == 1:
        if "ws" in params:
            ws = jnp.transpose(params["ws"])[:, :, None, None]
            sc = lax.conv_general_dilated(x, ws, (1, 1), "VALID",
                                          dimension_numbers=dn)
            sc = bn(sc, params["bns"])
        else:
            sc = x
        out = out + sc
    return out


# ----------------------------------------------------------------------------
if __name__ == "__main__":
    N, H, W = 2, 16, 16
    configs = [
        # (in_planes, out_planes, expansion, stride)
        (4, 8, 2, 1),    # stride-1, conv+BN shortcut (in != out)
        (8, 8, 3, 1),    # stride-1, identity shortcut (in == out)
        (4, 8, 2, 2),    # stride-2, no shortcut
    ]

    fwd = jax.jit(block_forward, static_argnums=(2,))
    key = jax.random.PRNGKey(0)
    for idx, (cin, cout, expn, stride) in enumerate(configs):
        kx, kp, key = jax.random.split(key, 3)
        x = jax.random.normal(kx, (N, cin, H, W), jnp.float32)
        params = init_params(kp, cin, cout, expn, stride)

        out = jax.block_until_ready(fwd(x, params, stride))
        ref = jax.block_until_ready(reference_forward(x, params, stride))

        assert out.shape == ref.shape, (idx, out.shape, ref.shape)
        max_err = float(jnp.max(jnp.abs(out - ref)))
        # Tolerance loosened vs f32-only version: activations/weights are bf16
        # (accumulation stays f32).
        assert jnp.allclose(out, ref, atol=5e-2, rtol=5e-2), (idx, max_err)

    print("KERNEL_OK")
</pallas_src>

<mosaic_0001>
module attributes {stable_mosaic.version = 11 : i64} {
  func.func @_pw_kernel(%arg0: i32, %arg1: memref<256x128xbf16, #tpu.memory_space<vmem>>, %arg2: memref<128x128xbf16, #tpu.memory_space<vmem>>, %arg3: memref<1x128xf32, #tpu.memory_space<vmem>>, %arg4: memref<256x128xbf16, #tpu.memory_space<vmem>>) attributes {dimension_semantics = [#tpu.dimension_semantics<parallel>], iteration_bounds = array<i64: 2>, scalar_prefetch = 0 : i64, scratch_operands = 0 : i64, tpu.core_type = #tpu.core_type<tc>, window_params = [{transform_indices = @transform_0, window_bounds = array<i64: 256, 128>}, {pipeline_mode = #tpu.pipeline_mode<synchronous>, transform_indices = @transform_1, window_bounds = array<i64: 128, 128>}, {pipeline_mode = #tpu.pipeline_mode<synchronous>, transform_indices = @transform_2, window_bounds = array<i64: 1, 128>}, {transform_indices = @transform_3, window_bounds = array<i64: 256, 128>}]} {
    %c0 = arith.constant 0 : index
    %c0_0 = arith.constant 0 : index
    %0 = vector.load %arg1[%c0, %c0_0] : memref<256x128xbf16, #tpu.memory_space<vmem>>, vector<256x128xbf16>
    %c0_1 = arith.constant 0 : index
    %c0_2 = arith.constant 0 : index
    %1 = vector.load %arg2[%c0_1, %c0_2] : memref<128x128xbf16, #tpu.memory_space<vmem>>, vector<128x128xbf16>
    %cst = arith.constant dense<0.000000e+00> : vector<256x128xf32>
    %2 = tpu.matmul %0, %1, %cst {dimension_numbers = #tpu.dot_dimension_numbers<[1], [0], [0], [1], [0, 0, 1, 1], [], []>} : vector<256x128xbf16>, vector<128x128xbf16>, vector<256x128xf32> -> vector<256x128xf32>
    %c0_3 = arith.constant 0 : index
    %c0_4 = arith.constant 0 : index
    %3 = vector.load %arg3[%c0_3, %c0_4] : memref<1x128xf32, #tpu.memory_space<vmem>>, vector<1x128xf32>
    %4 = vector.broadcast %3 : vector<1x128xf32> to vector<256x128xf32>
    %5 = arith.addf %2, %4 : vector<256x128xf32>
    %cst_5 = arith.constant 0.000000e+00 : f32
    %6 = vector.broadcast %cst_5 : f32 to vector<256x128xf32>
    %7 = arith.maximumf %5, %6 : vector<256x128xf32>
    %8 = arith.truncf %7 : vector<256x128xf32> to vector<256x128xbf16>
    %c0_6 = arith.constant 0 : index
    %c0_7 = arith.constant 0 : index
    %9 = vector.load %arg4[%c0_6, %c0_7] : memref<256x128xbf16, #tpu.memory_space<vmem>>, vector<256x128xbf16>
    tpu.vector_store %arg4[%c0_6, %c0_7], %8 {strides = array<i32>} : memref<256x128xbf16, #tpu.memory_space<vmem>>, vector<256x128xbf16>,
    return
  }
  func.func @transform_0(%arg0: i32) -> (i32, i32) {
    %c0_i32 = arith.constant 0 : i32
    %c0_i32_0 = arith.constant 0 : i32
    return %arg0, %c0_i32 : i32, i32
  }
  func.func @transform_1(%arg0: i32) -> (i32, i32) {
    %c0_i32 = arith.constant 0 : i32
    %c0_i32_0 = arith.constant 0 : i32
    %c0_i32_1 = arith.constant 0 : i32
    return %c0_i32, %c0_i32_0 : i32, i32
  }
  func.func @transform_2(%arg0: i32) -> (i32, i32) {
    %c0_i32 = arith.constant 0 : i32
    %c0_i32_0 = arith.constant 0 : i32
    %c0_i32_1 = arith.constant 0 : i32
    return %c0_i32, %c0_i32_0 : i32, i32
  }
  func.func @transform_3(%arg0: i32) -> (i32, i32) {
    %c0_i32 = arith.constant 0 : i32
    %c0_i32_0 = arith.constant 0 : i32
    return %arg0, %c0_i32 : i32, i32
  }
}

module attributes {stable_mosaic.version = 11 : i64} {
  func.func @_dw_kernel(%arg0: i32, %arg1: i32, %arg2: memref<1x16x16x128xbf16, #tpu.memory_space<vmem>>, %arg3: memref<3x3x128xbf16, #tpu.memory_space<vmem>>, %arg4: memref<1x128xf32, #tpu.memory_space<vmem>>, %arg5: memref<1x16x16x128xbf16, #tpu.memory_space<vmem>>, %arg6: memref<1x18x18x128xf32, #tpu.memory_space<vmem>>) attributes {dimension_semantics = [#tpu.dimension_semantics<parallel>, #tpu.dimension_semantics<parallel>], iteration_bounds = array<i64: 2, 1>, scalar_prefetch = 0 : i64, scratch_operands = 1 : i64, tpu.core_type = #tpu.core_type<tc>, window_params = [{transform_indices = @transform_0, window_bounds = array<i64: 1, 16, 16, 128>}, {transform_indices = @transform_1, window_bounds = array<i64: 3, 3, 128>}, {transform_indices = @transform_2, window_bounds = array<i64: 1, 128>}, {transform_indices = @transform_3, window_bounds = array<i64: 1, 16, 16, 128>}]} {
    %cst = arith.constant 0.000000e+00 : f32
    %0 = vector.broadcast %cst : f32 to vector<1x18x18x128xf32>
    %c0 = arith.constant 0 : index
    %c0_0 = arith.constant 0 : index
    %c0_1 = arith.constant 0 : index
    %c0_2 = arith.constant 0 : index
    %1 = vector.load %arg6[%c0, %c0_0, %c0_1, %c0_2] : memref<1x18x18x128xf32, #tpu.memory_space<vmem>>, vector<1x18x18x128xf32>
    tpu.vector_store %arg6[%c0, %c0_0, %c0_1, %c0_2], %0 {strides = array<i32>} : memref<1x18x18x128xf32, #tpu.memory_space<vmem>>, vector<1x18x18x128xf32>,
    %c0_3 = arith.constant 0 : index
    %c0_4 = arith.constant 0 : index
    %c0_5 = arith.constant 0 : index
    %c0_6 = arith.constant 0 : index
    %2 = vector.load %arg2[%c0_3, %c0_4, %c0_5, %c0_6] : memref<1x16x16x128xbf16, #tpu.memory_space<vmem>>, vector<1x16x16x128xbf16>
    %3 = arith.extf %2 : vector<1x16x16x128xbf16> to vector<1x16x16x128xf32>
    %c0_7 = arith.constant 0 : index
    %c1 = arith.constant 1 : index
    %c1_8 = arith.constant 1 : index
    %c0_9 = arith.constant 0 : index
    %4 = vector.load %arg6[%c0_7, %c1, %c1_8, %c0_9] : memref<1x18x18x128xf32, #tpu.memory_space<vmem>>, vector<1x16x16x128xf32>
    tpu.vector_store %arg6[%c0_7, %c1, %c1_8, %c0_9], %3 {strides = array<i32>} : memref<1x18x18x128xf32, #tpu.memory_space<vmem>>, vector<1x16x16x128xf32>,
    %c0_10 = arith.constant 0 : index
    %c0_11 = arith.constant 0 : index
    %c0_12 = arith.constant 0 : index
    %c0_13 = arith.constant 0 : index
    %5 = vector.load %arg6[%c0_10, %c0_11, %c0_12, %c0_13] : memref<1x18x18x128xf32, #tpu.memory_space<vmem>>, vector<1x18x18x128xf32>
    %c0_14 = arith.constant 0 : index
    %c0_15 = arith.constant 0 : index
    %c0_16 = arith.constant 0 : index
    %6 = vector.load %arg3[%c0_14, %c0_15, %c0_16] : memref<3x3x128xbf16, #tpu.memory_space<vmem>>, vector<3x3x128xbf16>
    %7 = arith.extf %6 : vector<3x3x128xbf16> to vector<3x3x128xf32>
    %8 = vector.extract_strided_slice %7 {offsets = [0, 0, 0], sizes = [1, 1, 128], strides = [1, 1, 1]} : vector<3x3x128xf32> to vector<1x1x128xf32>
    %9 = vector.shape_cast %8 : vector<1x1x128xf32> to vector<128xf32>
    %10 = vector.extract_strided_slice %7 {offsets = [0, 1, 0], sizes = [1, 1, 128], strides = [1, 1, 1]} : vector<3x3x128xf32> to vector<1x1x128xf32>
    %11 = vector.shape_cast %10 : vector<1x1x128xf32> to vector<128xf32>
    %12 = vector.extract_strided_slice %7 {offsets = [0, 2, 0], sizes = [1, 1, 128], strides = [1, 1, 1]} : vector<3x3x128xf32> to vector<1x1x128xf32>
    %13 = vector.shape_cast %12 : vector<1x1x128xf32> to vector<128xf32>
    %14 = vector.extract_strided_slice %7 {offsets = [1, 0, 0], sizes = [1, 1, 128], strides = [1, 1, 1]} : vector<3x3x128xf32> to vector<1x1x128xf32>
    %15 = vector.shape_cast %14 : vector<1x1x128xf32> to vector<128xf32>
    %16 = vector.extract_strided_slice %7 {offsets = [1, 1, 0], sizes = [1, 1, 128], strides = [1, 1, 1]} : vector<3x3x128xf32> to vector<1x1x128xf32>
    %17 = vector.shape_cast %16 : vector<1x1x128xf32> to vector<128xf32>
    %18 = vector.extract_strided_slice %7 {offsets = [1, 2, 0], sizes = [1, 1, 128], strides = [1, 1, 1]} : vector<3x3x128xf32> to vector<1x1x128xf32>
    %19 = vector.shape_cast %18 : vector<1x1x128xf32> to vector<128xf32>
    %20 = vector.extract_strided_slice %7 {offsets = [2, 0, 0], sizes = [1, 1, 128], strides = [1, 1, 1]} : vector<3x3x128xf32> to vector<1x1x128xf32>
    %21 = vector.shape_cast %20 : vector<1x1x128xf32> to vector<128xf32>
    %22 = vector.extract_strided_slice %7 {offsets = [2, 1, 0], sizes = [1, 1, 128], strides = [1, 1, 1]} : vector<3x3x128xf32> to vector<1x1x128xf32>
    %23 = vector.shape_cast %22 : vector<1x1x128xf32> to vector<128xf32>
    %24 = vector.extract_strided_slice %7 {offsets = [2, 2, 0], sizes = [1, 1, 128], strides = [1, 1, 1]} : vector<3x3x128xf32> to vector<1x1x128xf32>
    %25 = vector.shape_cast %24 : vector<1x1x128xf32> to vector<128xf32>
    %cst_17 = arith.constant 0.000000e+00 : f32
    %26 = vector.broadcast %cst_17 : f32 to vector<1x16x16x128xf32>
    %27 = vector.extract_strided_slice %5 {offsets = [0, 0, 0, 0], sizes = [1, 16, 16, 128], strides = [1, 1, 1, 1]} : vector<1x18x18x128xf32> to vector<1x16x16x128xf32>
    %28 = vector.shape_cast %9 : vector<128xf32> to vector<1x1x1x128xf32>
    %29 = vector.broadcast %28 : vector<1x1x1x128xf32> to vector<1x16x16x128xf32>
    %30 = arith.mulf %27, %29 : vector<1x16x16x128xf32>
    %31 = arith.addf %26, %30 : vector<1x16x16x128xf32>
    %32 = vector.extract_strided_slice %5 {offsets = [0, 0, 1, 0], sizes = [1, 16, 16, 128], strides = [1, 1, 1, 1]} : vector<1x18x18x128xf32> to vector<1x16x16x128xf32>
    %33 = vector.shape_cast %11 : vector<128xf32> to vector<1x1x1x128xf32>
    %34 = vector.broadcast %33 : vector<1x1x1x128xf32> to vector<1x16x16x128xf32>
    %35 = arith.mulf %32, %34 : vector<1x16x16x128xf32>
    %36 = arith.addf %31, %35 : vector<1x16x16x128xf32>
    %37 = vector.extract_strided_slice %5 {offsets = [0, 0, 2, 0], sizes = [1, 16, 16, 128], strides = [1, 1, 1, 1]} : vector<1x18x18x128xf32> to vector<1x16x16x128xf32>
    %38 = vector.shape_cast %13 : vector<128xf32> to vector<1x1x1x128xf32>
    %39 = vector.broadcast %38 : vector<1x1x1x128xf32> to vector<1x16x16x128xf32>
    %40 = arith.mulf %37, %39 : vector<1x16x16x128xf32>
    %41 = arith.addf %36, %40 : vector<1x16x16x128xf32>
    %42 = vector.extract_strided_slice %5 {offsets = [0, 1, 0, 0], sizes = [1, 16, 16, 128], strides = [1, 1, 1, 1]} : vector<1x18x18x128xf32> to vector<1x16x16x128xf32>
    %43 = vector.shape_cast %15 : vector<128xf32> to vector<1x1x1x128xf32>
    %44 = vector.broadcast %43 : vector<1x1x1x128xf32> to vector<1x16x16x128xf32>
    %45 = arith.mulf %42, %44 : vector<1x16x16x128xf32>
    %46 = arith.addf %41, %45 : vector<1x16x16x128xf32>
    %47 = vector.extract_strided_slice %5 {offsets = [0, 1, 1, 0], sizes = [1, 16, 16, 128], strides = [1, 1, 1, 1]} : vector<1x18x18x128xf32> to vector<1x16x16x128xf32>
    %48 = vector.shape_cast %17 : vector<128xf32> to vector<1x1x1x128xf32>
    %49 = vector.broadcast %48 : vector<1x1x1x128xf32> to vector<1x16x16x128xf32>
    %50 = arith.mulf %47, %49 : vector<1x16x16x128xf32>
    %51 = arith.addf %46, %50 : vector<1x16x16x128xf32>
    %52 = vector.extract_strided_slice %5 {offsets = [0, 1, 2, 0], sizes = [1, 16, 16, 128], strides = [1, 1, 1, 1]} : vector<1x18x18x128xf32> to vector<1x16x16x128xf32>
    %53 = vector.shape_cast %19 : vector<128xf32> to vector<1x1x1x128xf32>
    %54 = vector.broadcast %53 : vector<1x1x1x128xf32> to vector<1x16x16x128xf32>
    %55 = arith.mulf %52, %54 : vector<1x16x16x128xf32>
    %56 = arith.addf %51, %55 : vector<1x16x16x128xf32>
    %57 = vector.extract_strided_slice %5 {offsets = [0, 2, 0, 0], sizes = [1, 16, 16, 128], strides = [1, 1, 1, 1]} : vector<1x18x18x128xf32> to vector<1x16x16x128xf32>
    %58 = vector.shape_cast %21 : vector<128xf32> to vector<1x1x1x128xf32>
    %59 = vector.broadcast %58 : vector<1x1x1x128xf32> to vector<1x16x16x128xf32>
    %60 = arith.mulf %57, %59 : vector<1x16x16x128xf32>
    %61 = arith.addf %56, %60 : vector<1x16x16x128xf32>
    %62 = vector.extract_strided_slice %5 {offsets = [0, 2, 1, 0], sizes = [1, 16, 16, 128], strides = [1, 1, 1, 1]} : vector<1x18x18x128xf32> to vector<1x16x16x128xf32>
    %63 = vector.shape_cast %23 : vector<128xf32> to vector<1x1x1x128xf32>
    %64 = vector.broadcast %63 : vector<1x1x1x128xf32> to vector<1x16x16x128xf32>
    %65 = arith.mulf %62, %64 : vector<1x16x16x128xf32>
    %66 = arith.addf %61, %65 : vector<1x16x16x128xf32>
    %67 = vector.extract_strided_slice %5 {offsets = [0, 2, 2, 0], sizes = [1, 16, 16, 128], strides = [1, 1, 1, 1]} : vector<1x18x18x128xf32> to vector<1x16x16x128xf32>
    %68 = vector.shape_cast %25 : vector<128xf32> to vector<1x1x1x128xf32>
    %69 = vector.broadcast %68 : vector<1x1x1x128xf32> to vector<1x16x16x128xf32>
    %70 = arith.mulf %67, %69 : vector<1x16x16x128xf32>
    %71 = arith.addf %66, %70 : vector<1x16x16x128xf32>
    %c0_18 = arith.constant 0 : index
    %c0_19 = arith.constant 0 : index
    %72 = vector.load %arg4[%c0_18, %c0_19] : memref<1x128xf32, #tpu.memory_space<vmem>>, vector<1x128xf32>
    %73 = vector.shape_cast %72 : vector<1x128xf32> to vector<1x1x1x128xf32>
    %74 = vector.broadcast %73 : vector<1x1x1x128xf32> to vector<1x16x16x128xf32>
    %75 = arith.addf %71, %74 : vector<1x16x16x128xf32>
    %cst_20 = arith.constant 0.000000e+00 : f32
    %76 = vector.broadcast %cst_20 : f32 to vector<1x16x16x128xf32>
    %77 = arith.maximumf %75, %76 : vector<1x16x16x128xf32>
    %78 = arith.truncf %77 : vector<1x16x16x128xf32> to vector<1x16x16x128xbf16>
    %c0_21 = arith.constant 0 : index
    %c0_22 = arith.constant 0 : index
    %c0_23 = arith.constant 0 : index
    %c0_24 = arith.constant 0 : index
    %79 = vector.load %arg5[%c0_21, %c0_22, %c0_23, %c0_24] : memref<1x16x16x128xbf16, #tpu.memory_space<vmem>>, vector<1x16x16x128xbf16>
    tpu.vector_store %arg5[%c0_21, %c0_22, %c0_23, %c0_24], %78 {strides = array<i32>} : memref<1x16x16x128xbf16, #tpu.memory_space<vmem>>, vector<1x16x16x128xbf16>,
    return
  }
  func.func @transform_0(%arg0: i32, %arg1: i32) -> (i32, i32, i32, i32) {
    %c0_i32 = arith.constant 0 : i32
    %c0_i32_0 = arith.constant 0 : i32
    %c0_i32_1 = arith.constant 0 : i32
    return %arg0, %c0_i32, %c0_i32_0, %arg1 : i32, i32, i32, i32
  }
  func.func @transform_1(%arg0: i32, %arg1: i32) -> (i32, i32, i32) {
    %c0_i32 = arith.constant 0 : i32
    %c0_i32_0 = arith.constant 0 : i32
    %c0_i32_1 = arith.constant 0 : i32
    return %c0_i32, %c0_i32_0, %arg1 : i32, i32, i32
  }
  func.func @transform_2(%arg0: i32, %arg1: i32) -> (i32, i32) {
    %c0_i32 = arith.constant 0 : i32
    %c0_i32_0 = arith.constant 0 : i32
    return %c0_i32, %arg1 : i32, i32
  }
  func.func @transform_3(%arg0: i32, %arg1: i32) -> (i32, i32, i32, i32) {
    %c0_i32 = arith.constant 0 : i32
    %c0_i32_0 = arith.constant 0 : i32
    %c0_i32_1 = arith.constant 0 : i32
    return %arg0, %c0_i32, %c0_i32_0, %arg1 : i32, i32, i32, i32
  }
}

module attributes {stable_mosaic.version = 11 : i64} {
  func.func @_pw_add_kernel(%arg0: i32, %arg1: memref<256x128xbf16, #tpu.memory_space<vmem>>, %arg2: memref<128x128xbf16, #tpu.memory_space<vmem>>, %arg3: memref<1x128xf32, #tpu.memory_space<vmem>>, %arg4: memref<256x128xbf16, #tpu.memory_space<vmem>>, %arg5: memref<128x128xbf16, #tpu.memory_space<vmem>>, %arg6: memref<1x128xf32, #tpu.memory_space<vmem>>, %arg7: memref<256x128xf32, #tpu.memory_space<vmem>>) attributes {dimension_semantics = [#tpu.dimension_semantics<parallel>], iteration_bounds = array<i64: 2>, scalar_prefetch = 0 : i64, scratch_operands = 0 : i64, tpu.core_type = #tpu.core_type<tc>, window_params = [{transform_indices = @transform_0, window_bounds = array<i64: 256, 128>}, {pipeline_mode = #tpu.pipeline_mode<synchronous>, transform_indices = @transform_1, window_bounds = array<i64: 128, 128>}, {pipeline_mode = #tpu.pipeline_mode<synchronous>, transform_indices = @transform_2, window_bounds = array<i64: 1, 128>}, {transform_indices = @transform_3, window_bounds = array<i64: 256, 128>}, {pipeline_mode = #tpu.pipeline_mode<synchronous>, transform_indices = @transform_4, window_bounds = array<i64: 128, 128>}, {pipeline_mode = #tpu.pipeline_mode<synchronous>, transform_indices = @transform_5, window_bounds = array<i64: 1, 128>}, {transform_indices = @transform_6, window_bounds = array<i64: 256, 128>}]} {
    %c0 = arith.constant 0 : index
    %c0_0 = arith.constant 0 : index
    %0 = vector.load %arg1[%c0, %c0_0] : memref<256x128xbf16, #tpu.memory_space<vmem>>, vector<256x128xbf16>
    %c0_1 = arith.constant 0 : index
    %c0_2 = arith.constant 0 : index
    %1 = vector.load %arg2[%c0_1, %c0_2] : memref<128x128xbf16, #tpu.memory_space<vmem>>, vector<128x128xbf16>
    %cst = arith.constant dense<0.000000e+00> : vector<256x128xf32>
    %2 = tpu.matmul %0, %1, %cst {dimension_numbers = #tpu.dot_dimension_numbers<[1], [0], [0], [1], [0, 0, 1, 1], [], []>} : vector<256x128xbf16>, vector<128x128xbf16>, vector<256x128xf32> -> vector<256x128xf32>
    %c0_3 = arith.constant 0 : index
    %c0_4 = arith.constant 0 : index
    %3 = vector.load %arg3[%c0_3, %c0_4] : memref<1x128xf32, #tpu.memory_space<vmem>>, vector<1x128xf32>
    %4 = vector.broadcast %3 : vector<1x128xf32> to vector<256x128xf32>
    %5 = arith.addf %2, %4 : vector<256x128xf32>
    %c0_5 = arith.constant 0 : index
    %c0_6 = arith.constant 0 : index
    %6 = vector.load %arg4[%c0_5, %c0_6] : memref<256x128xbf16, #tpu.memory_space<vmem>>, vector<256x128xbf16>
    %c0_7 = arith.constant 0 : index
    %c0_8 = arith.constant 0 : index
    %7 = vector.load %arg5[%c0_7, %c0_8] : memref<128x128xbf16, #tpu.memory_space<vmem>>, vector<128x128xbf16>
    %cst_9 = arith.constant dense<0.000000e+00> : vector<256x128xf32>
    %8 = tpu.matmul %6, %7, %cst_9 {dimension_numbers = #tpu.dot_dimension_numbers<[1], [0], [0], [1], [0, 0, 1, 1], [], []>} : vector<256x128xbf16>, vector<128x128xbf16>, vector<256x128xf32> -> vector<256x128xf32>
    %9 = arith.addf %5, %8 : vector<256x128xf32>
    %c0_10 = arith.constant 0 : index
    %c0_11 = arith.constant 0 : index
    %10 = vector.load %arg6[%c0_10, %c0_11] : memref<1x128xf32, #tpu.memory_space<vmem>>, vector<1x128xf32>
    %11 = vector.broadcast %10 : vector<1x128xf32> to vector<256x128xf32>
    %12 = arith.addf %9, %11 : vector<256x128xf32>
    %c0_12 = arith.constant 0 : index
    %c0_13 = arith.constant 0 : index
    %13 = vector.load %arg7[%c0_12, %c0_13] : memref<256x128xf32, #tpu.memory_space<vmem>>, vector<256x128xf32>
    tpu.vector_store %arg7[%c0_12, %c0_13], %12 {strides = array<i32>} : memref<256x128xf32, #tpu.memory_space<vmem>>, vector<256x128xf32>,
    return
  }
  func.func @transform_0(%arg0: i32) -> (i32, i32) {
    %c0_i32 = arith.constant 0 : i32
    %c0_i32_0 = arith.constant 0 : i32
    return %arg0, %c0_i32 : i32, i32
  }
  func.func @transform_1(%arg0: i32) -> (i32, i32) {
    %c0_i32 = arith.constant 0 : i32
    %c0_i32_0 = arith.constant 0 : i32
    %c0_i32_1 = arith.constant 0 : i32
    return %c0_i32, %c0_i32_0 : i32, i32
  }
  func.func @transform_2(%arg0: i32) -> (i32, i32) {
    %c0_i32 = arith.constant 0 : i32
    %c0_i32_0 = arith.constant 0 : i32
    %c0_i32_1 = arith.constant 0 : i32
    return %c0_i32, %c0_i32_0 : i32, i32
  }
  func.func @transform_3(%arg0: i32) -> (i32, i32) {
    %c0_i32 = arith.constant 0 : i32
    %c0_i32_0 = arith.constant 0 : i32
    return %arg0, %c0_i32 : i32, i32
  }
  func.func @transform_4(%arg0: i32) -> (i32, i32) {
    %c0_i32 = arith.constant 0 : i32
    %c0_i32_0 = arith.constant 0 : i32
    %c0_i32_1 = arith.constant 0 : i32
    return %c0_i32, %c0_i32_0 : i32, i32
  }
  func.func @transform_5(%arg0: i32) -> (i32, i32) {
    %c0_i32 = arith.constant 0 : i32
    %c0_i32_0 = arith.constant 0 : i32
    %c0_i32_1 = arith.constant 0 : i32
    return %c0_i32, %c0_i32_0 : i32, i32
  }
  func.func @transform_6(%arg0: i32) -> (i32, i32) {
    %c0_i32 = arith.constant 0 : i32
    %c0_i32_0 = arith.constant 0 : i32
    return %arg0, %c0_i32 : i32, i32
  }
}

</mosaic_0001>

<llo_original>
// kernel: block_forward.3
$region0: #{block_forward.3}
  #allocation0 [shape = 'u32[]', space=smem, size = 0x4, offset = 0x4, fixed_abs, tag = 'smem constant byte address 0x4 - core index']
  #allocation1 [shape = 'u32[144,128]{1,0:T(1,128)}', space=vmem, size = 0x12000, scoped, tag = 'internal scratch']
  %s0 = inlined_call_operand.vmem [shape: bf16[512,128], index: 0, kind: input, shape index: {}]
  %s1 = inlined_call_operand.vmem [shape: bf16[128,128], index: 1, kind: input, shape index: {}]
  %s2 = inlined_call_operand.vmem [shape: f32[1,128], index: 2, kind: input, shape index: {}]
  %s3 = inlined_call_operand.vmem [shape: bf16[512,128], index: 3, kind: output, shape index: {}]
  %s4 = sld [smem:[#allocation0]]
  $region45: #{block_forward.3} parent=0
    _
  %s6 = ssub.s32 1, %s4
  %s7 = scalar_select 0, %s6, %s4
  loop: start=0, step=1, limit=4
  $region2: #{block_forward.3} parent=0 // loop_pre_header
    _
  $region3: #{block_forward.3} parent=0 // loop_header
    %s9 = sphi 0, %s13
    %p10 = scmp.ge.s32.totalorder %s9, 4
    %s19 = sphi 0, %s21
    %s22 = sphi 0, %s19
    %s23 = sphi 0, %s22
    %s39 = sphi 0, %s23
    %s43 = sphi 0, %s43
    %s45 = sphi 0, %s43
    %s46 = sphi 0, %s45
    %s60 = sphi 0, %s46
    %s64 = sphi 0, %s64
    %s66 = sphi 0, %s64
    %s67 = sphi 0, %s66
    %s81 = sphi 0, %s67
    %s87 = sphi 0, %s89
    %s90 = sphi 0, %s87
    %s91 = sphi 0, %s90
    %s107 = sphi 0, %s91
  $region4: #{block_forward.3} parent=0 // loop_header_branch
    %12 = sbr.rel (%p10) target = $region8
  $region5: #{block_forward.3} parent=0 // loop_body
    %s14 = ssub.s32 %s9, 1
    %s15 = ssub.s32 %s9, 2
    %s16 = sadd.s32 %s9, 1
    %s17 = ssub.s32 %s9, %s16
    %p18 = scmp.eq.s32.totalorder %s17, 0
    %s20 = sadd.s32 %s19, 1
    %s21 = scalar_select %p18, %s19, %s20
    %p24 = pneg %p18
    %p25 = scmp.eq.s32.totalorder %s9, 1
    %p26 = por %p24, %p25
    %p27 = scmp.ne.s32.totalorder %s19, %s22
    %p28 = scmp.eq.s32.totalorder %s9, 0
    %p29 = por %p27, %p28
    %p30 = scmp.ne.s32.totalorder %s19, %s22
    %p31 = scmp.eq.s32.totalorder %s14, 1
    %p32 = por %p30, %p31
    %p33 = scmp.ne.s32.totalorder %s22, %s23
    %p34 = scmp.eq.s32.totalorder %s14, 0
    %p35 = por %p33, %p34
    %p36 = scmp.ne.s32.totalorder %s22, %s23
    %p37 = scmp.eq.s32.totalorder %s15, 1
    %p38 = por %p36, %p37
    %p40 = scmp.ne.s32.totalorder %s23, %s39
    %p41 = scmp.eq.s32.totalorder %s15, 0
    %p42 = por %p40, %p41
    %s44 = sadd.s32 %s43, 1
    %p47 = scmp.eq.s32.totalorder %s9, 1
    %p48 = scmp.ne.s32.totalorder %s43, %s45
    %p49 = scmp.eq.s32.totalorder %s9, 0
    %p50 = por %p48, %p49
    %p51 = scmp.ne.s32.totalorder %s43, %s45
    %p52 = scmp.eq.s32.totalorder %s14, 1
    %p53 = por %p51, %p52
    %p54 = scmp.ne.s32.totalorder %s45, %s46
    %p55 = scmp.eq.s32.totalorder %s14, 0
    %p56 = por %p54, %p55
    %p57 = scmp.ne.s32.totalorder %s45, %s46
    %p58 = scmp.eq.s32.totalorder %s15, 1
    %p59 = por %p57, %p58
    %p61 = scmp.ne.s32.totalorder %s46, %s60
    %p62 = scmp.eq.s32.totalorder %s15, 0
    %p63 = por %p61, %p62
    %s65 = sadd.s32 %s64, 1
    %p68 = scmp.eq.s32.totalorder %s9, 1
    %p69 = scmp.ne.s32.totalorder %s64, %s66
    %p70 = scmp.eq.s32.totalorder %s9, 0
    %p71 = por %p69, %p70
    %p72 = scmp.ne.s32.totalorder %s64, %s66
    %p73 = scmp.eq.s32.totalorder %s14, 1
    %p74 = por %p72, %p73
    %p75 = scmp.ne.s32.totalorder %s66, %s67
    %p76 = scmp.eq.s32.totalorder %s14, 0
    %p77 = por %p75, %p76
    %p78 = scmp.ne.s32.totalorder %s66, %s67
    %p79 = scmp.eq.s32.totalorder %s15, 1
    %p80 = por %p78, %p79
    %p82 = scmp.ne.s32.totalorder %s67, %s81
    %p83 = scmp.eq.s32.totalorder %s15, 0
    %p84 = por %p82, %p83
    %s85 = ssub.s32 %s9, %s16
    %p86 = scmp.eq.s32.totalorder %s85, 0
    %s88 = sadd.s32 %s87, 1
    %s89 = scalar_select %p86, %s87, %s88
    %p92 = pneg %p86
    %p93 = scmp.eq.s32.totalorder %s9, 1
    %p94 = por %p92, %p93
    %p95 = scmp.ne.s32.totalorder %s87, %s90
    %p96 = scmp.eq.s32.totalorder %s9, 0
    %p97 = por %p95, %p96
    %p98 = scmp.ne.s32.totalorder %s87, %s90
    %p99 = scmp.eq.s32.totalorder %s14, 1
    %p100 = por %p98, %p99
    %p101 = scmp.ne.s32.totalorder %s90, %s91
    %p102 = scmp.eq.s32.totalorder %s14, 0
    %p103 = por %p101, %p102
    %p104 = scmp.ne.s32.totalorder %s90, %s91
    %p105 = scmp.eq.s32.totalorder %s15, 1
    %p106 = por %p104, %p105
    %p108 = scmp.ne.s32.totalorder %s91, %s107
    %p109 = scmp.eq.s32.totalorder %s15, 0
    %p110 = por %p108, %p109
    %p111 = scmp.le.s32.totalorder 1, %s9
    %p112 = scmp.lt.s32.totalorder %s9, 3
    %p113 = pnand %p111, %p112
    %p114 = pneg %p113
    // Predicated region
    $region9: #{block_forward.3} parent=5 // pred_check
      _
    $region10: #{block_forward.3} parent=5 // pred_check_branch
      %116 = sbr.rel (%p113) target = $region12
    $region11: #{block_forward.3} parent=5 // pred_region
      %s117 = ssub.s32 %s9, 1
      // Predicated region
      $region13: #{block_forward.3} parent=11 // pred_check
        %p118 = pneg %p56
      $region14: #{block_forward.3} parent=11 // pred_check_branch
        %120 = sbr.rel (%p118) target = $region16
      $region15: #{block_forward.3} parent=11 // pred_region
        _
      $region16: #{block_forward.3} parent=11 // pred_fallthru
        _
      // Predicated region
      $region17: #{block_forward.3} parent=11 // pred_check
        %p121 = pneg %p77
      $region18: #{block_forward.3} parent=11 // pred_check_branch
        %123 = sbr.rel (%p121) target = $region20
      $region19: #{block_forward.3} parent=11 // pred_region
        _
      $region20: #{block_forward.3} parent=11 // pred_fallthru
        _
    $region12: #{block_forward.3} parent=5 // pred_fallthru
      _
    %p124 = scmp.lt.s32.totalorder %s9, 2
    // Predicated region
    $region21: #{block_forward.3} parent=5 // pred_check
      %p125 = pneg %p124
    $region22: #{block_forward.3} parent=5 // pred_check_branch
      %127 = sbr.rel (%p125) target = $region24
    $region23: #{block_forward.3} parent=5 // pred_region
      // Predicated region
      $region25: #{block_forward.3} parent=23 // pred_check
        %p128 = pneg %p29
      $region26: #{block_forward.3} parent=23 // pred_check_branch
        %130 = sbr.rel (%p128) target = $region28
      $region27: #{block_forward.3} parent=23 // pred_region
        %s131 = smul.u32 32, %s9
        %p132 = scmp.lt.s32.totalorder %s131, 63
        %s133 = scalar_select %p132, %s131, 63
        %s134 = smul.addr %s133, 4
        %s135 = scalar_lea.vmem %s0, %s134
        %s136 = smul.u32 32, %s9
      $region28: #{block_forward.3} parent=23 // pred_fallthru
        _
    $region24: #{block_forward.3} parent=5 // pred_fallthru
      _
    %p137 = scmp.le.s32.totalorder 1, %s9
    %p138 = scmp.lt.s32.totalorder %s9, 3
    %p139 = pnand %p137, %p138
    %p140 = pneg %p139
    // Predicated region
    $region29: #{block_forward.3} parent=5 // pred_check
      _
    $region30: #{block_forward.3} parent=5 // pred_check_branch
      %142 = sbr.rel (%p139) target = $region32
    $region31: #{block_forward.3} parent=5 // pred_region
      %s143 = ssub.s32 %s9, 1
      %s144 = smul.u32 32, %s14
      %p145 = scmp.lt.s32.totalorder %s144, 63
      %s146 = scalar_select %p145, %s144, 63
      %s147 = smul.addr %s146, 4
      %s148 = scalar_lea.vmem %s0, %s147
      %p149 = pneg %p35
      %p150 = pneg %p32
      %p151 = pneg %p56
      %p152 = pneg %p53
      %p153 = pneg %p77
      %p154 = pneg %p74
      %p155 = pneg %p103
      %p156 = pneg %p100
      %s157 = smul.u32 32, %s14
      %p158 = scmp.lt.s32.totalorder %s157, 63
      %s159 = scalar_select %p158, %s157, 63
      %s160 = smul.addr %s159, 4
      %s161 = scalar_lea.vmem %s3, %s160
      %s162 = smul.u32 32, %s14
      %p163 = scmp.lt.s32.totalorder %s162, 63
      %s164 = scalar_select %p163, %s162, 63
      %s165 = smul.addr %s164, 4
      %s166 = scalar_lea.vmem %s0, %s165
      %s167 = smul.u32 32, %s14
      %s168 = smul.u32 32, %s14
      %p169 = scmp.lt.s32.totalorder %s168, 63
      %s170 = scalar_select %p169, %s168, 63
      %s171 = smul.addr %s170, 4
      %s172 = scalar_lea.vmem %s3, %s171
      %s173 = smul.u32 32, %s14
      %v175 = vld [vmem:[%s166] sm:$0xf]
      %v176 = vld [vmem:[%s166 + $0x4] sm:$0xf]
      %v177 = vld [vmem:[%s166 + $0x8] sm:$0xf]
      %v178 = vld [vmem:[%s166 + $0xc] sm:$0xf]
      %v179 = vld [vmem:[%s166 + $0x10] sm:$0xf]
      %v180 = vld [vmem:[%s166 + $0x14] sm:$0xf]
      %v181 = vld [vmem:[%s166 + $0x18] sm:$0xf]
      %v182 = vld [vmem:[%s166 + $0x1c] sm:$0xf]
      %v183 = vld [vmem:[%s166 + $0x20] sm:$0xf]
      %v184 = vld [vmem:[%s166 + $0x24] sm:$0xf]
      %v185 = vld [vmem:[%s166 + $0x28] sm:$0xf]
      %v186 = vld [vmem:[%s166 + $0x2c] sm:$0xf]
      %v187 = vld [vmem:[%s166 + $0x30] sm:$0xf]
      %v188 = vld [vmem:[%s166 + $0x34] sm:$0xf]
      %v189 = vld [vmem:[%s166 + $0x38] sm:$0xf]
      %v190 = vld [vmem:[%s166 + $0x3c] sm:$0xf]
      %v191 = vld [vmem:[%s166 + $0x40] sm:$0xf]
      %v192 = vld [vmem:[%s166 + $0x44] sm:$0xf]
      %v193 = vld [vmem:[%s166 + $0x48] sm:$0xf]
      %v194 = vld [vmem:[%s166 + $0x4c] sm:$0xf]
      %v195 = vld [vmem:[%s166 + $0x50] sm:$0xf]
      %v196 = vld [vmem:[%s166 + $0x54] sm:$0xf]
      %v197 = vld [vmem:[%s166 + $0x58] sm:$0xf]
      %v198 = vld [vmem:[%s166 + $0x5c] sm:$0xf]
      %v199 = vld [vmem:[%s166 + $0x60] sm:$0xf]
      %v200 = vld [vmem:[%s166 + $0x64] sm:$0xf]
      %v201 = vld [vmem:[%s166 + $0x68] sm:$0xf]
      %v202 = vld [vmem:[%s166 + $0x6c] sm:$0xf]
      %v203 = vld [vmem:[%s166 + $0x70] sm:$0xf]
      %v204 = vld [vmem:[%s166 + $0x74] sm:$0xf]
      %v205 = vld [vmem:[%s166 + $0x78] sm:$0xf]
      %v206 = vld [vmem:[%s166 + $0x7c] sm:$0xf]
      %v207 = vld [vmem:[%s1] sm:$0xf]
      %v208 = vld [vmem:[%s1 + $0x4] sm:$0xf]
      %v209 = vld [vmem:[%s1 + $0x8] sm:$0xf]
      %v210 = vld [vmem:[%s1 + $0xc] sm:$0xf]
      %v211 = vld [vmem:[%s1 + $0x10] sm:$0xf]
      %v212 = vld [vmem:[%s1 + $0x14] sm:$0xf]
      %v213 = vld [vmem:[%s1 + $0x18] sm:$0xf]
      %v214 = vld [vmem:[%s1 + $0x1c] sm:$0xf]
      %v215 = vld [vmem:[%s1 + $0x20] sm:$0xf]
      %v216 = vld [vmem:[%s1 + $0x24] sm:$0xf]
      %v217 = vld [vmem:[%s1 + $0x28] sm:$0xf]
      %v218 = vld [vmem:[%s1 + $0x2c] sm:$0xf]
      %v219 = vld [vmem:[%s1 + $0x30] sm:$0xf]
      %v220 = vld [vmem:[%s1 + $0x34] sm:$0xf]
      %v221 = vld [vmem:[%s1 + $0x38] sm:$0xf]
      %v222 = vld [vmem:[%s1 + $0x3c] sm:$0xf]
      %v223 = vld [vmem:[%s2] sm:$0x1]
      %v225 = vlaneseq
      %v226 = vshrl.u32 %v225, 7
      %v227 = vsub.s32 0, %v226
      %v228 = vrot.slane %v223, %v227
      %v262 = vunpack.c.l.b16 %v175
      %v263 = vunpack.c.l.b16 %v176
      %v264 = vunpack.c.l.b16 %v177
      %v265 = vunpack.c.l.b16 %v178
      %v266 = vunpack.c.l.b16 %v179
      %v267 = vunpack.c.l.b16 %v180
      %v268 = vunpack.c.l.b16 %v181
      %v269 = vunpack.c.l.b16 %v182
      %v270 = vunpack.c.l.b16 %v183
      %v271 = vunpack.c.l.b16 %v184
      %v272 = vunpack.c.l.b16 %v185
      %v273 = vunpack.c.l.b16 %v186
      %v274 = vunpack.c.l.b16 %v187
      %v275 = vunpack.c.l.b16 %v188
      %v276 = vunpack.c.l.b16 %v189
      %v277 = vunpack.c.l.b16 %v190
      %v278 = vunpack.c.l.b16 %v191
      %v279 = vunpack.c.l.b16 %v192
      %v280 = vunpack.c.l.b16 %v193
      %v281 = vunpack.c.l.b16 %v194
      %v282 = vunpack.c.l.b16 %v195
      %v283 = vunpack.c.l.b16 %v196
      %v284 = vunpack.c.l.b16 %v197
      %v285 = vunpack.c.l.b16 %v198
      %v286 = vunpack.c.l.b16 %v199
      %v287 = vunpack.c.l.b16 %v200
      %v288 = vunpack.c.l.b16 %v201
      %v289 = vunpack.c.l.b16 %v202
      %v290 = vunpack.c.l.b16 %v203
      %v291 = vunpack.c.l.b16 %v204
      %v292 = vunpack.c.l.b16 %v205
      %v293 = vunpack.c.l.b16 %v206
      %v294 = vpack.c.b16 %v263, %v262
      %v295 = vpack.c.b16 %v265, %v264
      %v296 = vpack.c.b16 %v267, %v266
      %v297 = vpack.c.b16 %v269, %v268
      %v298 = vpack.c.b16 %v271, %v270
      %v299 = vpack.c.b16 %v273, %v272
      %v300 = vpack.c.b16 %v275, %v274
      %v301 = vpack.c.b16 %v277, %v276
      %v302 = vpack.c.b16 %v279, %v278
      %v303 = vpack.c.b16 %v281, %v280
      %v304 = vpack.c.b16 %v283, %v282
      %v305 = vpack.c.b16 %v285, %v284
      %v306 = vpack.c.b16 %v287, %v286
      %v307 = vpack.c.b16 %v289, %v288
      %v308 = vpack.c.b16 %v291, %v290
      %v309 = vpack.c.b16 %v293, %v292
      %v342 = vunpack.c.l.b16 %v207
      %v343 = vunpack.c.l.b16 %v208
      %v344 = vunpack.c.l.b16 %v209
      %v345 = vunpack.c.l.b16 %v210
      %v346 = vunpack.c.l.b16 %v211
      %v347 = vunpack.c.l.b16 %v212
      %v348 = vunpack.c.l.b16 %v213
      %v349 = vunpack.c.l.b16 %v214
      %v350 = vunpack.c.l.b16 %v215
      %v351 = vunpack.c.l.b16 %v216
      %v352 = vunpack.c.l.b16 %v217
      %v353 = vunpack.c.l.b16 %v218
      %v354 = vunpack.c.l.b16 %v219
      %v355 = vunpack.c.l.b16 %v220
      %v356 = vunpack.c.l.b16 %v221
      %v357 = vunpack.c.l.b16 %v222
      %v358 = vpack.c.b16 %v343, %v342
      %v359 = vpack.c.b16 %v345, %v344
      %v360 = vpack.c.b16 %v347, %v346
      %v361 = vpack.c.b16 %v349, %v348
      %v362 = vpack.c.b16 %v351, %v350
      %v363 = vpack.c.b16 %v353, %v352
      %v364 = vpack.c.b16 %v355, %v354
      %v365 = vpack.c.b16 %v357, %v356
      %374 = vmatprep.subr.bf16.mxu0 0
      %375 = vmatpush1.bf16.msra.mxu0 %v358
      %376 = vmatprep.subr.bf16.mxu0 0
      %377 = vmatpush1.bf16.msra.mxu0 %v359
      %378 = vmatprep.subr.bf16.mxu0 0
      %379 = vmatpush1.bf16.msra.mxu0 %v360
      %380 = vmatprep.subr.bf16.mxu0 0
      %381 = vmatpush1.bf16.msra.mxu0 %v361
      %382 = vmatprep.subr.bf16.mxu0 0
      %383 = vmatpush1.bf16.msra.mxu0 %v362
      %384 = vmatprep.subr.bf16.mxu0 0
      %385 = vmatpush1.bf16.msra.mxu0 %v363
      %386 = vmatprep.subr.bf16.mxu0 0
      %387 = vmatpush1.bf16.msra.mxu0 %v364
      %388 = vmatprep.subr.bf16.mxu0 0
      %389 = vmatpush1.bf16.msra.mxu0 %v365
      %390 = vmatprep.subr.bf16.mxu0 0
      %391 = vmatpush1.bf16.msra.mxu0 0
      %392 = vmatprep.subr.bf16.mxu0 0
      %393 = vmatpush1.bf16.msra.mxu0 0
      %394 = vmatprep.subr.bf16.mxu0 0
      %395 = vmatpush1.bf16.msra.mxu0 0
      %396 = vmatprep.subr.bf16.mxu0 0
      %397 = vmatpush1.bf16.msra.mxu0 0
      %398 = vmatprep.subr.bf16.mxu0 0
      %399 = vmatpush1.bf16.msra.mxu0 0
      %400 = vmatprep.subr.bf16.mxu0 0
      %401 = vmatpush1.bf16.msra.mxu0 0
      %402 = vmatprep.subr.bf16.mxu0 0
      %403 = vmatpush1.bf16.msra.mxu0 0
      %404 = vmatprep.subr.bf16.mxu0 0
      %405 = vmatpush1.bf16.msra.mxu0 0
      %406 = vmatprep.mubr.bf16.mxu0 0
      %407 = vmatmul.mubr.bf16.gmra.mrb[0].mxu0 %v294
      %v408 = vpop.f32.mrb[0].mxu0
      %v409 = vadd.f32 %v228, %v408
      %v410 = vpop.f32.mrb[0].mxu0
      %v411 = vpop.f32.mrb[0].mxu0
      %v412 = vadd.f32 %v228, %v411
      %v413 = vpop.f32.mrb[0].mxu0
      %414 = vmatprep.mubr.bf16.mxu0 0
      %415 = vmatmul.mubr.bf16.gmra.mrb[0].mxu0 %v295
      %v416 = vpop.f32.mrb[0].mxu0
      %v417 = vadd.f32 %v228, %v416
      %v418 = vpop.f32.mrb[0].mxu0
      %v419 = vpop.f32.mrb[0].mxu0
      %v420 = vadd.f32 %v228, %v419
      %v421 = vpop.f32.mrb[0].mxu0
      %422 = vmatprep.mubr.bf16.mxu0 0
      %423 = vmatmul.mubr.bf16.gmra.mrb[0].mxu0 %v296
      %v424 = vpop.f32.mrb[0].mxu0
      %v425 = vadd.f32 %v228, %v424
      %v426 = vpop.f32.mrb[0].mxu0
      %v427 = vpop.f32.mrb[0].mxu0
      %v428 = vadd.f32 %v228, %v427
      %v429 = vpop.f32.mrb[0].mxu0
      %430 = vmatprep.mubr.bf16.mxu0 0
      %431 = vmatmul.mubr.bf16.gmra.mrb[0].mxu0 %v297
      %v432 = vpop.f32.mrb[0].mxu0
      %v433 = vadd.f32 %v228, %v432
      %v434 = vpop.f32.mrb[0].mxu0
      %v435 = vpop.f32.mrb[0].mxu0
      %v436 = vadd.f32 %v228, %v435
      %v437 = vpop.f32.mrb[0].mxu0
      %438 = vmatprep.mubr.bf16.mxu0 0
      %439 = vmatmul.mubr.bf16.gmra.mrb[0].mxu0 %v298
      %v440 = vpop.f32.mrb[0].mxu0
      %v441 = vadd.f32 %v228, %v440
      %v442 = vpop.f32.mrb[0].mxu0
      %v443 = vpop.f32.mrb[0].mxu0
      %v444 = vadd.f32 %v228, %v443
      %v445 = vpop.f32.mrb[0].mxu0
      %446 = vmatprep.mubr.bf16.mxu0 0
      %447 = vmatmul.mubr.bf16.gmra.mrb[0].mxu0 %v299
      %v448 = vpop.f32.mrb[0].mxu0
      %v449 = vadd.f32 %v228, %v448
      %v450 = vpop.f32.mrb[0].mxu0
      %v451 = vpop.f32.mrb[0].mxu0
      %v452 = vadd.f32 %v228, %v451
      %v453 = vpop.f32.mrb[0].mxu0
      %454 = vmatprep.mubr.bf16.mxu0 0
      %455 = vmatmul.mubr.bf16.gmra.mrb[0].mxu0 %v300
      %v456 = vpop.f32.mrb[0].mxu0
      %v457 = vadd.f32 %v228, %v456
      %v458 = vpop.f32.mrb[0].mxu0
      %v459 = vpop.f32.mrb[0].mxu0
      %v460 = vadd.f32 %v228, %v459
      %v461 = vpop.f32.mrb[0].mxu0
      %462 = vmatprep.mubr.bf16.mxu0 0
      %463 = vmatmul.mubr.bf16.gmra.mrb[0].mxu0 %v301
      %v464 = vpop.f32.mrb[0].mxu0
      %v465 = vadd.f32 %v228, %v464
      %v466 = vpop.f32.mrb[0].mxu0
      %v467 = vpop.f32.mrb[0].mxu0
      %v468 = vadd.f32 %v228, %v467
      %v469 = vpop.f32.mrb[0].mxu0
      %470 = vmatprep.mubr.bf16.mxu0 0
      %471 = vmatmul.mubr.bf16.gmra.mrb[0].mxu0 %v302
      %v472 = vpop.f32.mrb[0].mxu0
      %v473 = vadd.f32 %v228, %v472
      %v474 = vpop.f32.mrb[0].mxu0
      %v475 = vpop.f32.mrb[0].mxu0
      %v476 = vadd.f32 %v228, %v475
      %v477 = vpop.f32.mrb[0].mxu0
      %478 = vmatprep.mubr.bf16.mxu0 0
      %479 = vmatmul.mubr.bf16.gmra.mrb[0].mxu0 %v303
      %v480 = vpop.f32.mrb[0].mxu0
      %v481 = vadd.f32 %v228, %v480
      %v482 = vpop.f32.mrb[0].mxu0
      %v483 = vpop.f32.mrb[0].mxu0
      %v484 = vadd.f32 %v228, %v483
      %v485 = vpop.f32.mrb[0].mxu0
      %486 = vmatprep.mubr.bf16.mxu0 0
      %487 = vmatmul.mubr.bf16.gmra.mrb[0].mxu0 %v304
      %v488 = vpop.f32.mrb[0].mxu0
      %v489 = vadd.f32 %v228, %v488
      %v490 = vpop.f32.mrb[0].mxu0
      %v491 = vpop.f32.mrb[0].mxu0
      %v492 = vadd.f32 %v228, %v491
      %v493 = vpop.f32.mrb[0].mxu0
      %494 = vmatprep.mubr.bf16.mxu0 0
      %495 = vmatmul.mubr.bf16.gmra.mrb[0].mxu0 %v305
      %v496 = vpop.f32.mrb[0].mxu0
      %v497 = vadd.f32 %v228, %v496
      %v498 = vpop.f32.mrb[0].mxu0
      %v499 = vpop.f32.mrb[0].mxu0
      %v500 = vadd.f32 %v228, %v499
      %v501 = vpop.f32.mrb[0].mxu0
      %502 = vmatprep.mubr.bf16.mxu0 0
      %503 = vmatmul.mubr.bf16.gmra.mrb[0].mxu0 %v306
      %v504 = vpop.f32.mrb[0].mxu0
      %v505 = vadd.f32 %v228, %v504
      %v506 = vpop.f32.mrb[0].mxu0
      %v507 = vpop.f32.mrb[0].mxu0
      %v508 = vadd.f32 %v228, %v507
      %v509 = vpop.f32.mrb[0].mxu0
      %510 = vmatprep.mubr.bf16.mxu0 0
      %511 = vmatmul.mubr.bf16.gmra.mrb[0].mxu0 %v307
      %v512 = vpop.f32.mrb[0].mxu0
      %v513 = vadd.f32 %v228, %v512
      %v514 = vpop.f32.mrb[0].mxu0
      %v515 = vpop.f32.mrb[0].mxu0
      %v516 = vadd.f32 %v228, %v515
      %v517 = vpop.f32.mrb[0].mxu0
      %518 = vmatprep.mubr.bf16.mxu0 0
      %519 = vmatmul.mubr.bf16.gmra.mrb[0].mxu0 %v308
      %v520 = vpop.f32.mrb[0].mxu0
      %v521 = vadd.f32 %v228, %v520
      %v522 = vpop.f32.mrb[0].mxu0
      %v523 = vpop.f32.mrb[0].mxu0
      %v524 = vadd.f32 %v228, %v523
      %v525 = vpop.f32.mrb[0].mxu0
      %526 = vmatprep.mubr.bf16.mxu0 0
      %527 = vmatmul.mubr.bf16.gmra.mrb[0].mxu0 %v309
      %v528 = vpop.f32.mrb[0].mxu0
      %v529 = vadd.f32 %v228, %v528
      %v530 = vpop.f32.mrb[0].mxu0
      %v531 = vpop.f32.mrb[0].mxu0
      %v532 = vadd.f32 %v228, %v531
      %v533 = vpop.f32.mrb[0].mxu0
      %534 = vdwg.mxu0
      %v535 = vmax.f32 %v409, 0.0
      %v536 = vmax.f32 %v412, 0.0
      %v537 = vmax.f32 %v417, 0.0
      %v538 = vmax.f32 %v420, 0.0
      %v539 = vmax.f32 %v425, 0.0
      %v540 = vmax.f32 %v428, 0.0
      %v541 = vmax.f32 %v433, 0.0
      %v542 = vmax.f32 %v436, 0.0
      %v543 = vmax.f32 %v441, 0.0
      %v544 = vmax.f32 %v444, 0.0
      %v545 = vmax.f32 %v449, 0.0
      %v546 = vmax.f32 %v452, 0.0
      %v547 = vmax.f32 %v457, 0.0
      %v548 = vmax.f32 %v460, 0.0
      %v549 = vmax.f32 %v465, 0.0
      %v550 = vmax.f32 %v468, 0.0
      %v551 = vmax.f32 %v473, 0.0
      %v552 = vmax.f32 %v476, 0.0
      %v553 = vmax.f32 %v481, 0.0
      %v554 = vmax.f32 %v484, 0.0
      %v555 = vmax.f32 %v489, 0.0
      %v556 = vmax.f32 %v492, 0.0
      %v557 = vmax.f32 %v497, 0.0
      %v558 = vmax.f32 %v500, 0.0
      %v559 = vmax.f32 %v505, 0.0
      %v560 = vmax.f32 %v508, 0.0
      %v561 = vmax.f32 %v513, 0.0
      %v562 = vmax.f32 %v516, 0.0
      %v563 = vmax.f32 %v521, 0.0
      %v564 = vmax.f32 %v524, 0.0
      %v565 = vmax.f32 %v529, 0.0
      %v566 = vmax.f32 %v532, 0.0
      %v567 = vpack.c.bf16 %v536, %v535
      %v568 = vpack.c.bf16 %v538, %v537
      %v569 = vpack.c.bf16 %v540, %v539
      %v570 = vpack.c.bf16 %v542, %v541
      %v571 = vpack.c.bf16 %v544, %v543
      %v572 = vpack.c.bf16 %v546, %v545
      %v573 = vpack.c.bf16 %v548, %v547
      %v574 = vpack.c.bf16 %v550, %v549
      %v575 = vpack.c.bf16 %v552, %v551
      %v576 = vpack.c.bf16 %v554, %v553
      %v577 = vpack.c.bf16 %v556, %v555
      %v578 = vpack.c.bf16 %v558, %v557
      %v579 = vpack.c.bf16 %v560, %v559
      %v580 = vpack.c.bf16 %v562, %v561
      %v581 = vpack.c.bf16 %v564, %v563
      %v582 = vpack.c.bf16 %v566, %v565
      %v599 = vunpack.c.l.b16 %v567
      %v600 = vunpack.c.h.b16 %v567
      %v601 = vunpack.c.l.b16 %v568
      %v602 = vunpack.c.h.b16 %v568
      %v603 = vunpack.c.l.b16 %v569
      %v604 = vunpack.c.h.b16 %v569
      %v605 = vunpack.c.l.b16 %v570
      %v606 = vunpack.c.h.b16 %v570
      %v607 = vunpack.c.l.b16 %v571
      %v608 = vunpack.c.h.b16 %v571
      %v609 = vunpack.c.l.b16 %v572
      %v610 = vunpack.c.h.b16 %v572
      %v611 = vunpack.c.l.b16 %v573
      %v612 = vunpack.c.h.b16 %v573
      %v613 = vunpack.c.l.b16 %v574
      %v614 = vunpack.c.h.b16 %v574
      %v615 = vunpack.c.l.b16 %v575
      %v616 = vunpack.c.h.b16 %v575
      %v617 = vunpack.c.l.b16 %v576
      %v618 = vunpack.c.h.b16 %v576
      %v619 = vunpack.c.l.b16 %v577
      %v620 = vunpack.c.h.b16 %v577
      %v621 = vunpack.c.l.b16 %v578
      %v622 = vunpack.c.h.b16 %v578
      %v623 = vunpack.c.l.b16 %v579
      %v624 = vunpack.c.h.b16 %v579
      %v625 = vunpack.c.l.b16 %v580
      %v626 = vunpack.c.h.b16 %v580
      %v627 = vunpack.c.l.b16 %v581
      %v628 = vunpack.c.h.b16 %v581
      %v629 = vunpack.c.l.b16 %v582
      %v630 = vunpack.c.h.b16 %v582
      %v631 = vpack.c.b16 %v599, %v599
      %v632 = vpack.c.b16 %v600, %v600
      %v633 = vpack.c.b16 %v601, %v601
      %v634 = vpack.c.b16 %v602, %v602
      %v635 = vpack.c.b16 %v603, %v603
      %v636 = vpack.c.b16 %v604, %v604
      %v637 = vpack.c.b16 %v605, %v605
      %v638 = vpack.c.b16 %v606, %v606
      %v639 = vpack.c.b16 %v607, %v607
      %v640 = vpack.c.b16 %v608, %v608
      %v641 = vpack.c.b16 %v609, %v609
      %v642 = vpack.c.b16 %v610, %v610
      %v643 = vpack.c.b16 %v611, %v611
      %v644 = vpack.c.b16 %v612, %v612
      %v645 = vpack.c.b16 %v613, %v613
      %v646 = vpack.c.b16 %v614, %v614
      %v647 = vpack.c.b16 %v615, %v615
      %v648 = vpack.c.b16 %v616, %v616
      %v649 = vpack.c.b16 %v617, %v617
      %v650 = vpack.c.b16 %v618, %v618
      %v651 = vpack.c.b16 %v619, %v619
      %v652 = vpack.c.b16 %v620, %v620
      %v653 = vpack.c.b16 %v621, %v621
      %v654 = vpack.c.b16 %v622, %v622
      %v655 = vpack.c.b16 %v623, %v623
      %v656 = vpack.c.b16 %v624, %v624
      %v657 = vpack.c.b16 %v625, %v625
      %v658 = vpack.c.b16 %v626, %v626
      %v659 = vpack.c.b16 %v627, %v627
      %v660 = vpack.c.b16 %v628, %v628
      %v661 = vpack.c.b16 %v629, %v629
      %v662 = vpack.c.b16 %v630, %v630
      %695 = vst [vmem:[%s172] sm:$0xf] %v631
      %696 = vst [vmem:[%s172 + $0x4] sm:$0xf] %v632
      %697 = vst [vmem:[%s172 + $0x8] sm:$0xf] %v633
      %698 = vst [vmem:[%s172 + $0xc] sm:$0xf] %v634
      %699 = vst [vmem:[%s172 + $0x10] sm:$0xf] %v635
      %700 = vst [vmem:[%s172 + $0x14] sm:$0xf] %v636
      %701 = vst [vmem:[%s172 + $0x18] sm:$0xf] %v637
      %702 = vst [vmem:[%s172 + $0x1c] sm:$0xf] %v638
      %703 = vst [vmem:[%s172 + $0x20] sm:$0xf] %v639
      %704 = vst [vmem:[%s172 + $0x24] sm:$0xf] %v640
      %705 = vst [vmem:[%s172 + $0x28] sm:$0xf] %v641
      %706 = vst [vmem:[%s172 + $0x2c] sm:$0xf] %v642
      %707 = vst [vmem:[%s172 + $0x30] sm:$0xf] %v643
      %708 = vst [vmem:[%s172 + $0x34] sm:$0xf] %v644
      %709 = vst [vmem:[%s172 + $0x38] sm:$0xf] %v645
      %710 = vst [vmem:[%s172 + $0x3c] sm:$0xf] %v646
      %711 = vst [vmem:[%s172 + $0x40] sm:$0xf] %v647
      %712 = vst [vmem:[%s172 + $0x44] sm:$0xf] %v648
      %713 = vst [vmem:[%s172 + $0x48] sm:$0xf] %v649
      %714 = vst [vmem:[%s172 + $0x4c] sm:$0xf] %v650
      %715 = vst [vmem:[%s172 + $0x50] sm:$0xf] %v651
      %716 = vst [vmem:[%s172 + $0x54] sm:$0xf] %v652
      %717 = vst [vmem:[%s172 + $0x58] sm:$0xf] %v653
      %718 = vst [vmem:[%s172 + $0x5c] sm:$0xf] %v654
      %719 = vst [vmem:[%s172 + $0x60] sm:$0xf] %v655
      %720 = vst [vmem:[%s172 + $0x64] sm:$0xf] %v656
      %721 = vst [vmem:[%s172 + $0x68] sm:$0xf] %v657
      %722 = vst [vmem:[%s172 + $0x6c] sm:$0xf] %v658
      %723 = vst [vmem:[%s172 + $0x70] sm:$0xf] %v659
      %724 = vst [vmem:[%s172 + $0x74] sm:$0xf] %v660
      %725 = vst [vmem:[%s172 + $0x78] sm:$0xf] %v661
      %726 = vst [vmem:[%s172 + $0x7c] sm:$0xf] %v662
      %s727 = smul.u32 32, %s14
      %p728 = scmp.lt.s32.totalorder %s727, 63
      %s729 = scalar_select %p728, %s727, 63
      %s730 = smul.addr %s729, 4
      %s731 = scalar_lea.vmem %s3, %s730
      // Predicated region
      $region33: #{block_forward.3} parent=31 // pred_check
        %p732 = pneg %p100
      $region34: #{block_forward.3} parent=31 // pred_check_branch
        %734 = sbr.rel (%p732) target = $region36
      $region35: #{block_forward.3} parent=31 // pred_region
        %s735 = smul.u32 32, %s14
      $region36: #{block_forward.3} parent=31 // pred_fallthru
        _
    $region32: #{block_forward.3} parent=5 // pred_fallthru
      _
    %p736 = scmp.le.s32.totalorder 2, %s9
    // Predicated region
    $region37: #{block_forward.3} parent=5 // pred_check
      %p737 = pneg %p736
    $region38: #{block_forward.3} parent=5 // pred_check_branch
      %739 = sbr.rel (%p737) target = $region40
    $region39: #{block_forward.3} parent=5 // pred_region
      %s740 = ssub.s32 %s9, 2
      // Predicated region
      $region41: #{block_forward.3} parent=39 // pred_check
        %p741 = pneg %p106
      $region42: #{block_forward.3} parent=39 // pred_check_branch
        %743 = sbr.rel (%p741) target = $region44
      $region43: #{block_forward.3} parent=39 // pred_region
        %s744 = smul.u32 32, %s15
        %p745 = scmp.lt.s32.totalorder %s744, 63
        %s746 = scalar_select %p745, %s744, 63
        %s747 = smul.addr %s746, 4
        %s748 = scalar_lea.vmem %s3, %s747
      $region44: #{block_forward.3} parent=39 // pred_fallthru
        _
    $region40: #{block_forward.3} parent=5 // pred_fallthru
      _
  $region6: #{block_forward.3} parent=0 // loop_footer
    %s13 = sadd.s32 1, %s9
  $region7: #{block_forward.3} parent=0 // loop_footer_branch
    %8 = sbr.rel target = $region3
  $region8: #{block_forward.3} parent=0 // loop_exit
    _

// kernel: block_forward.5
$region0: #{block_forward.5}
  #allocation0 [shape = 'u32[]', space=smem, size = 0x4, offset = 0x4, fixed_abs, tag = 'smem constant byte address 0x4 - core index']
  #allocation1 [shape = 'u32[144,128]{1,0:T(1,128)}', space=vmem, size = 0x12000, scoped, tag = 'internal scratch']
  %s0 = inlined_call_operand.vmem [shape: bf16[512,128], index: 0, kind: input, shape index: {}]
  %s1 = inlined_call_operand.vmem [shape: bf16[128,128], index: 1, kind: input, shape index: {}]
  %s2 = inlined_call_operand.vmem [shape: f32[1,128], index: 2, kind: input, shape index: {}]
  %s3 = inlined_call_operand.vmem [shape: bf16[512,128], index: 3, kind: input, shape index: {}]
  %s4 = inlined_call_operand.vmem [shape: bf16[128,128], index: 4, kind: input, shape index: {}]
  %s5 = inlined_call_operand.vmem [shape: f32[1,128], index: 5, kind: input, shape index: {}]
  %s6 = inlined_call_operand.vmem [shape: f32[512,128], index: 6, kind: output, shape index: {}]
  %s7 = sld [smem:[#allocation0]]
  $region57: #{block_forward.5} parent=0
    _
  %s9 = ssub.s32 1, %s7
  %s10 = scalar_select 0, %s9, %s7
  loop: start=0, step=1, limit=4
  $region2: #{block_forward.5} parent=0 // loop_pre_header
    _
  $region3: #{block_forward.5} parent=0 // loop_header
    %s12 = sphi 0, %s16
    %p13 = scmp.ge.s32.totalorder %s12, 4
    %s22 = sphi 0, %s24
    %s25 = sphi 0, %s22
    %s26 = sphi 0, %s25
    %s42 = sphi 0, %s26
    %s46 = sphi 0, %s46
    %s48 = sphi 0, %s46
    %s49 = sphi 0, %s48
    %s63 = sphi 0, %s49
    %s67 = sphi 0, %s67
    %s69 = sphi 0, %s67
    %s70 = sphi 0, %s69
    %s84 = sphi 0, %s70
    %s90 = sphi 0, %s92
    %s93 = sphi 0, %s90
    %s94 = sphi 0, %s93
    %s110 = sphi 0, %s94
    %s114 = sphi 0, %s114
    %s116 = sphi 0, %s114
    %s117 = sphi 0, %s116
    %s131 = sphi 0, %s117
    %s135 = sphi 0, %s135
    %s137 = sphi 0, %s135
    %s138 = sphi 0, %s137
    %s152 = sphi 0, %s138
    %s158 = sphi 0, %s160
    %s161 = sphi 0, %s158
    %s162 = sphi 0, %s161
    %s178 = sphi 0, %s162
  $region4: #{block_forward.5} parent=0 // loop_header_branch
    %15 = sbr.rel (%p13) target = $region8
  $region5: #{block_forward.5} parent=0 // loop_body
    %s17 = ssub.s32 %s12, 1
    %s18 = ssub.s32 %s12, 2
    %s19 = sadd.s32 %s12, 1
    %s20 = ssub.s32 %s12, %s19
    %p21 = scmp.eq.s32.totalorder %s20, 0
    %s23 = sadd.s32 %s22, 1
    %s24 = scalar_select %p21, %s22, %s23
    %p27 = pneg %p21
    %p28 = scmp.eq.s32.totalorder %s12, 1
    %p29 = por %p27, %p28
    %p30 = scmp.ne.s32.totalorder %s22, %s25
    %p31 = scmp.eq.s32.totalorder %s12, 0
    %p32 = por %p30, %p31
    %p33 = scmp.ne.s32.totalorder %s22, %s25
    %p34 = scmp.eq.s32.totalorder %s17, 1
    %p35 = por %p33, %p34
    %p36 = scmp.ne.s32.totalorder %s25, %s26
    %p37 = scmp.eq.s32.totalorder %s17, 0
    %p38 = por %p36, %p37
    %p39 = scmp.ne.s32.totalorder %s25, %s26
    %p40 = scmp.eq.s32.totalorder %s18, 1
    %p41 = por %p39, %p40
    %p43 = scmp.ne.s32.totalorder %s26, %s42
    %p44 = scmp.eq.s32.totalorder %s18, 0
    %p45 = por %p43, %p44
    %s47 = sadd.s32 %s46, 1
    %p50 = scmp.eq.s32.totalorder %s12, 1
    %p51 = scmp.ne.s32.totalorder %s46, %s48
    %p52 = scmp.eq.s32.totalorder %s12, 0
    %p53 = por %p51, %p52
    %p54 = scmp.ne.s32.totalorder %s46, %s48
    %p55 = scmp.eq.s32.totalorder %s17, 1
    %p56 = por %p54, %p55
    %p57 = scmp.ne.s32.totalorder %s48, %s49
    %p58 = scmp.eq.s32.totalorder %s17, 0
    %p59 = por %p57, %p58
    %p60 = scmp.ne.s32.totalorder %s48, %s49
    %p61 = scmp.eq.s32.totalorder %s18, 1
    %p62 = por %p60, %p61
    %p64 = scmp.ne.s32.totalorder %s49, %s63
    %p65 = scmp.eq.s32.totalorder %s18, 0
    %p66 = por %p64, %p65
    %s68 = sadd.s32 %s67, 1
    %p71 = scmp.eq.s32.totalorder %s12, 1
    %p72 = scmp.ne.s32.totalorder %s67, %s69
    %p73 = scmp.eq.s32.totalorder %s12, 0
    %p74 = por %p72, %p73
    %p75 = scmp.ne.s32.totalorder %s67, %s69
    %p76 = scmp.eq.s32.totalorder %s17, 1
    %p77 = por %p75, %p76
    %p78 = scmp.ne.s32.totalorder %s69, %s70
    %p79 = scmp.eq.s32.totalorder %s17, 0
    %p80 = por %p78, %p79
    %p81 = scmp.ne.s32.totalorder %s69, %s70
    %p82 = scmp.eq.s32.totalorder %s18, 1
    %p83 = por %p81, %p82
    %p85 = scmp.ne.s32.totalorder %s70, %s84
    %p86 = scmp.eq.s32.totalorder %s18, 0
    %p87 = por %p85, %p86
    %s88 = ssub.s32 %s12, %s19
    %p89 = scmp.eq.s32.totalorder %s88, 0
    %s91 = sadd.s32 %s90, 1
    %s92 = scalar_select %p89, %s90, %s91
    %p95 = pneg %p89
    %p96 = scmp.eq.s32.totalorder %s12, 1
    %p97 = por %p95, %p96
    %p98 = scmp.ne.s32.totalorder %s90, %s93
    %p99 = scmp.eq.s32.totalorder %s12, 0
    %p100 = por %p98, %p99
    %p101 = scmp.ne.s32.totalorder %s90, %s93
    %p102 = scmp.eq.s32.totalorder %s17, 1
    %p103 = por %p101, %p102
    %p104 = scmp.ne.s32.totalorder %s93, %s94
    %p105 = scmp.eq.s32.totalorder %s17, 0
    %p106 = por %p104, %p105
    %p107 = scmp.ne.s32.totalorder %s93, %s94
    %p108 = scmp.eq.s32.totalorder %s18, 1
    %p109 = por %p107, %p108
    %p111 = scmp.ne.s32.totalorder %s94, %s110
    %p112 = scmp.eq.s32.totalorder %s18, 0
    %p113 = por %p111, %p112
    %s115 = sadd.s32 %s114, 1
    %p118 = scmp.eq.s32.totalorder %s12, 1
    %p119 = scmp.ne.s32.totalorder %s114, %s116
    %p120 = scmp.eq.s32.totalorder %s12, 0
    %p121 = por %p119, %p120
    %p122 = scmp.ne.s32.totalorder %s114, %s116
    %p123 = scmp.eq.s32.totalorder %s17, 1
    %p124 = por %p122, %p123
    %p125 = scmp.ne.s32.totalorder %s116, %s117
    %p126 = scmp.eq.s32.totalorder %s17, 0
    %p127 = por %p125, %p126
    %p128 = scmp.ne.s32.totalorder %s116, %s117
    %p129 = scmp.eq.s32.totalorder %s18, 1
    %p130 = por %p128, %p129
    %p132 = scmp.ne.s32.totalorder %s117, %s131
    %p133 = scmp.eq.s32.totalorder %s18, 0
    %p134 = por %p132, %p133
    %s136 = sadd.s32 %s135, 1
    %p139 = scmp.eq.s32.totalorder %s12, 1
    %p140 = scmp.ne.s32.totalorder %s135, %s137
    %p141 = scmp.eq.s32.totalorder %s12, 0
    %p142 = por %p140, %p141
    %p143 = scmp.ne.s32.totalorder %s135, %s137
    %p144 = scmp.eq.s32.totalorder %s17, 1
    %p145 = por %p143, %p144
    %p146 = scmp.ne.s32.totalorder %s137, %s138
    %p147 = scmp.eq.s32.totalorder %s17, 0
    %p148 = por %p146, %p147
    %p149 = scmp.ne.s32.totalorder %s137, %s138
    %p150 = scmp.eq.s32.totalorder %s18, 1
    %p151 = por %p149, %p150
    %p153 = scmp.ne.s32.totalorder %s138, %s152
    %p154 = scmp.eq.s32.totalorder %s18, 0
    %p155 = por %p153, %p154
    %s156 = ssub.s32 %s12, %s19
    %p157 = scmp.eq.s32.totalorder %s156, 0
    %s159 = sadd.s32 %s158, 1
    %s160 = scalar_select %p157, %s158, %s159
    %p163 = pneg %p157
    %p164 = scmp.eq.s32.totalorder %s12, 1
    %p165 = por %p163, %p164
    %p166 = scmp.ne.s32.totalorder %s158, %s161
    %p167 = scmp.eq.s32.totalorder %s12, 0
    %p168 = por %p166, %p167
    %p169 = scmp.ne.s32.totalorder %s158, %s161
    %p170 = scmp.eq.s32.totalorder %s17, 1
    %p171 = por %p169, %p170
    %p172 = scmp.ne.s32.totalorder %s161, %s162
    %p173 = scmp.eq.s32.totalorder %s17, 0
    %p174 = por %p172, %p173
    %p175 = scmp.ne.s32.totalorder %s161, %s162
    %p176 = scmp.eq.s32.totalorder %s18, 1
    %p177 = por %p175, %p176
    %p179 = scmp.ne.s32.totalorder %s162, %s178
    %p180 = scmp.eq.s32.totalorder %s18, 0
    %p181 = por %p179, %p180
    %p182 = scmp.le.s32.totalorder 1, %s12
    %p183 = scmp.lt.s32.totalorder %s12, 3
    %p184 = pnand %p182, %p183
    %p185 = pneg %p184
    // Predicated region
    $region9: #{block_forward.5} parent=5 // pred_check
      _
    $region10: #{block_forward.5} parent=5 // pred_check_branch
      %187 = sbr.rel (%p184) target = $region12
    $region11: #{block_forward.5} parent=5 // pred_region
      %s188 = ssub.s32 %s12, 1
      // Predicated region
      $region13: #{block_forward.5} parent=11 // pred_check
        %p189 = pneg %p59
      $region14: #{block_forward.5} parent=11 // pred_check_branch
        %191 = sbr.rel (%p189) target = $region16
      $region15: #{block_forward.5} parent=11 // pred_region
        _
      $region16: #{block_forward.5} parent=11 // pred_fallthru
        _
      // Predicated region
      $region17: #{block_forward.5} parent=11 // pred_check
        %p192 = pneg %p80
      $region18: #{block_forward.5} parent=11 // pred_check_branch
        %194 = sbr.rel (%p192) target = $region20
      $region19: #{block_forward.5} parent=11 // pred_region
        _
      $region20: #{block_forward.5} parent=11 // pred_fallthru
        _
      // Predicated region
      $region21: #{block_forward.5} parent=11 // pred_check
        %p195 = pneg %p127
      $region22: #{block_forward.5} parent=11 // pred_check_branch
        %197 = sbr.rel (%p195) target = $region24
      $region23: #{block_forward.5} parent=11 // pred_region
        _
      $region24: #{block_forward.5} parent=11 // pred_fallthru
        _
      // Predicated region
      $region25: #{block_forward.5} parent=11 // pred_check
        %p198 = pneg %p148
      $region26: #{block_forward.5} parent=11 // pred_check_branch
        %200 = sbr.rel (%p198) target = $region28
      $region27: #{block_forward.5} parent=11 // pred_region
        _
      $region28: #{block_forward.5} parent=11 // pred_fallthru
        _
    $region12: #{block_forward.5} parent=5 // pred_fallthru
      _
    %p201 = scmp.lt.s32.totalorder %s12, 2
    // Predicated region
    $region29: #{block_forward.5} parent=5 // pred_check
      %p202 = pneg %p201
    $region30: #{block_forward.5} parent=5 // pred_check_branch
      %204 = sbr.rel (%p202) target = $region32
    $region31: #{block_forward.5} parent=5 // pred_region
      // Predicated region
      $region33: #{block_forward.5} parent=31 // pred_check
        %p205 = pneg %p32
      $region34: #{block_forward.5} parent=31 // pred_check_branch
        %207 = sbr.rel (%p205) target = $region36
      $region35: #{block_forward.5} parent=31 // pred_region
        %s208 = smul.u32 32, %s12
        %p209 = scmp.lt.s32.totalorder %s208, 63
        %s210 = scalar_select %p209, %s208, 63
        %s211 = smul.addr %s210, 4
        %s212 = scalar_lea.vmem %s0, %s211
        %s213 = smul.u32 32, %s12
      $region36: #{block_forward.5} parent=31 // pred_fallthru
        _
      // Predicated region
      $region37: #{block_forward.5} parent=31 // pred_check
        %p214 = pneg %p100
      $region38: #{block_forward.5} parent=31 // pred_check_branch
        %216 = sbr.rel (%p214) target = $region40
      $region39: #{block_forward.5} parent=31 // pred_region
        %s217 = smul.u32 32, %s12
        %p218 = scmp.lt.s32.totalorder %s217, 63
        %s219 = scalar_select %p218, %s217, 63
        %s220 = smul.addr %s219, 4
        %s221 = scalar_lea.vmem %s3, %s220
        %s222 = smul.u32 32, %s12
      $region40: #{block_forward.5} parent=31 // pred_fallthru
        _
    $region32: #{block_forward.5} parent=5 // pred_fallthru
      _
    %p223 = scmp.le.s32.totalorder 1, %s12
    %p224 = scmp.lt.s32.totalorder %s12, 3
    %p225 = pnand %p223, %p224
    %p226 = pneg %p225
    // Predicated region
    $region41: #{block_forward.5} parent=5 // pred_check
      _
    $region42: #{block_forward.5} parent=5 // pred_check_branch
      %228 = sbr.rel (%p225) target = $region44
    $region43: #{block_forward.5} parent=5 // pred_region
      %s229 = ssub.s32 %s12, 1
      %s230 = smul.u32 32, %s17
      %p231 = scmp.lt.s32.totalorder %s230, 63
      %s232 = scalar_select %p231, %s230, 63
      %s233 = smul.addr %s232, 4
      %s234 = scalar_lea.vmem %s0, %s233
      %p235 = pneg %p38
      %p236 = pneg %p35
      %p237 = pneg %p59
      %p238 = pneg %p56
      %p239 = pneg %p80
      %p240 = pneg %p77
      %s241 = smul.u32 32, %s17
      %p242 = scmp.lt.s32.totalorder %s241, 63
      %s243 = scalar_select %p242, %s241, 63
      %s244 = smul.addr %s243, 4
      %s245 = scalar_lea.vmem %s3, %s244
      %p246 = pneg %p106
      %p247 = pneg %p103
      %p248 = pneg %p127
      %p249 = pneg %p124
      %p250 = pneg %p148
      %p251 = pneg %p145
      %p252 = pneg %p174
      %p253 = pneg %p171
      %s254 = smul.u32 32, %s17
      %p255 = scmp.lt.s32.totalorder %s254, 63
      %s256 = scalar_select %p255, %s254, 63
      %s257 = smul.addr %s256, 8
      %s258 = scalar_lea.vmem %s6, %s257
      %s259 = smul.u32 32, %s17
      %p260 = scmp.lt.s32.totalorder %s259, 63
      %s261 = scalar_select %p260, %s259, 63
      %s262 = smul.addr %s261, 4
      %s263 = scalar_lea.vmem %s0, %s262
      %s264 = smul.u32 32, %s17
      %s265 = smul.u32 32, %s17
      %p266 = scmp.lt.s32.totalorder %s265, 63
      %s267 = scalar_select %p266, %s265, 63
      %s268 = smul.addr %s267, 4
      %s269 = scalar_lea.vmem %s3, %s268
      %s270 = smul.u32 32, %s17
      %s271 = smul.u32 32, %s17
      %p272 = scmp.lt.s32.totalorder %s271, 63
      %s273 = scalar_select %p272, %s271, 63
      %s274 = smul.addr %s273, 8
      %s275 = scalar_lea.vmem %s6, %s274
      %s276 = smul.u32 32, %s17
      %v278 = vld [vmem:[%s263] sm:$0xf]
      %v279 = vld [vmem:[%s263 + $0x4] sm:$0xf]
      %v280 = vld [vmem:[%s263 + $0x8] sm:$0xf]
      %v281 = vld [vmem:[%s263 + $0xc] sm:$0xf]
      %v282 = vld [vmem:[%s263 + $0x10] sm:$0xf]
      %v283 = vld [vmem:[%s263 + $0x14] sm:$0xf]
      %v284 = vld [vmem:[%s263 + $0x18] sm:$0xf]
      %v285 = vld [vmem:[%s263 + $0x1c] sm:$0xf]
      %v286 = vld [vmem:[%s263 + $0x20] sm:$0xf]
      %v287 = vld [vmem:[%s263 + $0x24] sm:$0xf]
      %v288 = vld [vmem:[%s263 + $0x28] sm:$0xf]
      %v289 = vld [vmem:[%s263 + $0x2c] sm:$0xf]
      %v290 = vld [vmem:[%s263 + $0x30] sm:$0xf]
      %v291 = vld [vmem:[%s263 + $0x34] sm:$0xf]
      %v292 = vld [vmem:[%s263 + $0x38] sm:$0xf]
      %v293 = vld [vmem:[%s263 + $0x3c] sm:$0xf]
      %v294 = vld [vmem:[%s263 + $0x40] sm:$0xf]
      %v295 = vld [vmem:[%s263 + $0x44] sm:$0xf]
      %v296 = vld [vmem:[%s263 + $0x48] sm:$0xf]
      %v297 = vld [vmem:[%s263 + $0x4c] sm:$0xf]
      %v298 = vld [vmem:[%s263 + $0x50] sm:$0xf]
      %v299 = vld [vmem:[%s263 + $0x54] sm:$0xf]
      %v300 = vld [vmem:[%s263 + $0x58] sm:$0xf]
      %v301 = vld [vmem:[%s263 + $0x5c] sm:$0xf]
      %v302 = vld [vmem:[%s263 + $0x60] sm:$0xf]
      %v303 = vld [vmem:[%s263 + $0x64] sm:$0xf]
      %v304 = vld [vmem:[%s263 + $0x68] sm:$0xf]
      %v305 = vld [vmem:[%s263 + $0x6c] sm:$0xf]
      %v306 = vld [vmem:[%s263 + $0x70] sm:$0xf]
      %v307 = vld [vmem:[%s263 + $0x74] sm:$0xf]
      %v308 = vld [vmem:[%s263 + $0x78] sm:$0xf]
      %v309 = vld [vmem:[%s263 + $0x7c] sm:$0xf]
      %v310 = vld [vmem:[%s1] sm:$0xf]
      %v311 = vld [vmem:[%s1 + $0x4] sm:$0xf]
      %v312 = vld [vmem:[%s1 + $0x8] sm:$0xf]
      %v313 = vld [vmem:[%s1 + $0xc] sm:$0xf]
      %v314 = vld [vmem:[%s1 + $0x10] sm:$0xf]
      %v315 = vld [vmem:[%s1 + $0x14] sm:$0xf]
      %v316 = vld [vmem:[%s1 + $0x18] sm:$0xf]
      %v317 = vld [vmem:[%s1 + $0x1c] sm:$0xf]
      %v318 = vld [vmem:[%s1 + $0x20] sm:$0xf]
      %v319 = vld [vmem:[%s1 + $0x24] sm:$0xf]
      %v320 = vld [vmem:[%s1 + $0x28] sm:$0xf]
      %v321 = vld [vmem:[%s1 + $0x2c] sm:$0xf]
      %v322 = vld [vmem:[%s1 + $0x30] sm:$0xf]
      %v323 = vld [vmem:[%s1 + $0x34] sm:$0xf]
      %v324 = vld [vmem:[%s1 + $0x38] sm:$0xf]
      %v325 = vld [vmem:[%s1 + $0x3c] sm:$0xf]
      %v326 = vld [vmem:[%s2] sm:$0x1]
      %v328 = vlaneseq
      %v329 = vshrl.u32 %v328, 7
      %v330 = vsub.s32 0, %v329
      %v331 = vrot.slane %v326, %v330
      %v365 = vunpack.c.l.b16 %v278
      %v366 = vunpack.c.l.b16 %v279
      %v367 = vunpack.c.l.b16 %v280
      %v368 = vunpack.c.l.b16 %v281
      %v369 = vunpack.c.l.b16 %v282
      %v370 = vunpack.c.l.b16 %v283
      %v371 = vunpack.c.l.b16 %v284
      %v372 = vunpack.c.l.b16 %v285
      %v373 = vunpack.c.l.b16 %v286
      %v374 = vunpack.c.l.b16 %v287
      %v375 = vunpack.c.l.b16 %v288
      %v376 = vunpack.c.l.b16 %v289
      %v377 = vunpack.c.l.b16 %v290
      %v378 = vunpack.c.l.b16 %v291
      %v379 = vunpack.c.l.b16 %v292
      %v380 = vunpack.c.l.b16 %v293
      %v381 = vunpack.c.l.b16 %v294
      %v382 = vunpack.c.l.b16 %v295
      %v383 = vunpack.c.l.b16 %v296
      %v384 = vunpack.c.l.b16 %v297
      %v385 = vunpack.c.l.b16 %v298
      %v386 = vunpack.c.l.b16 %v299
      %v387 = vunpack.c.l.b16 %v300
      %v388 = vunpack.c.l.b16 %v301
      %v389 = vunpack.c.l.b16 %v302
      %v390 = vunpack.c.l.b16 %v303
      %v391 = vunpack.c.l.b16 %v304
      %v392 = vunpack.c.l.b16 %v305
      %v393 = vunpack.c.l.b16 %v306
      %v394 = vunpack.c.l.b16 %v307
      %v395 = vunpack.c.l.b16 %v308
      %v396 = vunpack.c.l.b16 %v309
      %v397 = vpack.c.b16 %v366, %v365
      %v398 = vpack.c.b16 %v368, %v367
      %v399 = vpack.c.b16 %v370, %v369
      %v400 = vpack.c.b16 %v372, %v371
      %v401 = vpack.c.b16 %v374, %v373
      %v402 = vpack.c.b16 %v376, %v375
      %v403 = vpack.c.b16 %v378, %v377
      %v404 = vpack.c.b16 %v380, %v379
      %v405 = vpack.c.b16 %v382, %v381
      %v406 = vpack.c.b16 %v384, %v383
      %v407 = vpack.c.b16 %v386, %v385
      %v408 = vpack.c.b16 %v388, %v387
      %v409 = vpack.c.b16 %v390, %v389
      %v410 = vpack.c.b16 %v392, %v391
      %v411 = vpack.c.b16 %v394, %v393
      %v412 = vpack.c.b16 %v396, %v395
      %v445 = vunpack.c.l.b16 %v310
      %v446 = vunpack.c.l.b16 %v311
      %v447 = vunpack.c.l.b16 %v312
      %v448 = vunpack.c.l.b16 %v313
      %v449 = vunpack.c.l.b16 %v314
      %v450 = vunpack.c.l.b16 %v315
      %v451 = vunpack.c.l.b16 %v316
      %v452 = vunpack.c.l.b16 %v317
      %v453 = vunpack.c.l.b16 %v318
      %v454 = vunpack.c.l.b16 %v319
      %v455 = vunpack.c.l.b16 %v320
      %v456 = vunpack.c.l.b16 %v321
      %v457 = vunpack.c.l.b16 %v322
      %v458 = vunpack.c.l.b16 %v323
      %v459 = vunpack.c.l.b16 %v324
      %v460 = vunpack.c.l.b16 %v325
      %v461 = vpack.c.b16 %v446, %v445
      %v462 = vpack.c.b16 %v448, %v447
      %v463 = vpack.c.b16 %v450, %v449
      %v464 = vpack.c.b16 %v452, %v451
      %v465 = vpack.c.b16 %v454, %v453
      %v466 = vpack.c.b16 %v456, %v455
      %v467 = vpack.c.b16 %v458, %v457
      %v468 = vpack.c.b16 %v460, %v459
      %477 = vmatprep.subr.bf16.mxu0 0
      %478 = vmatpush1.bf16.msra.mxu0 %v461
      %479 = vmatprep.subr.bf16.mxu0 0
      %480 = vmatpush1.bf16.msra.mxu0 %v462
      %481 = vmatprep.subr.bf16.mxu0 0
      %482 = vmatpush1.bf16.msra.mxu0 %v463
      %483 = vmatprep.subr.bf16.mxu0 0
      %484 = vmatpush1.bf16.msra.mxu0 %v464
      %485 = vmatprep.subr.bf16.mxu0 0
      %486 = vmatpush1.bf16.msra.mxu0 %v465
      %487 = vmatprep.subr.bf16.mxu0 0
      %488 = vmatpush1.bf16.msra.mxu0 %v466
      %489 = vmatprep.subr.bf16.mxu0 0
      %490 = vmatpush1.bf16.msra.mxu0 %v467
      %491 = vmatprep.subr.bf16.mxu0 0
      %492 = vmatpush1.bf16.msra.mxu0 %v468
      %493 = vmatprep.subr.bf16.mxu0 0
      %494 = vmatpush1.bf16.msra.mxu0 0
      %495 = vmatprep.subr.bf16.mxu0 0
      %496 = vmatpush1.bf16.msra.mxu0 0
      %497 = vmatprep.subr.bf16.mxu0 0
      %498 = vmatpush1.bf16.msra.mxu0 0
      %499 = vmatprep.subr.bf16.mxu0 0
      %500 = vmatpush1.bf16.msra.mxu0 0
      %501 = vmatprep.subr.bf16.mxu0 0
      %502 = vmatpush1.bf16.msra.mxu0 0
      %503 = vmatprep.subr.bf16.mxu0 0
      %504 = vmatpush1.bf16.msra.mxu0 0
      %505 = vmatprep.subr.bf16.mxu0 0
      %506 = vmatpush1.bf16.msra.mxu0 0
      %507 = vmatprep.subr.bf16.mxu0 0
      %508 = vmatpush1.bf16.msra.mxu0 0
      %509 = vmatprep.mubr.bf16.mxu0 0
      %510 = vmatmul.mubr.bf16.gmra.mrb[0].mxu0 %v397
      %v511 = vpop.f32.mrb[0].mxu0
      %v512 = vadd.f32 %v331, %v511
      %v513 = vpop.f32.mrb[0].mxu0
      %v514 = vpop.f32.mrb[0].mxu0
      %v515 = vadd.f32 %v331, %v514
      %v516 = vpop.f32.mrb[0].mxu0
      %517 = vmatprep.mubr.bf16.mxu0 0
      %518 = vmatmul.mubr.bf16.gmra.mrb[0].mxu0 %v398
      %v519 = vpop.f32.mrb[0].mxu0
      %v520 = vadd.f32 %v331, %v519
      %v521 = vpop.f32.mrb[0].mxu0
      %v522 = vpop.f32.mrb[0].mxu0
      %v523 = vadd.f32 %v331, %v522
      %v524 = vpop.f32.mrb[0].mxu0
      %525 = vmatprep.mubr.bf16.mxu0 0
      %526 = vmatmul.mubr.bf16.gmra.mrb[0].mxu0 %v399
      %v527 = vpop.f32.mrb[0].mxu0
      %v528 = vadd.f32 %v331, %v527
      %v529 = vpop.f32.mrb[0].mxu0
      %v530 = vpop.f32.mrb[0].mxu0
      %v531 = vadd.f32 %v331, %v530
      %v532 = vpop.f32.mrb[0].mxu0
      %533 = vmatprep.mubr.bf16.mxu0 0
      %534 = vmatmul.mubr.bf16.gmra.mrb[0].mxu0 %v400
      %v535 = vpop.f32.mrb[0].mxu0
      %v536 = vadd.f32 %v331, %v535
      %v537 = vpop.f32.mrb[0].mxu0
      %v538 = vpop.f32.mrb[0].mxu0
      %v539 = vadd.f32 %v331, %v538
      %v540 = vpop.f32.mrb[0].mxu0
      %541 = vmatprep.mubr.bf16.mxu0 0
      %542 = vmatmul.mubr.bf16.gmra.mrb[0].mxu0 %v401
      %v543 = vpop.f32.mrb[0].mxu0
      %v544 = vadd.f32 %v331, %v543
      %v545 = vpop.f32.mrb[0].mxu0
      %v546 = vpop.f32.mrb[0].mxu0
      %v547 = vadd.f32 %v331, %v546
      %v548 = vpop.f32.mrb[0].mxu0
      %549 = vmatprep.mubr.bf16.mxu0 0
      %550 = vmatmul.mubr.bf16.gmra.mrb[0].mxu0 %v402
      %v551 = vpop.f32.mrb[0].mxu0
      %v552 = vadd.f32 %v331, %v551
      %v553 = vpop.f32.mrb[0].mxu0
      %v554 = vpop.f32.mrb[0].mxu0
      %v555 = vadd.f32 %v331, %v554
      %v556 = vpop.f32.mrb[0].mxu0
      %557 = vmatprep.mubr.bf16.mxu0 0
      %558 = vmatmul.mubr.bf16.gmra.mrb[0].mxu0 %v403
      %v559 = vpop.f32.mrb[0].mxu0
      %v560 = vadd.f32 %v331, %v559
      %v561 = vpop.f32.mrb[0].mxu0
      %v562 = vpop.f32.mrb[0].mxu0
      %v563 = vadd.f32 %v331, %v562
      %v564 = vpop.f32.mrb[0].mxu0
      %565 = vmatprep.mubr.bf16.mxu0 0
      %566 = vmatmul.mubr.bf16.gmra.mrb[0].mxu0 %v404
      %v567 = vpop.f32.mrb[0].mxu0
      %v568 = vadd.f32 %v331, %v567
      %v569 = vpop.f32.mrb[0].mxu0
      %v570 = vpop.f32.mrb[0].mxu0
      %v571 = vadd.f32 %v331, %v570
      %v572 = vpop.f32.mrb[0].mxu0
      %573 = vmatprep.mubr.bf16.mxu0 0
      %574 = vmatmul.mubr.bf16.gmra.mrb[0].mxu0 %v405
      %v575 = vpop.f32.mrb[0].mxu0
      %v576 = vadd.f32 %v331, %v575
      %v577 = vpop.f32.mrb[0].mxu0
      %v578 = vpop.f32.mrb[0].mxu0
      %v579 = vadd.f32 %v331, %v578
      %v580 = vpop.f32.mrb[0].mxu0
      %581 = vmatprep.mubr.bf16.mxu0 0
      %582 = vmatmul.mubr.bf16.gmra.mrb[0].mxu0 %v406
      %v583 = vpop.f32.mrb[0].mxu0
      %v584 = vadd.f32 %v331, %v583
      %v585 = vpop.f32.mrb[0].mxu0
      %v586 = vpop.f32.mrb[0].mxu0
      %v587 = vadd.f32 %v331, %v586
      %v588 = vpop.f32.mrb[0].mxu0
      %589 = vmatprep.mubr.bf16.mxu0 0
      %590 = vmatmul.mubr.bf16.gmra.mrb[0].mxu0 %v407
      %v591 = vpop.f32.mrb[0].mxu0
      %v592 = vadd.f32 %v331, %v591
      %v593 = vpop.f32.mrb[0].mxu0
      %v594 = vpop.f32.mrb[0].mxu0
      %v595 = vadd.f32 %v331, %v594
      %v596 = vpop.f32.mrb[0].mxu0
      %597 = vmatprep.mubr.bf16.mxu0 0
      %598 = vmatmul.mubr.bf16.gmra.mrb[0].mxu0 %v408
      %v599 = vpop.f32.mrb[0].mxu0
      %v600 = vadd.f32 %v331, %v599
      %v601 = vpop.f32.mrb[0].mxu0
      %v602 = vpop.f32.mrb[0].mxu0
      %v603 = vadd.f32 %v331, %v602
      %v604 = vpop.f32.mrb[0].mxu0
      %605 = vmatprep.mubr.bf16.mxu0 0
      %606 = vmatmul.mubr.bf16.gmra.mrb[0].mxu0 %v409
      %v607 = vpop.f32.mrb[0].mxu0
      %v608 = vadd.f32 %v331, %v607
      %v609 = vpop.f32.mrb[0].mxu0
      %v610 = vpop.f32.mrb[0].mxu0
      %v611 = vadd.f32 %v331, %v610
      %v612 = vpop.f32.mrb[0].mxu0
      %613 = vmatprep.mubr.bf16.mxu0 0
      %614 = vmatmul.mubr.bf16.gmra.mrb[0].mxu0 %v410
      %v615 = vpop.f32.mrb[0].mxu0
      %v616 = vadd.f32 %v331, %v615
      %v617 = vpop.f32.mrb[0].mxu0
      %v618 = vpop.f32.mrb[0].mxu0
      %v619 = vadd.f32 %v331, %v618
      %v620 = vpop.f32.mrb[0].mxu0
      %621 = vmatprep.mubr.bf16.mxu0 0
      %622 = vmatmul.mubr.bf16.gmra.mrb[0].mxu0 %v411
      %v623 = vpop.f32.mrb[0].mxu0
      %v624 = vadd.f32 %v331, %v623
      %v625 = vpop.f32.mrb[0].mxu0
      %v626 = vpop.f32.mrb[0].mxu0
      %v627 = vadd.f32 %v331, %v626
      %v628 = vpop.f32.mrb[0].mxu0
      %629 = vmatprep.mubr.bf16.mxu0 0
      %630 = vmatmul.mubr.bf16.gmra.mrb[0].mxu0 %v412
      %v631 = vpop.f32.mrb[0].mxu0
      %v632 = vadd.f32 %v331, %v631
      %v633 = vpop.f32.mrb[0].mxu0
      %v634 = vpop.f32.mrb[0].mxu0
      %v635 = vadd.f32 %v331, %v634
      %v636 = vpop.f32.mrb[0].mxu0
      %637 = vdwg.mxu0
      %v638 = vld [vmem:[%s269] sm:$0xf]
      %v639 = vld [vmem:[%s269 + $0x4] sm:$0xf]
      %v640 = vld [vmem:[%s269 + $0x8] sm:$0xf]
      %v641 = vld [vmem:[%s269 + $0xc] sm:$0xf]
      %v642 = vld [vmem:[%s269 + $0x10] sm:$0xf]
      %v643 = vld [vmem:[%s269 + $0x14] sm:$0xf]
      %v644 = vld [vmem:[%s269 + $0x18] sm:$0xf]
      %v645 = vld [vmem:[%s269 + $0x1c] sm:$0xf]
      %v646 = vld [vmem:[%s269 + $0x20] sm:$0xf]
      %v647 = vld [vmem:[%s269 + $0x24] sm:$0xf]
      %v648 = vld [vmem:[%s269 + $0x28] sm:$0xf]
      %v649 = vld [vmem:[%s269 + $0x2c] sm:$0xf]
      %v650 = vld [vmem:[%s269 + $0x30] sm:$0xf]
      %v651 = vld [vmem:[%s269 + $0x34] sm:$0xf]
      %v652 = vld [vmem:[%s269 + $0x38] sm:$0xf]
      %v653 = vld [vmem:[%s269 + $0x3c] sm:$0xf]
      %v654 = vld [vmem:[%s269 + $0x40] sm:$0xf]
      %v655 = vld [vmem:[%s269 + $0x44] sm:$0xf]
      %v656 = vld [vmem:[%s269 + $0x48] sm:$0xf]
      %v657 = vld [vmem:[%s269 + $0x4c] sm:$0xf]
      %v658 = vld [vmem:[%s269 + $0x50] sm:$0xf]
      %v659 = vld [vmem:[%s269 + $0x54] sm:$0xf]
      %v660 = vld [vmem:[%s269 + $0x58] sm:$0xf]
      %v661 = vld [vmem:[%s269 + $0x5c] sm:$0xf]
      %v662 = vld [vmem:[%s269 + $0x60] sm:$0xf]
      %v663 = vld [vmem:[%s269 + $0x64] sm:$0xf]
      %v664 = vld [vmem:[%s269 + $0x68] sm:$0xf]
      %v665 = vld [vmem:[%s269 + $0x6c] sm:$0xf]
      %v666 = vld [vmem:[%s269 + $0x70] sm:$0xf]
      %v667 = vld [vmem:[%s269 + $0x74] sm:$0xf]
      %v668 = vld [vmem:[%s269 + $0x78] sm:$0xf]
      %v669 = vld [vmem:[%s269 + $0x7c] sm:$0xf]
      %v670 = vld [vmem:[%s4] sm:$0xf]
      %v671 = vld [vmem:[%s4 + $0x4] sm:$0xf]
      %v672 = vld [vmem:[%s4 + $0x8] sm:$0xf]
      %v673 = vld [vmem:[%s4 + $0xc] sm:$0xf]
      %v674 = vld [vmem:[%s4 + $0x10] sm:$0xf]
      %v675 = vld [vmem:[%s4 + $0x14] sm:$0xf]
      %v676 = vld [vmem:[%s4 + $0x18] sm:$0xf]
      %v677 = vld [vmem:[%s4 + $0x1c] sm:$0xf]
      %v678 = vld [vmem:[%s4 + $0x20] sm:$0xf]
      %v679 = vld [vmem:[%s4 + $0x24] sm:$0xf]
      %v680 = vld [vmem:[%s4 + $0x28] sm:$0xf]
      %v681 = vld [vmem:[%s4 + $0x2c] sm:$0xf]
      %v682 = vld [vmem:[%s4 + $0x30] sm:$0xf]
      %v683 = vld [vmem:[%s4 + $0x34] sm:$0xf]
      %v684 = vld [vmem:[%s4 + $0x38] sm:$0xf]
      %v685 = vld [vmem:[%s4 + $0x3c] sm:$0xf]
      %v718 = vunpack.c.l.b16 %v638
      %v719 = vunpack.c.l.b16 %v639
      %v720 = vunpack.c.l.b16 %v640
      %v721 = vunpack.c.l.b16 %v641
      %v722 = vunpack.c.l.b16 %v642
      %v723 = vunpack.c.l.b16 %v643
      %v724 = vunpack.c.l.b16 %v644
      %v725 = vunpack.c.l.b16 %v645
      %v726 = vunpack.c.l.b16 %v646
      %v727 = vunpack.c.l.b16 %v647
      %v728 = vunpack.c.l.b16 %v648
      %v729 = vunpack.c.l.b16 %v649
      %v730 = vunpack.c.l.b16 %v650
      %v731 = vunpack.c.l.b16 %v651
      %v732 = vunpack.c.l.b16 %v652
      %v733 = vunpack.c.l.b16 %v653
      %v734 = vunpack.c.l.b16 %v654
      %v735 = vunpack.c.l.b16 %v655
      %v736 = vunpack.c.l.b16 %v656
      %v737 = vunpack.c.l.b16 %v657
      %v738 = vunpack.c.l.b16 %v658
      %v739 = vunpack.c.l.b16 %v659
      %v740 = vunpack.c.l.b16 %v660
      %v741 = vunpack.c.l.b16 %v661
      %v742 = vunpack.c.l.b16 %v662
      %v743 = vunpack.c.l.b16 %v663
      %v744 = vunpack.c.l.b16 %v664
      %v745 = vunpack.c.l.b16 %v665
      %v746 = vunpack.c.l.b16 %v666
      %v747 = vunpack.c.l.b16 %v667
      %v748 = vunpack.c.l.b16 %v668
      %v749 = vunpack.c.l.b16 %v669
      %v750 = vpack.c.b16 %v719, %v718
      %v751 = vpack.c.b16 %v721, %v720
      %v752 = vpack.c.b16 %v723, %v722
      %v753 = vpack.c.b16 %v725, %v724
      %v754 = vpack.c.b16 %v727, %v726
      %v755 = vpack.c.b16 %v729, %v728
      %v756 = vpack.c.b16 %v731, %v730
      %v757 = vpack.c.b16 %v733, %v732
      %v758 = vpack.c.b16 %v735, %v734
      %v759 = vpack.c.b16 %v737, %v736
      %v760 = vpack.c.b16 %v739, %v738
      %v761 = vpack.c.b16 %v741, %v740
      %v762 = vpack.c.b16 %v743, %v742
      %v763 = vpack.c.b16 %v745, %v744
      %v764 = vpack.c.b16 %v747, %v746
      %v765 = vpack.c.b16 %v749, %v748
      %v798 = vunpack.c.l.b16 %v670
      %v799 = vunpack.c.l.b16 %v671
      %v800 = vunpack.c.l.b16 %v672
      %v801 = vunpack.c.l.b16 %v673
      %v802 = vunpack.c.l.b16 %v674
      %v803 = vunpack.c.l.b16 %v675
      %v804 = vunpack.c.l.b16 %v676
      %v805 = vunpack.c.l.b16 %v677
      %v806 = vunpack.c.l.b16 %v678
      %v807 = vunpack.c.l.b16 %v679
      %v808 = vunpack.c.l.b16 %v680
      %v809 = vunpack.c.l.b16 %v681
      %v810 = vunpack.c.l.b16 %v682
      %v811 = vunpack.c.l.b16 %v683
      %v812 = vunpack.c.l.b16 %v684
      %v813 = vunpack.c.l.b16 %v685
      %v814 = vpack.c.b16 %v799, %v798
      %v815 = vpack.c.b16 %v801, %v800
      %v816 = vpack.c.b16 %v803, %v802
      %v817 = vpack.c.b16 %v805, %v804
      %v818 = vpack.c.b16 %v807, %v806
      %v819 = vpack.c.b16 %v809, %v808
      %v820 = vpack.c.b16 %v811, %v810
      %v821 = vpack.c.b16 %v813, %v812
      %830 = vmatprep.subr.bf16.mxu0 0
      %831 = vmatpush1.bf16.msra.mxu0 %v814
      %832 = vmatprep.subr.bf16.mxu0 0
      %833 = vmatpush1.bf16.msra.mxu0 %v815
      %834 = vmatprep.subr.bf16.mxu0 0
      %835 = vmatpush1.bf16.msra.mxu0 %v816
      %836 = vmatprep.subr.bf16.mxu0 0
      %837 = vmatpush1.bf16.msra.mxu0 %v817
      %838 = vmatprep.subr.bf16.mxu0 0
      %839 = vmatpush1.bf16.msra.mxu0 %v818
      %840 = vmatprep.subr.bf16.mxu0 0
      %841 = vmatpush1.bf16.msra.mxu0 %v819
      %842 = vmatprep.subr.bf16.mxu0 0
      %843 = vmatpush1.bf16.msra.mxu0 %v820
      %844 = vmatprep.subr.bf16.mxu0 0
      %845 = vmatpush1.bf16.msra.mxu0 %v821
      %846 = vmatprep.subr.bf16.mxu0 0
      %847 = vmatpush1.bf16.msra.mxu0 0
      %848 = vmatprep.subr.bf16.mxu0 0
      %849 = vmatpush1.bf16.msra.mxu0 0
      %850 = vmatprep.subr.bf16.mxu0 0
      %851 = vmatpush1.bf16.msra.mxu0 0
      %852 = vmatprep.subr.bf16.mxu0 0
      %853 = vmatpush1.bf16.msra.mxu0 0
      %854 = vmatprep.subr.bf16.mxu0 0
      %855 = vmatpush1.bf16.msra.mxu0 0
      %856 = vmatprep.subr.bf16.mxu0 0
      %857 = vmatpush1.bf16.msra.mxu0 0
      %858 = vmatprep.subr.bf16.mxu0 0
      %859 = vmatpush1.bf16.msra.mxu0 0
      %860 = vmatprep.subr.bf16.mxu0 0
      %861 = vmatpush1.bf16.msra.mxu0 0
      %862 = vmatprep.mubr.bf16.mxu0 0
      %863 = vmatmul.mubr.bf16.gmra.mrb[0].mxu0 %v750
      %v864 = vpop.f32.mrb[0].mxu0
      %v865 = vadd.f32 0.0, %v864
      %v866 = vpop.f32.mrb[0].mxu0
      %v867 = vpop.f32.mrb[0].mxu0
      %v868 = vadd.f32 0.0, %v867
      %v869 = vpop.f32.mrb[0].mxu0
      %870 = vmatprep.mubr.bf16.mxu0 0
      %871 = vmatmul.mubr.bf16.gmra.mrb[0].mxu0 %v751
      %v872 = vpop.f32.mrb[0].mxu0
      %v873 = vadd.f32 0.0, %v872
      %v874 = vpop.f32.mrb[0].mxu0
      %v875 = vpop.f32.mrb[0].mxu0
      %v876 = vadd.f32 0.0, %v875
      %v877 = vpop.f32.mrb[0].mxu0
      %878 = vmatprep.mubr.bf16.mxu0 0
      %879 = vmatmul.mubr.bf16.gmra.mrb[0].mxu0 %v752
      %v880 = vpop.f32.mrb[0].mxu0
      %v881 = vadd.f32 0.0, %v880
      %v882 = vpop.f32.mrb[0].mxu0
      %v883 = vpop.f32.mrb[0].mxu0
      %v884 = vadd.f32 0.0, %v883
      %v885 = vpop.f32.mrb[0].mxu0
      %886 = vmatprep.mubr.bf16.mxu0 0
      %887 = vmatmul.mubr.bf16.gmra.mrb[0].mxu0 %v753
      %v888 = vpop.f32.mrb[0].mxu0
      %v889 = vadd.f32 0.0, %v888
      %v890 = vpop.f32.mrb[0].mxu0
      %v891 = vpop.f32.mrb[0].mxu0
      %v892 = vadd.f32 0.0, %v891
      %v893 = vpop.f32.mrb[0].mxu0
      %894 = vmatprep.mubr.bf16.mxu0 0
      %895 = vmatmul.mubr.bf16.gmra.mrb[0].mxu0 %v754
      %v896 = vpop.f32.mrb[0].mxu0
      %v897 = vadd.f32 0.0, %v896
      %v898 = vpop.f32.mrb[0].mxu0
      %v899 = vpop.f32.mrb[0].mxu0
      %v900 = vadd.f32 0.0, %v899
      %v901 = vpop.f32.mrb[0].mxu0
      %902 = vmatprep.mubr.bf16.mxu0 0
      %903 = vmatmul.mubr.bf16.gmra.mrb[0].mxu0 %v755
      %v904 = vpop.f32.mrb[0].mxu0
      %v905 = vadd.f32 0.0, %v904
      %v906 = vpop.f32.mrb[0].mxu0
      %v907 = vpop.f32.mrb[0].mxu0
      %v908 = vadd.f32 0.0, %v907
      %v909 = vpop.f32.mrb[0].mxu0
      %910 = vmatprep.mubr.bf16.mxu0 0
      %911 = vmatmul.mubr.bf16.gmra.mrb[0].mxu0 %v756
      %v912 = vpop.f32.mrb[0].mxu0
      %v913 = vadd.f32 0.0, %v912
      %v914 = vpop.f32.mrb[0].mxu0
      %v915 = vpop.f32.mrb[0].mxu0
      %v916 = vadd.f32 0.0, %v915
      %v917 = vpop.f32.mrb[0].mxu0
      %918 = vmatprep.mubr.bf16.mxu0 0
      %919 = vmatmul.mubr.bf16.gmra.mrb[0].mxu0 %v757
      %v920 = vpop.f32.mrb[0].mxu0
      %v921 = vadd.f32 0.0, %v920
      %v922 = vpop.f32.mrb[0].mxu0
      %v923 = vpop.f32.mrb[0].mxu0
      %v924 = vadd.f32 0.0, %v923
      %v925 = vpop.f32.mrb[0].mxu0
      %926 = vmatprep.mubr.bf16.mxu0 0
      %927 = vmatmul.mubr.bf16.gmra.mrb[0].mxu0 %v758
      %v928 = vpop.f32.mrb[0].mxu0
      %v929 = vadd.f32 0.0, %v928
      %v930 = vpop.f32.mrb[0].mxu0
      %v931 = vpop.f32.mrb[0].mxu0
      %v932 = vadd.f32 0.0, %v931
      %v933 = vpop.f32.mrb[0].mxu0
      %934 = vmatprep.mubr.bf16.mxu0 0
      %935 = vmatmul.mubr.bf16.gmra.mrb[0].mxu0 %v759
      %v936 = vpop.f32.mrb[0].mxu0
      %v937 = vadd.f32 0.0, %v936
      %v938 = vpop.f32.mrb[0].mxu0
      %v939 = vpop.f32.mrb[0].mxu0
      %v940 = vadd.f32 0.0, %v939
      %v941 = vpop.f32.mrb[0].mxu0
      %942 = vmatprep.mubr.bf16.mxu0 0
      %943 = vmatmul.mubr.bf16.gmra.mrb[0].mxu0 %v760
      %v944 = vpop.f32.mrb[0].mxu0
      %v945 = vadd.f32 0.0, %v944
      %v946 = vpop.f32.mrb[0].mxu0
      %v947 = vpop.f32.mrb[0].mxu0
      %v948 = vadd.f32 0.0, %v947
      %v949 = vpop.f32.mrb[0].mxu0
      %950 = vmatprep.mubr.bf16.mxu0 0
      %951 = vmatmul.mubr.bf16.gmra.mrb[0].mxu0 %v761
      %v952 = vpop.f32.mrb[0].mxu0
      %v953 = vadd.f32 0.0, %v952
      %v954 = vpop.f32.mrb[0].mxu0
      %v955 = vpop.f32.mrb[0].mxu0
      %v956 = vadd.f32 0.0, %v955
      %v957 = vpop.f32.mrb[0].mxu0
      %958 = vmatprep.mubr.bf16.mxu0 0
      %959 = vmatmul.mubr.bf16.gmra.mrb[0].mxu0 %v762
      %v960 = vpop.f32.mrb[0].mxu0
      %v961 = vadd.f32 0.0, %v960
      %v962 = vpop.f32.mrb[0].mxu0
      %v963 = vpop.f32.mrb[0].mxu0
      %v964 = vadd.f32 0.0, %v963
      %v965 = vpop.f32.mrb[0].mxu0
      %966 = vmatprep.mubr.bf16.mxu0 0
      %967 = vmatmul.mubr.bf16.gmra.mrb[0].mxu0 %v763
      %v968 = vpop.f32.mrb[0].mxu0
      %v969 = vadd.f32 0.0, %v968
      %v970 = vpop.f32.mrb[0].mxu0
      %v971 = vpop.f32.mrb[0].mxu0
      %v972 = vadd.f32 0.0, %v971
      %v973 = vpop.f32.mrb[0].mxu0
      %974 = vmatprep.mubr.bf16.mxu0 0
      %975 = vmatmul.mubr.bf16.gmra.mrb[0].mxu0 %v764
      %v976 = vpop.f32.mrb[0].mxu0
      %v977 = vadd.f32 0.0, %v976
      %v978 = vpop.f32.mrb[0].mxu0
      %v979 = vpop.f32.mrb[0].mxu0
      %v980 = vadd.f32 0.0, %v979
      %v981 = vpop.f32.mrb[0].mxu0
      %982 = vmatprep.mubr.bf16.mxu0 0
      %983 = vmatmul.mubr.bf16.gmra.mrb[0].mxu0 %v765
      %v984 = vpop.f32.mrb[0].mxu0
      %v985 = vadd.f32 0.0, %v984
      %v986 = vpop.f32.mrb[0].mxu0
      %v987 = vpop.f32.mrb[0].mxu0
      %v988 = vadd.f32 0.0, %v987
      %v989 = vpop.f32.mrb[0].mxu0
      %990 = vdwg.mxu0
      %v991 = vadd.f32 %v512, %v865
      %v992 = vadd.f32 %v515, %v868
      %v993 = vadd.f32 %v520, %v873
      %v994 = vadd.f32 %v523, %v876
      %v995 = vadd.f32 %v528, %v881
      %v996 = vadd.f32 %v531, %v884
      %v997 = vadd.f32 %v536, %v889
      %v998 = vadd.f32 %v539, %v892
      %v999 = vadd.f32 %v544, %v897
      %v1000 = vadd.f32 %v547, %v900
      %v1001 = vadd.f32 %v552, %v905
      %v1002 = vadd.f32 %v555, %v908
      %v1003 = vadd.f32 %v560, %v913
      %v1004 = vadd.f32 %v563, %v916
      %v1005 = vadd.f32 %v568, %v921
      %v1006 = vadd.f32 %v571, %v924
      %v1007 = vadd.f32 %v576, %v929
      %v1008 = vadd.f32 %v579, %v932
      %v1009 = vadd.f32 %v584, %v937
      %v1010 = vadd.f32 %v587, %v940
      %v1011 = vadd.f32 %v592, %v945
      %v1012 = vadd.f32 %v595, %v948
      %v1013 = vadd.f32 %v600, %v953
      %v1014 = vadd.f32 %v603, %v956
      %v1015 = vadd.f32 %v608, %v961
      %v1016 = vadd.f32 %v611, %v964
      %v1017 = vadd.f32 %v616, %v969
      %v1018 = vadd.f32 %v619, %v972
      %v1019 = vadd.f32 %v624, %v977
      %v1020 = vadd.f32 %v627, %v980
      %v1021 = vadd.f32 %v632, %v985
      %v1022 = vadd.f32 %v635, %v988
      %v1023 = vld [vmem:[%s5] sm:$0x1]
      %v1025 = vlaneseq
      %v1026 = vshrl.u32 %v1025, 7
      %v1027 = vsub.s32 0, %v1026
      %v1028 = vrot.slane %v1023, %v1027
      %v1030 = vadd.f32 %v991, %v1028
      %v1031 = vadd.f32 %v992, %v1028
      %v1032 = vadd.f32 %v993, %v1028
      %v1033 = vadd.f32 %v994, %v1028
      %v1034 = vadd.f32 %v995, %v1028
      %v1035 = vadd.f32 %v996, %v1028
      %v1036 = vadd.f32 %v997, %v1028
      %v1037 = vadd.f32 %v998, %v1028
      %v1038 = vadd.f32 %v999, %v1028
      %v1039 = vadd.f32 %v1000, %v1028
      %v1040 = vadd.f32 %v1001, %v1028
      %v1041 = vadd.f32 %v1002, %v1028
      %v1042 = vadd.f32 %v1003, %v1028
      %v1043 = vadd.f32 %v1004, %v1028
      %v1044 = vadd.f32 %v1005, %v1028
      %v1045 = vadd.f32 %v1006, %v1028
      %v1046 = vadd.f32 %v1007, %v1028
      %v1047 = vadd.f32 %v1008, %v1028
      %v1048 = vadd.f32 %v1009, %v1028
      %v1049 = vadd.f32 %v1010, %v1028
      %v1050 = vadd.f32 %v1011, %v1028
      %v1051 = vadd.f32 %v1012, %v1028
      %v1052 = vadd.f32 %v1013, %v1028
      %v1053 = vadd.f32 %v1014, %v1028
      %v1054 = vadd.f32 %v1015, %v1028
      %v1055 = vadd.f32 %v1016, %v1028
      %v1056 = vadd.f32 %v1017, %v1028
      %v1057 = vadd.f32 %v1018, %v1028
      %v1058 = vadd.f32 %v1019, %v1028
      %v1059 = vadd.f32 %v1020, %v1028
      %v1060 = vadd.f32 %v1021, %v1028
      %v1061 = vadd.f32 %v1022, %v1028
      %1062 = vst [vmem:[%s275] sm:$0xff] %v1030
      %1063 = vst [vmem:[%s275 + $0x8] sm:$0xff] %v1031
      %1064 = vst [vmem:[%s275 + $0x10] sm:$0xff] %v1032
      %1065 = vst [vmem:[%s275 + $0x18] sm:$0xff] %v1033
      %1066 = vst [vmem:[%s275 + $0x20] sm:$0xff] %v1034
      %1067 = vst [vmem:[%s275 + $0x28] sm:$0xff] %v1035
      %1068 = vst [vmem:[%s275 + $0x30] sm:$0xff] %v1036
      %1069 = vst [vmem:[%s275 + $0x38] sm:$0xff] %v1037
      %1070 = vst [vmem:[%s275 + $0x40] sm:$0xff] %v1038
      %1071 = vst [vmem:[%s275 + $0x48] sm:$0xff] %v1039
      %1072 = vst [vmem:[%s275 + $0x50] sm:$0xff] %v1040
      %1073 = vst [vmem:[%s275 + $0x58] sm:$0xff] %v1041
      %1074 = vst [vmem:[%s275 + $0x60] sm:$0xff] %v1042
      %1075 = vst [vmem:[%s275 + $0x68] sm:$0xff] %v1043
      %1076 = vst [vmem:[%s275 + $0x70] sm:$0xff] %v1044
      %1077 = vst [vmem:[%s275 + $0x78] sm:$0xff] %v1045
      %1078 = vst [vmem:[%s275 + $0x80] sm:$0xff] %v1046
      %1079 = vst [vmem:[%s275 + $0x88] sm:$0xff] %v1047
      %1080 = vst [vmem:[%s275 + $0x90] sm:$0xff] %v1048
      %1081 = vst [vmem:[%s275 + $0x98] sm:$0xff] %v1049
      %1082 = vst [vmem:[%s275 + $0xa0] sm:$0xff] %v1050
      %1083 = vst [vmem:[%s275 + $0xa8] sm:$0xff] %v1051
      %1084 = vst [vmem:[%s275 + $0xb0] sm:$0xff] %v1052
      %1085 = vst [vmem:[%s275 + $0xb8] sm:$0xff] %v1053
      %1086 = vst [vmem:[%s275 + $0xc0] sm:$0xff] %v1054
      %1087 = vst [vmem:[%s275 + $0xc8] sm:$0xff] %v1055
      %1088 = vst [vmem:[%s275 + $0xd0] sm:$0xff] %v1056
      %1089 = vst [vmem:[%s275 + $0xd8] sm:$0xff] %v1057
      %1090 = vst [vmem:[%s275 + $0xe0] sm:$0xff] %v1058
      %1091 = vst [vmem:[%s275 + $0xe8] sm:$0xff] %v1059
      %1092 = vst [vmem:[%s275 + $0xf0] sm:$0xff] %v1060
      %1093 = vst [vmem:[%s275 + $0xf8] sm:$0xff] %v1061
      %s1094 = smul.u32 32, %s17
      %p1095 = scmp.lt.s32.totalorder %s1094, 63
      %s1096 = scalar_select %p1095, %s1094, 63
      %s1097 = smul.addr %s1096, 8
      %s1098 = scalar_lea.vmem %s6, %s1097
      // Predicated region
      $region45: #{block_forward.5} parent=43 // pred_check
        %p1099 = pneg %p171
      $region46: #{block_forward.5} parent=43 // pred_check_branch
        %1101 = sbr.rel (%p1099) target = $region48
      $region47: #{block_forward.5} parent=43 // pred_region
        %s1102 = smul.u32 32, %s17
      $region48: #{block_forward.5} parent=43 // pred_fallthru
        _
    $region44: #{block_forward.5} parent=5 // pred_fallthru
      _
    %p1103 = scmp.le.s32.totalorder 2, %s12
    // Predicated region
    $region49: #{block_forward.5} parent=5 // pred_check
      %p1104 = pneg %p1103
    $region50: #{block_forward.5} parent=5 // pred_check_branch
      %1106 = sbr.rel (%p1104) target = $region52
    $region51: #{block_forward.5} parent=5 // pred_region
      %s1107 = ssub.s32 %s12, 2
      // Predicated region
      $region53: #{block_forward.5} parent=51 // pred_check
        %p1108 = pneg %p177
      $region54: #{block_forward.5} parent=51 // pred_check_branch
        %1110 = sbr.rel (%p1108) target = $region56
      $region55: #{block_forward.5} parent=51 // pred_region
        %s1111 = smul.u32 32, %s18
        %p1112 = scmp.lt.s32.totalorder %s1111, 63
        %s1113 = scalar_select %p1112, %s1111, 63
        %s1114 = smul.addr %s1113, 8
        %s1115 = scalar_lea.vmem %s6, %s1114
      $region56: #{block_forward.5} parent=51 // pred_fallthru
        _
    $region52: #{block_forward.5} parent=5 // pred_fallthru
      _
  $region6: #{block_forward.5} parent=0 // loop_footer
    %s16 = sadd.s32 1, %s12
  $region7: #{block_forward.5} parent=0 // loop_footer_branch
    %11 = sbr.rel target = $region3
  $region8: #{block_forward.5} parent=0 // loop_exit
    _

// kernel: block_forward.4
$region0: #{block_forward.4}
  #allocation0 [shape = 'u32[]', space=smem, size = 0x4, offset = 0x4, fixed_abs, tag = 'smem constant byte address 0x4 - core index']
  #allocation1 [shape = 'u32[144,128]{1,0:T(1,128)}', space=vmem, size = 0x12000, scoped, tag = 'internal scratch']
  #allocation2 [shape = 'f32[1,18,18,128]{3,2,1,0:T(8,128)}', space=vmem, size = 0x36000, scoped, tag = 'scratch operand']
  %s0 = inlined_call_operand.vmem [shape: bf16[2,16,16,128], index: 0, kind: input, shape index: {}]
  %s1 = inlined_call_operand.vmem [shape: bf16[3,3,128], index: 1, kind: input, shape index: {}]
  %s2 = inlined_call_operand.vmem [shape: f32[1,128], index: 2, kind: input, shape index: {}]
  %s3 = inlined_call_operand.vmem [shape: bf16[2,16,16,128], index: 3, kind: output, shape index: {}]
  %s4 = sld [smem:[#allocation0]]
  $region45: #{block_forward.4} parent=0
    _
  %s6 = ssub.s32 1, %s4
  %s7 = scalar_select 0, %s6, %s4
  loop: start=0, step=1, limit=4
  $region2: #{block_forward.4} parent=0 // loop_pre_header
    _
  $region3: #{block_forward.4} parent=0 // loop_header
    %s9 = sphi 0, %s13
    %p10 = scmp.ge.s32.totalorder %s9, 4
    %s16 = sphi 0, %s28
    %s17 = sphi 0, %s24
    %s18 = sphi 0, %s16
    %s19 = sphi 0, %s17
    %s20 = sphi 0, %s18
    %s21 = sphi 0, %s19
    %s33 = sphi 0, %s35
    %s36 = sphi 0, %s33
    %s37 = sphi 0, %s36
    %s53 = sphi 0, %s37
    %s59 = sphi 0, %s61
    %s62 = sphi 0, %s59
    %s63 = sphi 0, %s62
    %s79 = sphi 0, %s63
    %s85 = sphi 0, %s87
    %s88 = sphi 0, %s85
    %s89 = sphi 0, %s88
    %s105 = sphi 0, %s89
    %s113 = sphi 0, %s115
    %s116 = sphi 0, %s113
    %s117 = sphi 0, %s116
    %s133 = sphi 0, %s117
  $region4: #{block_forward.4} parent=0 // loop_header_branch
    %12 = sbr.rel (%p10) target = $region8
  $region5: #{block_forward.4} parent=0 // loop_body
    %s14 = ssub.s32 %s9, 1
    %s15 = ssub.s32 %s9, 2
    %s22 = sadd.s32 1, %s17
    %p23 = scmp.ge.s32.totalorder %s22, 1
    %s24 = scalar_select %p23, 0, %s22
    %s25 = sadd.s32 1, %s16
    %s26 = scalar_select %p23, %s25, %s16
    %p27 = scmp.ge.s32.totalorder %s26, 2
    %s28 = scalar_select %p27, 0, %s26
    %s29 = ssub.s32 %s16, %s28
    %s30 = ssub.s32 %s17, %s24
    %s31 = sor.u32 %s29, %s30
    %p32 = scmp.eq.s32.totalorder %s31, 0
    %s34 = sadd.s32 %s33, 1
    %s35 = scalar_select %p32, %s33, %s34
    %p38 = pneg %p32
    %p39 = scmp.eq.s32.totalorder %s9, 1
    %p40 = por %p38, %p39
    %p41 = scmp.ne.s32.totalorder %s33, %s36
    %p42 = scmp.eq.s32.totalorder %s9, 0
    %p43 = por %p41, %p42
    %p44 = scmp.ne.s32.totalorder %s33, %s36
    %p45 = scmp.eq.s32.totalorder %s14, 1
    %p46 = por %p44, %p45
    %p47 = scmp.ne.s32.totalorder %s36, %s37
    %p48 = scmp.eq.s32.totalorder %s14, 0
    %p49 = por %p47, %p48
    %p50 = scmp.ne.s32.totalorder %s36, %s37
    %p51 = scmp.eq.s32.totalorder %s15, 1
    %p52 = por %p50, %p51
    %p54 = scmp.ne.s32.totalorder %s37, %s53
    %p55 = scmp.eq.s32.totalorder %s15, 0
    %p56 = por %p54, %p55
    %s57 = ssub.s32 %s17, %s24
    %p58 = scmp.eq.s32.totalorder %s57, 0
    %s60 = sadd.s32 %s59, 1
    %s61 = scalar_select %p58, %s59, %s60
    %p64 = pneg %p58
    %p65 = scmp.eq.s32.totalorder %s9, 1
    %p66 = por %p64, %p65
    %p67 = scmp.ne.s32.totalorder %s59, %s62
    %p68 = scmp.eq.s32.totalorder %s9, 0
    %p69 = por %p67, %p68
    %p70 = scmp.ne.s32.totalorder %s59, %s62
    %p71 = scmp.eq.s32.totalorder %s14, 1
    %p72 = por %p70, %p71
    %p73 = scmp.ne.s32.totalorder %s62, %s63
    %p74 = scmp.eq.s32.totalorder %s14, 0
    %p75 = por %p73, %p74
    %p76 = scmp.ne.s32.totalorder %s62, %s63
    %p77 = scmp.eq.s32.totalorder %s15, 1
    %p78 = por %p76, %p77
    %p80 = scmp.ne.s32.totalorder %s63, %s79
    %p81 = scmp.eq.s32.totalorder %s15, 0
    %p82 = por %p80, %p81
    %s83 = ssub.s32 %s17, %s24
    %p84 = scmp.eq.s32.totalorder %s83, 0
    %s86 = sadd.s32 %s85, 1
    %s87 = scalar_select %p84, %s85, %s86
    %p90 = pneg %p84
    %p91 = scmp.eq.s32.totalorder %s9, 1
    %p92 = por %p90, %p91
    %p93 = scmp.ne.s32.totalorder %s85, %s88
    %p94 = scmp.eq.s32.totalorder %s9, 0
    %p95 = por %p93, %p94
    %p96 = scmp.ne.s32.totalorder %s85, %s88
    %p97 = scmp.eq.s32.totalorder %s14, 1
    %p98 = por %p96, %p97
    %p99 = scmp.ne.s32.totalorder %s88, %s89
    %p100 = scmp.eq.s32.totalorder %s14, 0
    %p101 = por %p99, %p100
    %p102 = scmp.ne.s32.totalorder %s88, %s89
    %p103 = scmp.eq.s32.totalorder %s15, 1
    %p104 = por %p102, %p103
    %p106 = scmp.ne.s32.totalorder %s89, %s105
    %p107 = scmp.eq.s32.totalorder %s15, 0
    %p108 = por %p106, %p107
    %s109 = ssub.s32 %s16, %s28
    %s110 = ssub.s32 %s17, %s24
    %s111 = sor.u32 %s109, %s110
    %p112 = scmp.eq.s32.totalorder %s111, 0
    %s114 = sadd.s32 %s113, 1
    %s115 = scalar_select %p112, %s113, %s114
    %p118 = pneg %p112
    %p119 = scmp.eq.s32.totalorder %s9, 1
    %p120 = por %p118, %p119
    %p121 = scmp.ne.s32.totalorder %s113, %s116
    %p122 = scmp.eq.s32.totalorder %s9, 0
    %p123 = por %p121, %p122
    %p124 = scmp.ne.s32.totalorder %s113, %s116
    %p125 = scmp.eq.s32.totalorder %s14, 1
    %p126 = por %p124, %p125
    %p127 = scmp.ne.s32.totalorder %s116, %s117
    %p128 = scmp.eq.s32.totalorder %s14, 0
    %p129 = por %p127, %p128
    %p130 = scmp.ne.s32.totalorder %s116, %s117
    %p131 = scmp.eq.s32.totalorder %s15, 1
    %p132 = por %p130, %p131
    %p134 = scmp.ne.s32.totalorder %s117, %s133
    %p135 = scmp.eq.s32.totalorder %s15, 0
    %p136 = por %p134, %p135
    %p137 = scmp.le.s32.totalorder 1, %s9
    %p138 = scmp.lt.s32.totalorder %s9, 3
    %p139 = pnand %p137, %p138
    %p140 = pneg %p139
    // Predicated region
    $region9: #{block_forward.4} parent=5 // pred_check
      _
    $region10: #{block_forward.4} parent=5 // pred_check_branch
      %142 = sbr.rel (%p139) target = $region12
    $region11: #{block_forward.4} parent=5 // pred_region
      %s143 = ssub.s32 %s9, 1
      // Predicated region
      $region13: #{block_forward.4} parent=11 // pred_check
        %p144 = pneg %p75
      $region14: #{block_forward.4} parent=11 // pred_check_branch
        %146 = sbr.rel (%p144) target = $region16
      $region15: #{block_forward.4} parent=11 // pred_region
        %p147 = scmp.lt.s32.totalorder %s19, 0
        %s148 = scalar_select %p147, %s19, 0
        %s149 = smul.addr %s148, 2
        %s150 = scalar_lea.vmem %s1, %s149
      $region16: #{block_forward.4} parent=11 // pred_fallthru
        _
      // Predicated region
      $region17: #{block_forward.4} parent=11 // pred_check
        %p151 = pneg %p101
      $region18: #{block_forward.4} parent=11 // pred_check_branch
        %153 = sbr.rel (%p151) target = $region20
      $region19: #{block_forward.4} parent=11 // pred_region
        %p154 = scmp.lt.s32.totalorder %s19, 0
        %s155 = scalar_select %p154, %s19, 0
        %s156 = scalar_lea.vmem %s2, %s155
      $region20: #{block_forward.4} parent=11 // pred_fallthru
        _
    $region12: #{block_forward.4} parent=5 // pred_fallthru
      _
    %p157 = scmp.lt.s32.totalorder %s9, 2
    // Predicated region
    $region21: #{block_forward.4} parent=5 // pred_check
      %p158 = pneg %p157
    $region22: #{block_forward.4} parent=5 // pred_check_branch
      %160 = sbr.rel (%p158) target = $region24
    $region23: #{block_forward.4} parent=5 // pred_region
      // Predicated region
      $region25: #{block_forward.4} parent=23 // pred_check
        %p161 = pneg %p43
      $region26: #{block_forward.4} parent=23 // pred_check_branch
        %163 = sbr.rel (%p161) target = $region28
      $region27: #{block_forward.4} parent=23 // pred_region
        %p164 = scmp.lt.s32.totalorder %s16, 1
        %s165 = scalar_select %p164, %s16, 1
        %p166 = scmp.lt.s32.totalorder %s17, 0
        %s167 = scalar_select %p166, %s17, 0
        %s168 = smul.addr %s165, 32
        %s169 = sadd.s32 %s167, %s168
        %s170 = smul.addr %s169, 4
        %s171 = scalar_lea.vmem %s0, %s170
      $region28: #{block_forward.4} parent=23 // pred_fallthru
        _
    $region24: #{block_forward.4} parent=5 // pred_fallthru
      _
    %p172 = scmp.le.s32.totalorder 1, %s9
    %p173 = scmp.lt.s32.totalorder %s9, 3
    %p174 = pnand %p172, %p173
    %p175 = pneg %p174
    // Predicated region
    $region29: #{block_forward.4} parent=5 // pred_check
      _
    $region30: #{block_forward.4} parent=5 // pred_check_branch
      %177 = sbr.rel (%p174) target = $region32
    $region31: #{block_forward.4} parent=5 // pred_region
      %s178 = ssub.s32 %s9, 1
      %p179 = scmp.lt.s32.totalorder %s18, 1
      %s180 = scalar_select %p179, %s18, 1
      %p181 = scmp.lt.s32.totalorder %s19, 0
      %s182 = scalar_select %p181, %s19, 0
      %s183 = smul.addr %s180, 32
      %s184 = sadd.s32 %s182, %s183
      %s185 = smul.addr %s184, 4
      %s186 = scalar_lea.vmem %s0, %s185
      %p187 = pneg %p49
      %p188 = pneg %p46
      %p189 = scmp.lt.s32.totalorder %s19, 0
      %s190 = scalar_select %p189, %s19, 0
      %s191 = smul.addr %s190, 2
      %s192 = scalar_lea.vmem %s1, %s191
      %p193 = pneg %p75
      %p194 = pneg %p72
      %p195 = scmp.lt.s32.totalorder %s19, 0
      %s196 = scalar_select %p195, %s19, 0
      %s197 = scalar_lea.vmem %s2, %s196
      %p198 = pneg %p101
      %p199 = pneg %p98
      %p200 = pneg %p129
      %p201 = pneg %p126
      %p202 = scmp.lt.s32.totalorder %s18, 1
      %s203 = scalar_select %p202, %s18, 1
      %p204 = scmp.lt.s32.totalorder %s19, 0
      %s205 = scalar_select %p204, %s19, 0
      %s206 = smul.addr %s203, 32
      %s207 = sadd.s32 %s205, %s206
      %s208 = smul.addr %s207, 4
      %s209 = scalar_lea.vmem %s3, %s208
      %p210 = scmp.lt.s32.totalorder %s18, 1
      %s211 = scalar_select %p210, %s18, 1
      %p212 = scmp.lt.s32.totalorder %s19, 0
      %s213 = scalar_select %p212, %s19, 0
      %s214 = smul.addr %s211, 32
      %s215 = sadd.s32 %s213, %s214
      %s216 = smul.addr %s215, 4
      %s217 = scalar_lea.vmem %s0, %s216
      %p218 = scmp.lt.s32.totalorder %s19, 0
      %s219 = scalar_select %p218, %s19, 0
      %s220 = smul.addr %s219, 2
      %s221 = scalar_lea.vmem %s1, %s220
      %p222 = scmp.lt.s32.totalorder %s19, 0
      %s223 = scalar_select %p222, %s19, 0
      %s224 = scalar_lea.vmem %s2, %s223
      %p225 = scmp.lt.s32.totalorder %s18, 1
      %s226 = scalar_select %p225, %s18, 1
      %p227 = scmp.lt.s32.totalorder %s19, 0
      %s228 = scalar_select %p227, %s19, 0
      %s229 = smul.addr %s226, 32
      %s230 = sadd.s32 %s228, %s229
      %s231 = smul.addr %s230, 4
      %s232 = scalar_lea.vmem %s3, %s231
      %233 = vst [vmem:[#allocation2] sm:$0xff] 0.0
      %234 = vst [vmem:[#allocation2 + $0x8] sm:$0xff] 0.0
      %235 = vst [vmem:[#allocation2 + $0x10] sm:$0x3] 0.0
      %236 = vst [vmem:[#allocation2 + $0x18] sm:$0xff] 0.0
      %237 = vst [vmem:[#allocation2 + $0x20] sm:$0xff] 0.0
      %238 = vst [vmem:[#allocation2 + $0x28] sm:$0x3] 0.0
      %239 = vst [vmem:[#allocation2 + $0x30] sm:$0xff] 0.0
      %240 = vst [vmem:[#allocation2 + $0x38] sm:$0xff] 0.0
      %241 = vst [vmem:[#allocation2 + $0x40] sm:$0x3] 0.0
      %242 = vst [vmem:[#allocation2 + $0x48] sm:$0xff] 0.0
      %243 = vst [vmem:[#allocation2 + $0x50] sm:$0xff] 0.0
      %244 = vst [vmem:[#allocation2 + $0x58] sm:$0x3] 0.0
      %245 = vst [vmem:[#allocation2 + $0x60] sm:$0xff] 0.0
      %246 = vst [vmem:[#allocation2 + $0x68] sm:$0xff] 0.0
      %247 = vst [vmem:[#allocation2 + $0x70] sm:$0x3] 0.0
      %248 = vst [vmem:[#allocation2 + $0x78] sm:$0xff] 0.0
      %249 = vst [vmem:[#allocation2 + $0x80] sm:$0xff] 0.0
      %250 = vst [vmem:[#allocation2 + $0x88] sm:$0x3] 0.0
      %251 = vst [vmem:[#allocation2 + $0x90] sm:$0xff] 0.0
      %252 = vst [vmem:[#allocation2 + $0x98] sm:$0xff] 0.0
      %253 = vst [vmem:[#allocation2 + $0xa0] sm:$0x3] 0.0
      %254 = vst [vmem:[#allocation2 + $0xa8] sm:$0xff] 0.0
      %255 = vst [vmem:[#allocation2 + $0xb0] sm:$0xff] 0.0
      %256 = vst [vmem:[#allocation2 + $0xb8] sm:$0x3] 0.0
      %257 = vst [vmem:[#allocation2 + $0xc0] sm:$0xff] 0.0
      %258 = vst [vmem:[#allocation2 + $0xc8] sm:$0xff] 0.0
      %259 = vst [vmem:[#allocation2 + $0xd0] sm:$0x3] 0.0
      %260 = vst [vmem:[#allocation2 + $0xd8] sm:$0xff] 0.0
      %261 = vst [vmem:[#allocation2 + $0xe0] sm:$0xff] 0.0
      %262 = vst [vmem:[#allocation2 + $0xe8] sm:$0x3] 0.0
      %263 = vst [vmem:[#allocation2 + $0xf0] sm:$0xff] 0.0
      %264 = vst [vmem:[#allocation2 + $0xf8] sm:$0xff] 0.0
      %265 = vst [vmem:[#allocation2 + $0x100] sm:$0x3] 0.0
      %266 = vst [vmem:[#allocation2 + $0x108] sm:$0xff] 0.0
      %267 = vst [vmem:[#allocation2 + $0x110] sm:$0xff] 0.0
      %268 = vst [vmem:[#allocation2 + $0x118] sm:$0x3] 0.0
      %269 = vst [vmem:[#allocation2 + $0x120] sm:$0xff] 0.0
      %270 = vst [vmem:[#allocation2 + $0x128] sm:$0xff] 0.0
      %271 = vst [vmem:[#allocation2 + $0x130] sm:$0x3] 0.0
      %272 = vst [vmem:[#allocation2 + $0x138] sm:$0xff] 0.0
      %273 = vst [vmem:[#allocation2 + $0x140] sm:$0xff] 0.0
      %274 = vst [vmem:[#allocation2 + $0x148] sm:$0x3] 0.0
      %275 = vst [vmem:[#allocation2 + $0x150] sm:$0xff] 0.0
      %276 = vst [vmem:[#allocation2 + $0x158] sm:$0xff] 0.0
      %277 = vst [vmem:[#allocation2 + $0x160] sm:$0x3] 0.0
      %278 = vst [vmem:[#allocation2 + $0x168] sm:$0xff] 0.0
      %279 = vst [vmem:[#allocation2 + $0x170] sm:$0xff] 0.0
      %280 = vst [vmem:[#allocation2 + $0x178] sm:$0x3] 0.0
      %281 = vst [vmem:[#allocation2 + $0x180] sm:$0xff] 0.0
      %282 = vst [vmem:[#allocation2 + $0x188] sm:$0xff] 0.0
      %283 = vst [vmem:[#allocation2 + $0x190] sm:$0x3] 0.0
      %284 = vst [vmem:[#allocation2 + $0x198] sm:$0xff] 0.0
      %285 = vst [vmem:[#allocation2 + $0x1a0] sm:$0xff] 0.0
      %286 = vst [vmem:[#allocation2 + $0x1a8] sm:$0x3] 0.0
      %v287 = vld [vmem:[%s217] sm:$0xf]
      %v288 = vld [vmem:[%s217 + $0x4] sm:$0xf]
      %v289 = vld [vmem:[%s217 + $0x8] sm:$0xf]
      %v290 = vld [vmem:[%s217 + $0xc] sm:$0xf]
      %v291 = vld [vmem:[%s217 + $0x10] sm:$0xf]
      %v292 = vld [vmem:[%s217 + $0x14] sm:$0xf]
      %v293 = vld [vmem:[%s217 + $0x18] sm:$0xf]
      %v294 = vld [vmem:[%s217 + $0x1c] sm:$0xf]
      %v295 = vld [vmem:[%s217 + $0x20] sm:$0xf]
      %v296 = vld [vmem:[%s217 + $0x24] sm:$0xf]
      %v297 = vld [vmem:[%s217 + $0x28] sm:$0xf]
      %v298 = vld [vmem:[%s217 + $0x2c] sm:$0xf]
      %v299 = vld [vmem:[%s217 + $0x30] sm:$0xf]
      %v300 = vld [vmem:[%s217 + $0x34] sm:$0xf]
      %v301 = vld [vmem:[%s217 + $0x38] sm:$0xf]
      %v302 = vld [vmem:[%s217 + $0x3c] sm:$0xf]
      %v303 = vld [vmem:[%s217 + $0x40] sm:$0xf]
      %v304 = vld [vmem:[%s217 + $0x44] sm:$0xf]
      %v305 = vld [vmem:[%s217 + $0x48] sm:$0xf]
      %v306 = vld [vmem:[%s217 + $0x4c] sm:$0xf]
      %v307 = vld [vmem:[%s217 + $0x50] sm:$0xf]
      %v308 = vld [vmem:[%s217 + $0x54] sm:$0xf]
      %v309 = vld [vmem:[%s217 + $0x58] sm:$0xf]
      %v310 = vld [vmem:[%s217 + $0x5c] sm:$0xf]
      %v311 = vld [vmem:[%s217 + $0x60] sm:$0xf]
      %v312 = vld [vmem:[%s217 + $0x64] sm:$0xf]
      %v313 = vld [vmem:[%s217 + $0x68] sm:$0xf]
      %v314 = vld [vmem:[%s217 + $0x6c] sm:$0xf]
      %v315 = vld [vmem:[%s217 + $0x70] sm:$0xf]
      %v316 = vld [vmem:[%s217 + $0x74] sm:$0xf]
      %v317 = vld [vmem:[%s217 + $0x78] sm:$0xf]
      %v318 = vld [vmem:[%s217 + $0x7c] sm:$0xf]
      %v319 = vunpack.c.l.bf16 %v287
      %v320 = vunpack.c.l.bf16 %v288
      %v321 = vunpack.c.l.bf16 %v289
      %v322 = vunpack.c.l.bf16 %v290
      %v323 = vunpack.c.l.bf16 %v291
      %v324 = vunpack.c.l.bf16 %v292
      %v325 = vunpack.c.l.bf16 %v293
      %v326 = vunpack.c.l.bf16 %v294
      %v327 = vunpack.c.l.bf16 %v295
      %v328 = vunpack.c.l.bf16 %v296
      %v329 = vunpack.c.l.bf16 %v297
      %v330 = vunpack.c.l.bf16 %v298
      %v331 = vunpack.c.l.bf16 %v299
      %v332 = vunpack.c.l.bf16 %v300
      %v333 = vunpack.c.l.bf16 %v301
      %v334 = vunpack.c.l.bf16 %v302
      %v335 = vunpack.c.l.bf16 %v303
      %v336 = vunpack.c.l.bf16 %v304
      %v337 = vunpack.c.l.bf16 %v305
      %v338 = vunpack.c.l.bf16 %v306
      %v339 = vunpack.c.l.bf16 %v307
      %v340 = vunpack.c.l.bf16 %v308
      %v341 = vunpack.c.l.bf16 %v309
      %v342 = vunpack.c.l.bf16 %v310
      %v343 = vunpack.c.l.bf16 %v311
      %v344 = vunpack.c.l.bf16 %v312
      %v345 = vunpack.c.l.bf16 %v313
      %v346 = vunpack.c.l.bf16 %v314
      %v347 = vunpack.c.l.bf16 %v315
      %v348 = vunpack.c.l.bf16 %v316
      %v349 = vunpack.c.l.bf16 %v317
      %v350 = vunpack.c.l.bf16 %v318
      %s351 = scalar_lea.vmem [#allocation2], 24
      %352 = vst [vmem:[%s351 + $0x1] sm:$0xff] %v319
      %353 = vst [vmem:[%s351 + $0x9] sm:$0xff] %v320
      %354 = vst [vmem:[%s351 + $0x19] sm:$0xff] %v321
      %355 = vst [vmem:[%s351 + $0x21] sm:$0xff] %v322
      %356 = vst [vmem:[%s351 + $0x31] sm:$0xff] %v323
      %357 = vst [vmem:[%s351 + $0x39] sm:$0xff] %v324
      %358 = vst [vmem:[%s351 + $0x49] sm:$0xff] %v325
      %359 = vst [vmem:[%s351 + $0x51] sm:$0xff] %v326
      %360 = vst [vmem:[%s351 + $0x61] sm:$0xff] %v327
      %361 = vst [vmem:[%s351 + $0x69] sm:$0xff] %v328
      %362 = vst [vmem:[%s351 + $0x79] sm:$0xff] %v329
      %363 = vst [vmem:[%s351 + $0x81] sm:$0xff] %v330
      %364 = vst [vmem:[%s351 + $0x91] sm:$0xff] %v331
      %365 = vst [vmem:[%s351 + $0x99] sm:$0xff] %v332
      %366 = vst [vmem:[%s351 + $0xa9] sm:$0xff] %v333
      %367 = vst [vmem:[%s351 + $0xb1] sm:$0xff] %v334
      %368 = vst [vmem:[%s351 + $0xc1] sm:$0xff] %v335
      %369 = vst [vmem:[%s351 + $0xc9] sm:$0xff] %v336
      %370 = vst [vmem:[%s351 + $0xd9] sm:$0xff] %v337
      %371 = vst [vmem:[%s351 + $0xe1] sm:$0xff] %v338
      %372 = vst [vmem:[%s351 + $0xf1] sm:$0xff] %v339
      %373 = vst [vmem:[%s351 + $0xf9] sm:$0xff] %v340
      %374 = vst [vmem:[%s351 + $0x109] sm:$0xff] %v341
      %375 = vst [vmem:[%s351 + $0x111] sm:$0xff] %v342
      %376 = vst [vmem:[%s351 + $0x121] sm:$0xff] %v343
      %377 = vst [vmem:[%s351 + $0x129] sm:$0xff] %v344
      %378 = vst [vmem:[%s351 + $0x139] sm:$0xff] %v345
      %379 = vst [vmem:[%s351 + $0x141] sm:$0xff] %v346
      %380 = vst [vmem:[%s351 + $0x151] sm:$0xff] %v347
      %381 = vst [vmem:[%s351 + $0x159] sm:$0xff] %v348
      %382 = vst [vmem:[%s351 + $0x169] sm:$0xff] %v349
      %383 = vst [vmem:[%s351 + $0x171] sm:$0xff] %v350
      %v384 = vld [vmem:[#allocation2] sm:$0xff]
      %v385 = vld [vmem:[#allocation2 + $0x8] sm:$0xff]
      %v386 = vld [vmem:[#allocation2 + $0x10] sm:$0x3]
      %v387 = vld [vmem:[#allocation2 + $0x18] sm:$0xff]
      %v388 = vld [vmem:[#allocation2 + $0x20] sm:$0xff]
      %v389 = vld [vmem:[#allocation2 + $0x28] sm:$0x3]
      %v390 = vld [vmem:[#allocation2 + $0x30] sm:$0xff]
      %v391 = vld [vmem:[#allocation2 + $0x38] sm:$0xff]
      %v392 = vld [vmem:[#allocation2 + $0x40] sm:$0x3]
      %v393 = vld [vmem:[#allocation2 + $0x48] sm:$0xff]
      %v394 = vld [vmem:[#allocation2 + $0x50] sm:$0xff]
      %v395 = vld [vmem:[#allocation2 + $0x58] sm:$0x3]
      %v396 = vld [vmem:[#allocation2 + $0x60] sm:$0xff]
      %v397 = vld [vmem:[#allocation2 + $0x68] sm:$0xff]
      %v398 = vld [vmem:[#allocation2 + $0x70] sm:$0x3]
      %v399 = vld [vmem:[#allocation2 + $0x78] sm:$0xff]
      %v400 = vld [vmem:[#allocation2 + $0x80] sm:$0xff]
      %v401 = vld [vmem:[#allocation2 + $0x88] sm:$0x3]
      %v402 = vld [vmem:[#allocation2 + $0x90] sm:$0xff]
      %v403 = vld [vmem:[#allocation2 + $0x98] sm:$0xff]
      %v404 = vld [vmem:[#allocation2 + $0xa0] sm:$0x3]
      %v405 = vld [vmem:[#allocation2 + $0xa8] sm:$0xff]
      %v406 = vld [vmem:[#allocation2 + $0xb0] sm:$0xff]
      %v407 = vld [vmem:[#allocation2 + $0xb8] sm:$0x3]
      %v408 = vld [vmem:[#allocation2 + $0xc0] sm:$0xff]
      %v409 = vld [vmem:[#allocation2 + $0xc8] sm:$0xff]
      %v410 = vld [vmem:[#allocation2 + $0xd0] sm:$0x3]
      %v411 = vld [vmem:[#allocation2 + $0xd8] sm:$0xff]
      %v412 = vld [vmem:[#allocation2 + $0xe0] sm:$0xff]
      %v413 = vld [vmem:[#allocation2 + $0xe8] sm:$0x3]
      %v414 = vld [vmem:[#allocation2 + $0xf0] sm:$0xff]
      %v415 = vld [vmem:[#allocation2 + $0xf8] sm:$0xff]
      %v416 = vld [vmem:[#allocation2 + $0x100] sm:$0x3]
      %v417 = vld [vmem:[#allocation2 + $0x108] sm:$0xff]
      %v418 = vld [vmem:[#allocation2 + $0x110] sm:$0xff]
      %v419 = vld [vmem:[#allocation2 + $0x118] sm:$0x3]
      %v420 = vld [vmem:[#allocation2 + $0x120] sm:$0xff]
      %v421 = vld [vmem:[#allocation2 + $0x128] sm:$0xff]
      %v422 = vld [vmem:[#allocation2 + $0x130] sm:$0x3]
      %v423 = vld [vmem:[#allocation2 + $0x138] sm:$0xff]
      %v424 = vld [vmem:[#allocation2 + $0x140] sm:$0xff]
      %v425 = vld [vmem:[#allocation2 + $0x148] sm:$0x3]
      %v426 = vld [vmem:[#allocation2 + $0x150] sm:$0xff]
      %v427 = vld [vmem:[#allocation2 + $0x158] sm:$0xff]
      %v428 = vld [vmem:[#allocation2 + $0x160] sm:$0x3]
      %v429 = vld [vmem:[#allocation2 + $0x168] sm:$0xff]
      %v430 = vld [vmem:[#allocation2 + $0x170] sm:$0xff]
      %v431 = vld [vmem:[#allocation2 + $0x178] sm:$0x3]
      %v432 = vld [vmem:[#allocation2 + $0x180] sm:$0xff]
      %v433 = vld [vmem:[#allocation2 + $0x188] sm:$0xff]
      %v434 = vld [vmem:[#allocation2 + $0x190] sm:$0x3]
      %v435 = vld [vmem:[#allocation2 + $0x198] sm:$0xff]
      %v436 = vld [vmem:[#allocation2 + $0x1a0] sm:$0xff]
      %v437 = vld [vmem:[#allocation2 + $0x1a8] sm:$0x3]
      %v438 = vld [vmem:[%s221] sm:$0x3]
      %v439 = vld [vmem:[%s221 + $0x2] sm:$0x3]
      %v440 = vld [vmem:[%s221 + $0x4] sm:$0x3]
      %v441 = vunpack.c.l.bf16 %v438
      %v442 = vunpack.c.l.bf16 %v439
      %v443 = vunpack.c.l.bf16 %v440
      %v444 = vlaneseq
      %v445 = vshrl.u32 %v444, 7
      %v446 = vsub.s32 0, %v445
      %v447 = vrot.slane %v441, %v446
      %v448 = vmul.f32 %v384, %v447
      %v449 = vmul.f32 %v385, %v447
      %v450 = vmul.f32 %v387, %v447
      %v451 = vmul.f32 %v388, %v447
      %v452 = vmul.f32 %v390, %v447
      %v453 = vmul.f32 %v391, %v447
      %v454 = vmul.f32 %v393, %v447
      %v455 = vmul.f32 %v394, %v447
      %v456 = vmul.f32 %v396, %v447
      %v457 = vmul.f32 %v397, %v447
      %v458 = vmul.f32 %v399, %v447
      %v459 = vmul.f32 %v400, %v447
      %v460 = vmul.f32 %v402, %v447
      %v461 = vmul.f32 %v403, %v447
      %v462 = vmul.f32 %v405, %v447
      %v463 = vmul.f32 %v406, %v447
      %v464 = vmul.f32 %v408, %v447
      %v465 = vmul.f32 %v409, %v447
      %v466 = vmul.f32 %v411, %v447
      %v467 = vmul.f32 %v412, %v447
      %v468 = vmul.f32 %v414, %v447
      %v469 = vmul.f32 %v415, %v447
      %v470 = vmul.f32 %v417, %v447
      %v471 = vmul.f32 %v418, %v447
      %v472 = vmul.f32 %v420, %v447
      %v473 = vmul.f32 %v421, %v447
      %v474 = vmul.f32 %v423, %v447
      %v475 = vmul.f32 %v424, %v447
      %v476 = vmul.f32 %v426, %v447
      %v477 = vmul.f32 %v427, %v447
      %v478 = vmul.f32 %v429, %v447
      %v479 = vmul.f32 %v430, %v447
      %v480 = vadd.f32 %v448, 0.0
      %v481 = vadd.f32 %v449, 0.0
      %v482 = vadd.f32 %v450, 0.0
      %v483 = vadd.f32 %v451, 0.0
      %v484 = vadd.f32 %v452, 0.0
      %v485 = vadd.f32 %v453, 0.0
      %v486 = vadd.f32 %v454, 0.0
      %v487 = vadd.f32 %v455, 0.0
      %v488 = vadd.f32 %v456, 0.0
      %v489 = vadd.f32 %v457, 0.0
      %v490 = vadd.f32 %v458, 0.0
      %v491 = vadd.f32 %v459, 0.0
      %v492 = vadd.f32 %v460, 0.0
      %v493 = vadd.f32 %v461, 0.0
      %v494 = vadd.f32 %v462, 0.0
      %v495 = vadd.f32 %v463, 0.0
      %v496 = vadd.f32 %v464, 0.0
      %v497 = vadd.f32 %v465, 0.0
      %v498 = vadd.f32 %v466, 0.0
      %v499 = vadd.f32 %v467, 0.0
      %v500 = vadd.f32 %v468, 0.0
      %v501 = vadd.f32 %v469, 0.0
      %v502 = vadd.f32 %v470, 0.0
      %v503 = vadd.f32 %v471, 0.0
      %v504 = vadd.f32 %v472, 0.0
      %v505 = vadd.f32 %v473, 0.0
      %v506 = vadd.f32 %v474, 0.0
      %v507 = vadd.f32 %v475, 0.0
      %v508 = vadd.f32 %v476, 0.0
      %v509 = vadd.f32 %v477, 0.0
      %v510 = vadd.f32 %v478, 0.0
      %v511 = vadd.f32 %v479, 0.0
      %v512 = vlaneseq
      %v513 = vshrl.u32 %v512, 7
      %v514 = vsub.s32 1, %v513
      %v515 = vrot.slane %v441, %v514
      %v516 = vmul.f32 %v384, %v515
      %v517 = vmul.f32 %v385, %v515
      %v518 = vmul.f32 %v386, %v515
      %v519 = vmul.f32 %v387, %v515
      %v520 = vmul.f32 %v388, %v515
      %v521 = vmul.f32 %v389, %v515
      %v522 = vmul.f32 %v390, %v515
      %v523 = vmul.f32 %v391, %v515
      %v524 = vmul.f32 %v392, %v515
      %v525 = vmul.f32 %v393, %v515
      %v526 = vmul.f32 %v394, %v515
      %v527 = vmul.f32 %v395, %v515
      %v528 = vmul.f32 %v396, %v515
      %v529 = vmul.f32 %v397, %v515
      %v530 = vmul.f32 %v398, %v515
      %v531 = vmul.f32 %v399, %v515
      %v532 = vmul.f32 %v400, %v515
      %v533 = vmul.f32 %v401, %v515
      %v534 = vmul.f32 %v402, %v515
      %v535 = vmul.f32 %v403, %v515
      %v536 = vmul.f32 %v404, %v515
      %v537 = vmul.f32 %v405, %v515
      %v538 = vmul.f32 %v406, %v515
      %v539 = vmul.f32 %v407, %v515
      %v540 = vmul.f32 %v408, %v515
      %v541 = vmul.f32 %v409, %v515
      %v542 = vmul.f32 %v410, %v515
      %v543 = vmul.f32 %v411, %v515
      %v544 = vmul.f32 %v412, %v515
      %v545 = vmul.f32 %v413, %v515
      %v546 = vmul.f32 %v414, %v515
      %v547 = vmul.f32 %v415, %v515
      %v548 = vmul.f32 %v416, %v515
      %v549 = vmul.f32 %v417, %v515
      %v550 = vmul.f32 %v418, %v515
      %v551 = vmul.f32 %v419, %v515
      %v552 = vmul.f32 %v420, %v515
      %v553 = vmul.f32 %v421, %v515
      %v554 = vmul.f32 %v422, %v515
      %v555 = vmul.f32 %v423, %v515
      %v556 = vmul.f32 %v424, %v515
      %v557 = vmul.f32 %v425, %v515
      %v558 = vmul.f32 %v426, %v515
      %v559 = vmul.f32 %v427, %v515
      %v560 = vmul.f32 %v428, %v515
      %v561 = vmul.f32 %v429, %v515
      %v562 = vmul.f32 %v430, %v515
      %v563 = vmul.f32 %v431, %v515
      %vm612 = vcmask 1046528
      %v613 = vrot.slane %v516, 1
      %v614 = vrot.slane %v517, 1
      %v615 = vsel %vm612, %v613, %v614
      %v616 = vrot.slane %v518, 1
      %v617 = vsel %vm612, %v614, %v616
      %v618 = vrot.slane %v519, 1
      %v619 = vrot.slane %v520, 1
      %v620 = vsel %vm612, %v618, %v619
      %v621 = vrot.slane %v521, 1
      %v622 = vsel %vm612, %v619, %v621
      %v623 = vrot.slane %v522, 1
      %v624 = vrot.slane %v523, 1
      %v625 = vsel %vm612, %v623, %v624
      %v626 = vrot.slane %v524, 1
      %v627 = vsel %vm612, %v624, %v626
      %v628 = vrot.slane %v525, 1
      %v629 = vrot.slane %v526, 1
      %v630 = vsel %vm612, %v628, %v629
      %v631 = vrot.slane %v527, 1
      %v632 = vsel %vm612, %v629, %v631
      %v633 = vrot.slane %v528, 1
      %v634 = vrot.slane %v529, 1
      %v635 = vsel %vm612, %v633, %v634
      %v636 = vrot.slane %v530, 1
      %v637 = vsel %vm612, %v634, %v636
      %v638 = vrot.slane %v531, 1
      %v639 = vrot.slane %v532, 1
      %v640 = vsel %vm612, %v638, %v639
      %v641 = vrot.slane %v533, 1
      %v642 = vsel %vm612, %v639, %v641
      %v643 = vrot.slane %v534, 1
      %v644 = vrot.slane %v535, 1
      %v645 = vsel %vm612, %v643, %v644
      %v646 = vrot.slane %v536, 1
      %v647 = vsel %vm612, %v644, %v646
      %v648 = vrot.slane %v537, 1
      %v649 = vrot.slane %v538, 1
      %v650 = vsel %vm612, %v648, %v649
      %v651 = vrot.slane %v539, 1
      %v652 = vsel %vm612, %v649, %v651
      %v653 = vrot.slane %v540, 1
      %v654 = vrot.slane %v541, 1
      %v655 = vsel %vm612, %v653, %v654
      %v656 = vrot.slane %v542, 1
      %v657 = vsel %vm612, %v654, %v656
      %v658 = vrot.slane %v543, 1
      %v659 = vrot.slane %v544, 1
      %v660 = vsel %vm612, %v658, %v659
      %v661 = vrot.slane %v545, 1
      %v662 = vsel %vm612, %v659, %v661
      %v663 = vrot.slane %v546, 1
      %v664 = vrot.slane %v547, 1
      %v665 = vsel %vm612, %v663, %v664
      %v666 = vrot.slane %v548, 1
      %v667 = vsel %vm612, %v664, %v666
      %v668 = vrot.slane %v549, 1
      %v669 = vrot.slane %v550, 1
      %v670 = vsel %vm612, %v668, %v669
      %v671 = vrot.slane %v551, 1
      %v672 = vsel %vm612, %v669, %v671
      %v673 = vrot.slane %v552, 1
      %v674 = vrot.slane %v553, 1
      %v675 = vsel %vm612, %v673, %v674
      %v676 = vrot.slane %v554, 1
      %v677 = vsel %vm612, %v674, %v676
      %v678 = vrot.slane %v555, 1
      %v679 = vrot.slane %v556, 1
      %v680 = vsel %vm612, %v678, %v679
      %v681 = vrot.slane %v557, 1
      %v682 = vsel %vm612, %v679, %v681
      %v683 = vrot.slane %v558, 1
      %v684 = vrot.slane %v559, 1
      %v685 = vsel %vm612, %v683, %v684
      %v686 = vrot.slane %v560, 1
      %v687 = vsel %vm612, %v684, %v686
      %v688 = vrot.slane %v561, 1
      %v689 = vrot.slane %v562, 1
      %v690 = vsel %vm612, %v688, %v689
      %v691 = vrot.slane %v563, 1
      %v692 = vsel %vm612, %v689, %v691
      %v725 = vadd.f32 %v480, %v615
      %v726 = vadd.f32 %v481, %v617
      %v727 = vadd.f32 %v482, %v620
      %v728 = vadd.f32 %v483, %v622
      %v729 = vadd.f32 %v484, %v625
      %v730 = vadd.f32 %v485, %v627
      %v731 = vadd.f32 %v486, %v630
      %v732 = vadd.f32 %v487, %v632
      %v733 = vadd.f32 %v488, %v635
      %v734 = vadd.f32 %v489, %v637
      %v735 = vadd.f32 %v490, %v640
      %v736 = vadd.f32 %v491, %v642
      %v737 = vadd.f32 %v492, %v645
      %v738 = vadd.f32 %v493, %v647
      %v739 = vadd.f32 %v494, %v650
      %v740 = vadd.f32 %v495, %v652
      %v741 = vadd.f32 %v496, %v655
      %v742 = vadd.f32 %v497, %v657
      %v743 = vadd.f32 %v498, %v660
      %v744 = vadd.f32 %v499, %v662
      %v745 = vadd.f32 %v500, %v665
      %v746 = vadd.f32 %v501, %v667
      %v747 = vadd.f32 %v502, %v670
      %v748 = vadd.f32 %v503, %v672
      %v749 = vadd.f32 %v504, %v675
      %v750 = vadd.f32 %v505, %v677
      %v751 = vadd.f32 %v506, %v680
      %v752 = vadd.f32 %v507, %v682
      %v753 = vadd.f32 %v508, %v685
      %v754 = vadd.f32 %v509, %v687
      %v755 = vadd.f32 %v510, %v690
      %v756 = vadd.f32 %v511, %v692
      %v757 = vlaneseq
      %v758 = vshrl.u32 %v757, 7
      %v759 = vsub.s32 2, %v758
      %v760 = vrot.slane %v441, %v759
      %v761 = vmul.f32 %v384, %v760
      %v762 = vmul.f32 %v385, %v760
      %v763 = vmul.f32 %v386, %v760
      %v764 = vmul.f32 %v387, %v760
      %v765 = vmul.f32 %v388, %v760
      %v766 = vmul.f32 %v389, %v760
      %v767 = vmul.f32 %v390, %v760
      %v768 = vmul.f32 %v391, %v760
      %v769 = vmul.f32 %v392, %v760
      %v770 = vmul.f32 %v393, %v760
      %v771 = vmul.f32 %v394, %v760
      %v772 = vmul.f32 %v395, %v760
      %v773 = vmul.f32 %v396, %v760
      %v774 = vmul.f32 %v397, %v760
      %v775 = vmul.f32 %v398, %v760
      %v776 = vmul.f32 %v399, %v760
      %v777 = vmul.f32 %v400, %v760
      %v778 = vmul.f32 %v401, %v760
      %v779 = vmul.f32 %v402, %v760
      %v780 = vmul.f32 %v403, %v760
      %v781 = vmul.f32 %v404, %v760
      %v782 = vmul.f32 %v405, %v760
      %v783 = vmul.f32 %v406, %v760
      %v784 = vmul.f32 %v407, %v760
      %v785 = vmul.f32 %v408, %v760
      %v786 = vmul.f32 %v409, %v760
      %v787 = vmul.f32 %v410, %v760
      %v788 = vmul.f32 %v411, %v760
      %v789 = vmul.f32 %v412, %v760
      %v790 = vmul.f32 %v413, %v760
      %v791 = vmul.f32 %v414, %v760
      %v792 = vmul.f32 %v415, %v760
      %v793 = vmul.f32 %v416, %v760
      %v794 = vmul.f32 %v417, %v760
      %v795 = vmul.f32 %v418, %v760
      %v796 = vmul.f32 %v419, %v760
      %v797 = vmul.f32 %v420, %v760
      %v798 = vmul.f32 %v421, %v760
      %v799 = vmul.f32 %v422, %v760
      %v800 = vmul.f32 %v423, %v760
      %v801 = vmul.f32 %v424, %v760
      %v802 = vmul.f32 %v425, %v760
      %v803 = vmul.f32 %v426, %v760
      %v804 = vmul.f32 %v427, %v760
      %v805 = vmul.f32 %v428, %v760
      %v806 = vmul.f32 %v429, %v760
      %v807 = vmul.f32 %v430, %v760
      %v808 = vmul.f32 %v431, %v760
      %vm857 = vcmask 1045504
      %v858 = vrot.slane %v761, 2
      %v859 = vrot.slane %v762, 2
      %v860 = vsel %vm857, %v858, %v859
      %v861 = vrot.slane %v763, 2
      %v862 = vsel %vm857, %v859, %v861
      %v863 = vrot.slane %v764, 2
      %v864 = vrot.slane %v765, 2
      %v865 = vsel %vm857, %v863, %v864
      %v866 = vrot.slane %v766, 2
      %v867 = vsel %vm857, %v864, %v866
      %v868 = vrot.slane %v767, 2
      %v869 = vrot.slane %v768, 2
      %v870 = vsel %vm857, %v868, %v869
      %v871 = vrot.slane %v769, 2
      %v872 = vsel %vm857, %v869, %v871
      %v873 = vrot.slane %v770, 2
      %v874 = vrot.slane %v771, 2
      %v875 = vsel %vm857, %v873, %v874
      %v876 = vrot.slane %v772, 2
      %v877 = vsel %vm857, %v874, %v876
      %v878 = vrot.slane %v773, 2
      %v879 = vrot.slane %v774, 2
      %v880 = vsel %vm857, %v878, %v879
      %v881 = vrot.slane %v775, 2
      %v882 = vsel %vm857, %v879, %v881
      %v883 = vrot.slane %v776, 2
      %v884 = vrot.slane %v777, 2
      %v885 = vsel %vm857, %v883, %v884
      %v886 = vrot.slane %v778, 2
      %v887 = vsel %vm857, %v884, %v886
      %v888 = vrot.slane %v779, 2
      %v889 = vrot.slane %v780, 2
      %v890 = vsel %vm857, %v888, %v889
      %v891 = vrot.slane %v781, 2
      %v892 = vsel %vm857, %v889, %v891
      %v893 = vrot.slane %v782, 2
      %v894 = vrot.slane %v783, 2
      %v895 = vsel %vm857, %v893, %v894
      %v896 = vrot.slane %v784, 2
      %v897 = vsel %vm857, %v894, %v896
      %v898 = vrot.slane %v785, 2
      %v899 = vrot.slane %v786, 2
      %v900 = vsel %vm857, %v898, %v899
      %v901 = vrot.slane %v787, 2
      %v902 = vsel %vm857, %v899, %v901
      %v903 = vrot.slane %v788, 2
      %v904 = vrot.slane %v789, 2
      %v905 = vsel %vm857, %v903, %v904
      %v906 = vrot.slane %v790, 2
      %v907 = vsel %vm857, %v904, %v906
      %v908 = vrot.slane %v791, 2
      %v909 = vrot.slane %v792, 2
      %v910 = vsel %vm857, %v908, %v909
      %v911 = vrot.slane %v793, 2
      %v912 = vsel %vm857, %v909, %v911
      %v913 = vrot.slane %v794, 2
      %v914 = vrot.slane %v795, 2
      %v915 = vsel %vm857, %v913, %v914
      %v916 = vrot.slane %v796, 2
      %v917 = vsel %vm857, %v914, %v916
      %v918 = vrot.slane %v797, 2
      %v919 = vrot.slane %v798, 2
      %v920 = vsel %vm857, %v918, %v919
      %v921 = vrot.slane %v799, 2
      %v922 = vsel %vm857, %v919, %v921
      %v923 = vrot.slane %v800, 2
      %v924 = vrot.slane %v801, 2
      %v925 = vsel %vm857, %v923, %v924
      %v926 = vrot.slane %v802, 2
      %v927 = vsel %vm857, %v924, %v926
      %v928 = vrot.slane %v803, 2
      %v929 = vrot.slane %v804, 2
      %v930 = vsel %vm857, %v928, %v929
      %v931 = vrot.slane %v805, 2
      %v932 = vsel %vm857, %v929, %v931
      %v933 = vrot.slane %v806, 2
      %v934 = vrot.slane %v807, 2
      %v935 = vsel %vm857, %v933, %v934
      %v936 = vrot.slane %v808, 2
      %v937 = vsel %vm857, %v934, %v936
      %v970 = vadd.f32 %v725, %v860
      %v971 = vadd.f32 %v726, %v862
      %v972 = vadd.f32 %v727, %v865
      %v973 = vadd.f32 %v728, %v867
      %v974 = vadd.f32 %v729, %v870
      %v975 = vadd.f32 %v730, %v872
      %v976 = vadd.f32 %v731, %v875
      %v977 = vadd.f32 %v732, %v877
      %v978 = vadd.f32 %v733, %v880
      %v979 = vadd.f32 %v734, %v882
      %v980 = vadd.f32 %v735, %v885
      %v981 = vadd.f32 %v736, %v887
      %v982 = vadd.f32 %v737, %v890
      %v983 = vadd.f32 %v738, %v892
      %v984 = vadd.f32 %v739, %v895
      %v985 = vadd.f32 %v740, %v897
      %v986 = vadd.f32 %v741, %v900
      %v987 = vadd.f32 %v742, %v902
      %v988 = vadd.f32 %v743, %v905
      %v989 = vadd.f32 %v744, %v907
      %v990 = vadd.f32 %v745, %v910
      %v991 = vadd.f32 %v746, %v912
      %v992 = vadd.f32 %v747, %v915
      %v993 = vadd.f32 %v748, %v917
      %v994 = vadd.f32 %v749, %v920
      %v995 = vadd.f32 %v750, %v922
      %v996 = vadd.f32 %v751, %v925
      %v997 = vadd.f32 %v752, %v927
      %v998 = vadd.f32 %v753, %v930
      %v999 = vadd.f32 %v754, %v932
      %v1000 = vadd.f32 %v755, %v935
      %v1001 = vadd.f32 %v756, %v937
      %v1002 = vlaneseq
      %v1003 = vshrl.u32 %v1002, 7
      %v1004 = vsub.s32 0, %v1003
      %v1005 = vrot.slane %v442, %v1004
      %v1006 = vmul.f32 %v387, %v1005
      %v1007 = vmul.f32 %v388, %v1005
      %v1008 = vmul.f32 %v390, %v1005
      %v1009 = vmul.f32 %v391, %v1005
      %v1010 = vmul.f32 %v393, %v1005
      %v1011 = vmul.f32 %v394, %v1005
      %v1012 = vmul.f32 %v396, %v1005
      %v1013 = vmul.f32 %v397, %v1005
      %v1014 = vmul.f32 %v399, %v1005
      %v1015 = vmul.f32 %v400, %v1005
      %v1016 = vmul.f32 %v402, %v1005
      %v1017 = vmul.f32 %v403, %v1005
      %v1018 = vmul.f32 %v405, %v1005
      %v1019 = vmul.f32 %v406, %v1005
      %v1020 = vmul.f32 %v408, %v1005
      %v1021 = vmul.f32 %v409, %v1005
      %v1022 = vmul.f32 %v411, %v1005
      %v1023 = vmul.f32 %v412, %v1005
      %v1024 = vmul.f32 %v414, %v1005
      %v1025 = vmul.f32 %v415, %v1005
      %v1026 = vmul.f32 %v417, %v1005
      %v1027 = vmul.f32 %v418, %v1005
      %v1028 = vmul.f32 %v420, %v1005
      %v1029 = vmul.f32 %v421, %v1005
      %v1030 = vmul.f32 %v423, %v1005
      %v1031 = vmul.f32 %v424, %v1005
      %v1032 = vmul.f32 %v426, %v1005
      %v1033 = vmul.f32 %v427, %v1005
      %v1034 = vmul.f32 %v429, %v1005
      %v1035 = vmul.f32 %v430, %v1005
      %v1036 = vmul.f32 %v432, %v1005
      %v1037 = vmul.f32 %v433, %v1005
      %v1038 = vadd.f32 %v970, %v1006
      %v1039 = vadd.f32 %v971, %v1007
      %v1040 = vadd.f32 %v972, %v1008
      %v1041 = vadd.f32 %v973, %v1009
      %v1042 = vadd.f32 %v974, %v1010
      %v1043 = vadd.f32 %v975, %v1011
      %v1044 = vadd.f32 %v976, %v1012
      %v1045 = vadd.f32 %v977, %v1013
      %v1046 = vadd.f32 %v978, %v1014
      %v1047 = vadd.f32 %v979, %v1015
      %v1048 = vadd.f32 %v980, %v1016
      %v1049 = vadd.f32 %v981, %v1017
      %v1050 = vadd.f32 %v982, %v1018
      %v1051 = vadd.f32 %v983, %v1019
      %v1052 = vadd.f32 %v984, %v1020
      %v1053 = vadd.f32 %v985, %v1021
      %v1054 = vadd.f32 %v986, %v1022
      %v1055 = vadd.f32 %v987, %v1023
      %v1056 = vadd.f32 %v988, %v1024
      %v1057 = vadd.f32 %v989, %v1025
      %v1058 = vadd.f32 %v990, %v1026
      %v1059 = vadd.f32 %v991, %v1027
      %v1060 = vadd.f32 %v992, %v1028
      %v1061 = vadd.f32 %v993, %v1029
      %v1062 = vadd.f32 %v994, %v1030
      %v1063 = vadd.f32 %v995, %v1031
      %v1064 = vadd.f32 %v996, %v1032
      %v1065 = vadd.f32 %v997, %v1033
      %v1066 = vadd.f32 %v998, %v1034
      %v1067 = vadd.f32 %v999, %v1035
      %v1068 = vadd.f32 %v1000, %v1036
      %v1069 = vadd.f32 %v1001, %v1037
      %v1070 = vlaneseq
      %v1071 = vshrl.u32 %v1070, 7
      %v1072 = vsub.s32 1, %v1071
      %v1073 = vrot.slane %v442, %v1072
      %v1074 = vmul.f32 %v387, %v1073
      %v1075 = vmul.f32 %v388, %v1073
      %v1076 = vmul.f32 %v389, %v1073
      %v1077 = vmul.f32 %v390, %v1073
      %v1078 = vmul.f32 %v391, %v1073
      %v1079 = vmul.f32 %v392, %v1073
      %v1080 = vmul.f32 %v393, %v1073
      %v1081 = vmul.f32 %v394, %v1073
      %v1082 = vmul.f32 %v395, %v1073
      %v1083 = vmul.f32 %v396, %v1073
      %v1084 = vmul.f32 %v397, %v1073
      %v1085 = vmul.f32 %v398, %v1073
      %v1086 = vmul.f32 %v399, %v1073
      %v1087 = vmul.f32 %v400, %v1073
      %v1088 = vmul.f32 %v401, %v1073
      %v1089 = vmul.f32 %v402, %v1073
      %v1090 = vmul.f32 %v403, %v1073
      %v1091 = vmul.f32 %v404, %v1073
      %v1092 = vmul.f32 %v405, %v1073
      %v1093 = vmul.f32 %v406, %v1073
      %v1094 = vmul.f32 %v407, %v1073
      %v1095 = vmul.f32 %v408, %v1073
      %v1096 = vmul.f32 %v409, %v1073
      %v1097 = vmul.f32 %v410, %v1073
      %v1098 = vmul.f32 %v411, %v1073
      %v1099 = vmul.f32 %v412, %v1073
      %v1100 = vmul.f32 %v413, %v1073
      %v1101 = vmul.f32 %v414, %v1073
      %v1102 = vmul.f32 %v415, %v1073
      %v1103 = vmul.f32 %v416, %v1073
      %v1104 = vmul.f32 %v417, %v1073
      %v1105 = vmul.f32 %v418, %v1073
      %v1106 = vmul.f32 %v419, %v1073
      %v1107 = vmul.f32 %v420, %v1073
      %v1108 = vmul.f32 %v421, %v1073
      %v1109 = vmul.f32 %v422, %v1073
      %v1110 = vmul.f32 %v423, %v1073
      %v1111 = vmul.f32 %v424, %v1073
      %v1112 = vmul.f32 %v425, %v1073
      %v1113 = vmul.f32 %v426, %v1073
      %v1114 = vmul.f32 %v427, %v1073
      %v1115 = vmul.f32 %v428, %v1073
      %v1116 = vmul.f32 %v429, %v1073
      %v1117 = vmul.f32 %v430, %v1073
      %v1118 = vmul.f32 %v431, %v1073
      %v1119 = vmul.f32 %v432, %v1073
      %v1120 = vmul.f32 %v433, %v1073
      %v1121 = vmul.f32 %v434, %v1073
      %v1170 = vrot.slane %v1074, 1
      %v1171 = vrot.slane %v1075, 1
      %v1172 = vsel %vm612, %v1170, %v1171
      %v1173 = vrot.slane %v1076, 1
      %v1174 = vsel %vm612, %v1171, %v1173
      %v1175 = vrot.slane %v1077, 1
      %v1176 = vrot.slane %v1078, 1
      %v1177 = vsel %vm612, %v1175, %v1176
      %v1178 = vrot.slane %v1079, 1
      %v1179 = vsel %vm612, %v1176, %v1178
      %v1180 = vrot.slane %v1080, 1
      %v1181 = vrot.slane %v1081, 1
      %v1182 = vsel %vm612, %v1180, %v1181
      %v1183 = vrot.slane %v1082, 1
      %v1184 = vsel %vm612, %v1181, %v1183
      %v1185 = vrot.slane %v1083, 1
      %v1186 = vrot.slane %v1084, 1
      %v1187 = vsel %vm612, %v1185, %v1186
      %v1188 = vrot.slane %v1085, 1
      %v1189 = vsel %vm612, %v1186, %v1188
      %v1190 = vrot.slane %v1086, 1
      %v1191 = vrot.slane %v1087, 1
      %v1192 = vsel %vm612, %v1190, %v1191
      %v1193 = vrot.slane %v1088, 1
      %v1194 = vsel %vm612, %v1191, %v1193
      %v1195 = vrot.slane %v1089, 1
      %v1196 = vrot.slane %v1090, 1
      %v1197 = vsel %vm612, %v1195, %v1196
      %v1198 = vrot.slane %v1091, 1
      %v1199 = vsel %vm612, %v1196, %v1198
      %v1200 = vrot.slane %v1092, 1
      %v1201 = vrot.slane %v1093, 1
      %v1202 = vsel %vm612, %v1200, %v1201
      %v1203 = vrot.slane %v1094, 1
      %v1204 = vsel %vm612, %v1201, %v1203
      %v1205 = vrot.slane %v1095, 1
      %v1206 = vrot.slane %v1096, 1
      %v1207 = vsel %vm612, %v1205, %v1206
      %v1208 = vrot.slane %v1097, 1
      %v1209 = vsel %vm612, %v1206, %v1208
      %v1210 = vrot.slane %v1098, 1
      %v1211 = vrot.slane %v1099, 1
      %v1212 = vsel %vm612, %v1210, %v1211
      %v1213 = vrot.slane %v1100, 1
      %v1214 = vsel %vm612, %v1211, %v1213
      %v1215 = vrot.slane %v1101, 1
      %v1216 = vrot.slane %v1102, 1
      %v1217 = vsel %vm612, %v1215, %v1216
      %v1218 = vrot.slane %v1103, 1
      %v1219 = vsel %vm612, %v1216, %v1218
      %v1220 = vrot.slane %v1104, 1
      %v1221 = vrot.slane %v1105, 1
      %v1222 = vsel %vm612, %v1220, %v1221
      %v1223 = vrot.slane %v1106, 1
      %v1224 = vsel %vm612, %v1221, %v1223
      %v1225 = vrot.slane %v1107, 1
      %v1226 = vrot.slane %v1108, 1
      %v1227 = vsel %vm612, %v1225, %v1226
      %v1228 = vrot.slane %v1109, 1
      %v1229 = vsel %vm612, %v1226, %v1228
      %v1230 = vrot.slane %v1110, 1
      %v1231 = vrot.slane %v1111, 1
      %v1232 = vsel %vm612, %v1230, %v1231
      %v1233 = vrot.slane %v1112, 1
      %v1234 = vsel %vm612, %v1231, %v1233
      %v1235 = vrot.slane %v1113, 1
      %v1236 = vrot.slane %v1114, 1
      %v1237 = vsel %vm612, %v1235, %v1236
      %v1238 = vrot.slane %v1115, 1
      %v1239 = vsel %vm612, %v1236, %v1238
      %v1240 = vrot.slane %v1116, 1
      %v1241 = vrot.slane %v1117, 1
      %v1242 = vsel %vm612, %v1240, %v1241
      %v1243 = vrot.slane %v1118, 1
      %v1244 = vsel %vm612, %v1241, %v1243
      %v1245 = vrot.slane %v1119, 1
      %v1246 = vrot.slane %v1120, 1
      %v1247 = vsel %vm612, %v1245, %v1246
      %v1248 = vrot.slane %v1121, 1
      %v1249 = vsel %vm612, %v1246, %v1248
      %v1282 = vadd.f32 %v1038, %v1172
      %v1283 = vadd.f32 %v1039, %v1174
      %v1284 = vadd.f32 %v1040, %v1177
      %v1285 = vadd.f32 %v1041, %v1179
      %v1286 = vadd.f32 %v1042, %v1182
      %v1287 = vadd.f32 %v1043, %v1184
      %v1288 = vadd.f32 %v1044, %v1187
      %v1289 = vadd.f32 %v1045, %v1189
      %v1290 = vadd.f32 %v1046, %v1192
      %v1291 = vadd.f32 %v1047, %v1194
      %v1292 = vadd.f32 %v1048, %v1197
      %v1293 = vadd.f32 %v1049, %v1199
      %v1294 = vadd.f32 %v1050, %v1202
      %v1295 = vadd.f32 %v1051, %v1204
      %v1296 = vadd.f32 %v1052, %v1207
      %v1297 = vadd.f32 %v1053, %v1209
      %v1298 = vadd.f32 %v1054, %v1212
      %v1299 = vadd.f32 %v1055, %v1214
      %v1300 = vadd.f32 %v1056, %v1217
      %v1301 = vadd.f32 %v1057, %v1219
      %v1302 = vadd.f32 %v1058, %v1222
      %v1303 = vadd.f32 %v1059, %v1224
      %v1304 = vadd.f32 %v1060, %v1227
      %v1305 = vadd.f32 %v1061, %v1229
      %v1306 = vadd.f32 %v1062, %v1232
      %v1307 = vadd.f32 %v1063, %v1234
      %v1308 = vadd.f32 %v1064, %v1237
      %v1309 = vadd.f32 %v1065, %v1239
      %v1310 = vadd.f32 %v1066, %v1242
      %v1311 = vadd.f32 %v1067, %v1244
      %v1312 = vadd.f32 %v1068, %v1247
      %v1313 = vadd.f32 %v1069, %v1249
      %v1314 = vlaneseq
      %v1315 = vshrl.u32 %v1314, 7
      %v1316 = vsub.s32 2, %v1315
      %v1317 = vrot.slane %v442, %v1316
      %v1318 = vmul.f32 %v387, %v1317
      %v1319 = vmul.f32 %v388, %v1317
      %v1320 = vmul.f32 %v389, %v1317
      %v1321 = vmul.f32 %v390, %v1317
      %v1322 = vmul.f32 %v391, %v1317
      %v1323 = vmul.f32 %v392, %v1317
      %v1324 = vmul.f32 %v393, %v1317
      %v1325 = vmul.f32 %v394, %v1317
      %v1326 = vmul.f32 %v395, %v1317
      %v1327 = vmul.f32 %v396, %v1317
      %v1328 = vmul.f32 %v397, %v1317
      %v1329 = vmul.f32 %v398, %v1317
      %v1330 = vmul.f32 %v399, %v1317
      %v1331 = vmul.f32 %v400, %v1317
      %v1332 = vmul.f32 %v401, %v1317
      %v1333 = vmul.f32 %v402, %v1317
      %v1334 = vmul.f32 %v403, %v1317
      %v1335 = vmul.f32 %v404, %v1317
      %v1336 = vmul.f32 %v405, %v1317
      %v1337 = vmul.f32 %v406, %v1317
      %v1338 = vmul.f32 %v407, %v1317
      %v1339 = vmul.f32 %v408, %v1317
      %v1340 = vmul.f32 %v409, %v1317
      %v1341 = vmul.f32 %v410, %v1317
      %v1342 = vmul.f32 %v411, %v1317
      %v1343 = vmul.f32 %v412, %v1317
      %v1344 = vmul.f32 %v413, %v1317
      %v1345 = vmul.f32 %v414, %v1317
      %v1346 = vmul.f32 %v415, %v1317
      %v1347 = vmul.f32 %v416, %v1317
      %v1348 = vmul.f32 %v417, %v1317
      %v1349 = vmul.f32 %v418, %v1317
      %v1350 = vmul.f32 %v419, %v1317
      %v1351 = vmul.f32 %v420, %v1317
      %v1352 = vmul.f32 %v421, %v1317
      %v1353 = vmul.f32 %v422, %v1317
      %v1354 = vmul.f32 %v423, %v1317
      %v1355 = vmul.f32 %v424, %v1317
      %v1356 = vmul.f32 %v425, %v1317
      %v1357 = vmul.f32 %v426, %v1317
      %v1358 = vmul.f32 %v427, %v1317
      %v1359 = vmul.f32 %v428, %v1317
      %v1360 = vmul.f32 %v429, %v1317
      %v1361 = vmul.f32 %v430, %v1317
      %v1362 = vmul.f32 %v431, %v1317
      %v1363 = vmul.f32 %v432, %v1317
      %v1364 = vmul.f32 %v433, %v1317
      %v1365 = vmul.f32 %v434, %v1317
      %v1414 = vrot.slane %v1318, 2
      %v1415 = vrot.slane %v1319, 2
      %v1416 = vsel %vm857, %v1414, %v1415
      %v1417 = vrot.slane %v1320, 2
      %v1418 = vsel %vm857, %v1415, %v1417
      %v1419 = vrot.slane %v1321, 2
      %v1420 = vrot.slane %v1322, 2
      %v1421 = vsel %vm857, %v1419, %v1420
      %v1422 = vrot.slane %v1323, 2
      %v1423 = vsel %vm857, %v1420, %v1422
      %v1424 = vrot.slane %v1324, 2
      %v1425 = vrot.slane %v1325, 2
      %v1426 = vsel %vm857, %v1424, %v1425
      %v1427 = vrot.slane %v1326, 2
      %v1428 = vsel %vm857, %v1425, %v1427
      %v1429 = vrot.slane %v1327, 2
      %v1430 = vrot.slane %v1328, 2
      %v1431 = vsel %vm857, %v1429, %v1430
      %v1432 = vrot.slane %v1329, 2
      %v1433 = vsel %vm857, %v1430, %v1432
      %v1434 = vrot.slane %v1330, 2
      %v1435 = vrot.slane %v1331, 2
      %v1436 = vsel %vm857, %v1434, %v1435
      %v1437 = vrot.slane %v1332, 2
      %v1438 = vsel %vm857, %v1435, %v1437
      %v1439 = vrot.slane %v1333, 2
      %v1440 = vrot.slane %v1334, 2
      %v1441 = vsel %vm857, %v1439, %v1440
      %v1442 = vrot.slane %v1335, 2
      %v1443 = vsel %vm857, %v1440, %v1442
      %v1444 = vrot.slane %v1336, 2
      %v1445 = vrot.slane %v1337, 2
      %v1446 = vsel %vm857, %v1444, %v1445
      %v1447 = vrot.slane %v1338, 2
      %v1448 = vsel %vm857, %v1445, %v1447
      %v1449 = vrot.slane %v1339, 2
      %v1450 = vrot.slane %v1340, 2
      %v1451 = vsel %vm857, %v1449, %v1450
      %v1452 = vrot.slane %v1341, 2
      %v1453 = vsel %vm857, %v1450, %v1452
      %v1454 = vrot.slane %v1342, 2
      %v1455 = vrot.slane %v1343, 2
      %v1456 = vsel %vm857, %v1454, %v1455
      %v1457 = vrot.slane %v1344, 2
      %v1458 = vsel %vm857, %v1455, %v1457
      %v1459 = vrot.slane %v1345, 2
      %v1460 = vrot.slane %v1346, 2
      %v1461 = vsel %vm857, %v1459, %v1460
      %v1462 = vrot.slane %v1347, 2
      %v1463 = vsel %vm857, %v1460, %v1462
      %v1464 = vrot.slane %v1348, 2
      %v1465 = vrot.slane %v1349, 2
      %v1466 = vsel %vm857, %v1464, %v1465
      %v1467 = vrot.slane %v1350, 2
      %v1468 = vsel %vm857, %v1465, %v1467
      %v1469 = vrot.slane %v1351, 2
      %v1470 = vrot.slane %v1352, 2
      %v1471 = vsel %vm857, %v1469, %v1470
      %v1472 = vrot.slane %v1353, 2
      %v1473 = vsel %vm857, %v1470, %v1472
      %v1474 = vrot.slane %v1354, 2
      %v1475 = vrot.slane %v1355, 2
      %v1476 = vsel %vm857, %v1474, %v1475
      %v1477 = vrot.slane %v1356, 2
      %v1478 = vsel %vm857, %v1475, %v1477
      %v1479 = vrot.slane %v1357, 2
      %v1480 = vrot.slane %v1358, 2
      %v1481 = vsel %vm857, %v1479, %v1480
      %v1482 = vrot.slane %v1359, 2
      %v1483 = vsel %vm857, %v1480, %v1482
      %v1484 = vrot.slane %v1360, 2
      %v1485 = vrot.slane %v1361, 2
      %v1486 = vsel %vm857, %v1484, %v1485
      %v1487 = vrot.slane %v1362, 2
      %v1488 = vsel %vm857, %v1485, %v1487
      %v1489 = vrot.slane %v1363, 2
      %v1490 = vrot.slane %v1364, 2
      %v1491 = vsel %vm857, %v1489, %v1490
      %v1492 = vrot.slane %v1365, 2
      %v1493 = vsel %vm857, %v1490, %v1492
      %v1526 = vadd.f32 %v1282, %v1416
      %v1527 = vadd.f32 %v1283, %v1418
      %v1528 = vadd.f32 %v1284, %v1421
      %v1529 = vadd.f32 %v1285, %v1423
      %v1530 = vadd.f32 %v1286, %v1426
      %v1531 = vadd.f32 %v1287, %v1428
      %v1532 = vadd.f32 %v1288, %v1431
      %v1533 = vadd.f32 %v1289, %v1433
      %v1534 = vadd.f32 %v1290, %v1436
      %v1535 = vadd.f32 %v1291, %v1438
      %v1536 = vadd.f32 %v1292, %v1441
      %v1537 = vadd.f32 %v1293, %v1443
      %v1538 = vadd.f32 %v1294, %v1446
      %v1539 = vadd.f32 %v1295, %v1448
      %v1540 = vadd.f32 %v1296, %v1451
      %v1541 = vadd.f32 %v1297, %v1453
      %v1542 = vadd.f32 %v1298, %v1456
      %v1543 = vadd.f32 %v1299, %v1458
      %v1544 = vadd.f32 %v1300, %v1461
      %v1545 = vadd.f32 %v1301, %v1463
      %v1546 = vadd.f32 %v1302, %v1466
      %v1547 = vadd.f32 %v1303, %v1468
      %v1548 = vadd.f32 %v1304, %v1471
      %v1549 = vadd.f32 %v1305, %v1473
      %v1550 = vadd.f32 %v1306, %v1476
      %v1551 = vadd.f32 %v1307, %v1478
      %v1552 = vadd.f32 %v1308, %v1481
      %v1553 = vadd.f32 %v1309, %v1483
      %v1554 = vadd.f32 %v1310, %v1486
      %v1555 = vadd.f32 %v1311, %v1488
      %v1556 = vadd.f32 %v1312, %v1491
      %v1557 = vadd.f32 %v1313, %v1493
      %v1558 = vlaneseq
      %v1559 = vshrl.u32 %v1558, 7
      %v1560 = vsub.s32 0, %v1559
      %v1561 = vrot.slane %v443, %v1560
      %v1562 = vmul.f32 %v390, %v1561
      %v1563 = vmul.f32 %v391, %v1561
      %v1564 = vmul.f32 %v393, %v1561
      %v1565 = vmul.f32 %v394, %v1561
      %v1566 = vmul.f32 %v396, %v1561
      %v1567 = vmul.f32 %v397, %v1561
      %v1568 = vmul.f32 %v399, %v1561
      %v1569 = vmul.f32 %v400, %v1561
      %v1570 = vmul.f32 %v402, %v1561
      %v1571 = vmul.f32 %v403, %v1561
      %v1572 = vmul.f32 %v405, %v1561
      %v1573 = vmul.f32 %v406, %v1561
      %v1574 = vmul.f32 %v408, %v1561
      %v1575 = vmul.f32 %v409, %v1561
      %v1576 = vmul.f32 %v411, %v1561
      %v1577 = vmul.f32 %v412, %v1561
      %v1578 = vmul.f32 %v414, %v1561
      %v1579 = vmul.f32 %v415, %v1561
      %v1580 = vmul.f32 %v417, %v1561
      %v1581 = vmul.f32 %v418, %v1561
      %v1582 = vmul.f32 %v420, %v1561
      %v1583 = vmul.f32 %v421, %v1561
      %v1584 = vmul.f32 %v423, %v1561
      %v1585 = vmul.f32 %v424, %v1561
      %v1586 = vmul.f32 %v426, %v1561
      %v1587 = vmul.f32 %v427, %v1561
      %v1588 = vmul.f32 %v429, %v1561
      %v1589 = vmul.f32 %v430, %v1561
      %v1590 = vmul.f32 %v432, %v1561
      %v1591 = vmul.f32 %v433, %v1561
      %v1592 = vmul.f32 %v435, %v1561
      %v1593 = vmul.f32 %v436, %v1561
      %v1594 = vadd.f32 %v1526, %v1562
      %v1595 = vadd.f32 %v1527, %v1563
      %v1596 = vadd.f32 %v1528, %v1564
      %v1597 = vadd.f32 %v1529, %v1565
      %v1598 = vadd.f32 %v1530, %v1566
      %v1599 = vadd.f32 %v1531, %v1567
      %v1600 = vadd.f32 %v1532, %v1568
      %v1601 = vadd.f32 %v1533, %v1569
      %v1602 = vadd.f32 %v1534, %v1570
      %v1603 = vadd.f32 %v1535, %v1571
      %v1604 = vadd.f32 %v1536, %v1572
      %v1605 = vadd.f32 %v1537, %v1573
      %v1606 = vadd.f32 %v1538, %v1574
      %v1607 = vadd.f32 %v1539, %v1575
      %v1608 = vadd.f32 %v1540, %v1576
      %v1609 = vadd.f32 %v1541, %v1577
      %v1610 = vadd.f32 %v1542, %v1578
      %v1611 = vadd.f32 %v1543, %v1579
      %v1612 = vadd.f32 %v1544, %v1580
      %v1613 = vadd.f32 %v1545, %v1581
      %v1614 = vadd.f32 %v1546, %v1582
      %v1615 = vadd.f32 %v1547, %v1583
      %v1616 = vadd.f32 %v1548, %v1584
      %v1617 = vadd.f32 %v1549, %v1585
      %v1618 = vadd.f32 %v1550, %v1586
      %v1619 = vadd.f32 %v1551, %v1587
      %v1620 = vadd.f32 %v1552, %v1588
      %v1621 = vadd.f32 %v1553, %v1589
      %v1622 = vadd.f32 %v1554, %v1590
      %v1623 = vadd.f32 %v1555, %v1591
      %v1624 = vadd.f32 %v1556, %v1592
      %v1625 = vadd.f32 %v1557, %v1593
      %v1626 = vlaneseq
      %v1627 = vshrl.u32 %v1626, 7
      %v1628 = vsub.s32 1, %v1627
      %v1629 = vrot.slane %v443, %v1628
      %v1630 = vmul.f32 %v390, %v1629
      %v1631 = vmul.f32 %v391, %v1629
      %v1632 = vmul.f32 %v392, %v1629
      %v1633 = vmul.f32 %v393, %v1629
      %v1634 = vmul.f32 %v394, %v1629
      %v1635 = vmul.f32 %v395, %v1629
      %v1636 = vmul.f32 %v396, %v1629
      %v1637 = vmul.f32 %v397, %v1629
      %v1638 = vmul.f32 %v398, %v1629
      %v1639 = vmul.f32 %v399, %v1629
      %v1640 = vmul.f32 %v400, %v1629
      %v1641 = vmul.f32 %v401, %v1629
      %v1642 = vmul.f32 %v402, %v1629
      %v1643 = vmul.f32 %v403, %v1629
      %v1644 = vmul.f32 %v404, %v1629
      %v1645 = vmul.f32 %v405, %v1629
      %v1646 = vmul.f32 %v406, %v1629
      %v1647 = vmul.f32 %v407, %v1629
      %v1648 = vmul.f32 %v408, %v1629
      %v1649 = vmul.f32 %v409, %v1629
      %v1650 = vmul.f32 %v410, %v1629
      %v1651 = vmul.f32 %v411, %v1629
      %v1652 = vmul.f32 %v412, %v1629
      %v1653 = vmul.f32 %v413, %v1629
      %v1654 = vmul.f32 %v414, %v1629
      %v1655 = vmul.f32 %v415, %v1629
      %v1656 = vmul.f32 %v416, %v1629
      %v1657 = vmul.f32 %v417, %v1629
      %v1658 = vmul.f32 %v418, %v1629
      %v1659 = vmul.f32 %v419, %v1629
      %v1660 = vmul.f32 %v420, %v1629
      %v1661 = vmul.f32 %v421, %v1629
      %v1662 = vmul.f32 %v422, %v1629
      %v1663 = vmul.f32 %v423, %v1629
      %v1664 = vmul.f32 %v424, %v1629
      %v1665 = vmul.f32 %v425, %v1629
      %v1666 = vmul.f32 %v426, %v1629
      %v1667 = vmul.f32 %v427, %v1629
      %v1668 = vmul.f32 %v428, %v1629
      %v1669 = vmul.f32 %v429, %v1629
      %v1670 = vmul.f32 %v430, %v1629
      %v1671 = vmul.f32 %v431, %v1629
      %v1672 = vmul.f32 %v432, %v1629
      %v1673 = vmul.f32 %v433, %v1629
      %v1674 = vmul.f32 %v434, %v1629
      %v1675 = vmul.f32 %v435, %v1629
      %v1676 = vmul.f32 %v436, %v1629
      %v1677 = vmul.f32 %v437, %v1629
      %v1726 = vrot.slane %v1630, 1
      %v1727 = vrot.slane %v1631, 1
      %v1728 = vsel %vm612, %v1726, %v1727
      %v1729 = vrot.slane %v1632, 1
      %v1730 = vsel %vm612, %v1727, %v1729
      %v1731 = vrot.slane %v1633, 1
      %v1732 = vrot.slane %v1634, 1
      %v1733 = vsel %vm612, %v1731, %v1732
      %v1734 = vrot.slane %v1635, 1
      %v1735 = vsel %vm612, %v1732, %v1734
      %v1736 = vrot.slane %v1636, 1
      %v1737 = vrot.slane %v1637, 1
      %v1738 = vsel %vm612, %v1736, %v1737
      %v1739 = vrot.slane %v1638, 1
      %v1740 = vsel %vm612, %v1737, %v1739
      %v1741 = vrot.slane %v1639, 1
      %v1742 = vrot.slane %v1640, 1
      %v1743 = vsel %vm612, %v1741, %v1742
      %v1744 = vrot.slane %v1641, 1
      %v1745 = vsel %vm612, %v1742, %v1744
      %v1746 = vrot.slane %v1642, 1
      %v1747 = vrot.slane %v1643, 1
      %v1748 = vsel %vm612, %v1746, %v1747
      %v1749 = vrot.slane %v1644, 1
      %v1750 = vsel %vm612, %v1747, %v1749
      %v1751 = vrot.slane %v1645, 1
      %v1752 = vrot.slane %v1646, 1
      %v1753 = vsel %vm612, %v1751, %v1752
      %v1754 = vrot.slane %v1647, 1
      %v1755 = vsel %vm612, %v1752, %v1754
      %v1756 = vrot.slane %v1648, 1
      %v1757 = vrot.slane %v1649, 1
      %v1758 = vsel %vm612, %v1756, %v1757
      %v1759 = vrot.slane %v1650, 1
      %v1760 = vsel %vm612, %v1757, %v1759
      %v1761 = vrot.slane %v1651, 1
      %v1762 = vrot.slane %v1652, 1
      %v1763 = vsel %vm612, %v1761, %v1762
      %v1764 = vrot.slane %v1653, 1
      %v1765 = vsel %vm612, %v1762, %v1764
      %v1766 = vrot.slane %v1654, 1
      %v1767 = vrot.slane %v1655, 1
      %v1768 = vsel %vm612, %v1766, %v1767
      %v1769 = vrot.slane %v1656, 1
      %v1770 = vsel %vm612, %v1767, %v1769
      %v1771 = vrot.slane %v1657, 1
      %v1772 = vrot.slane %v1658, 1
      %v1773 = vsel %vm612, %v1771, %v1772
      %v1774 = vrot.slane %v1659, 1
      %v1775 = vsel %vm612, %v1772, %v1774
      %v1776 = vrot.slane %v1660, 1
      %v1777 = vrot.slane %v1661, 1
      %v1778 = vsel %vm612, %v1776, %v1777
      %v1779 = vrot.slane %v1662, 1
      %v1780 = vsel %vm612, %v1777, %v1779
      %v1781 = vrot.slane %v1663, 1
      %v1782 = vrot.slane %v1664, 1
      %v1783 = vsel %vm612, %v1781, %v1782
      %v1784 = vrot.slane %v1665, 1
      %v1785 = vsel %vm612, %v1782, %v1784
      %v1786 = vrot.slane %v1666, 1
      %v1787 = vrot.slane %v1667, 1
      %v1788 = vsel %vm612, %v1786, %v1787
      %v1789 = vrot.slane %v1668, 1
      %v1790 = vsel %vm612, %v1787, %v1789
      %v1791 = vrot.slane %v1669, 1
      %v1792 = vrot.slane %v1670, 1
      %v1793 = vsel %vm612, %v1791, %v1792
      %v1794 = vrot.slane %v1671, 1
      %v1795 = vsel %vm612, %v1792, %v1794
      %v1796 = vrot.slane %v1672, 1
      %v1797 = vrot.slane %v1673, 1
      %v1798 = vsel %vm612, %v1796, %v1797
      %v1799 = vrot.slane %v1674, 1
      %v1800 = vsel %vm612, %v1797, %v1799
      %v1801 = vrot.slane %v1675, 1
      %v1802 = vrot.slane %v1676, 1
      %v1803 = vsel %vm612, %v1801, %v1802
      %v1804 = vrot.slane %v1677, 1
      %v1805 = vsel %vm612, %v1802, %v1804
      %v1838 = vadd.f32 %v1594, %v1728
      %v1839 = vadd.f32 %v1595, %v1730
      %v1840 = vadd.f32 %v1596, %v1733
      %v1841 = vadd.f32 %v1597, %v1735
      %v1842 = vadd.f32 %v1598, %v1738
      %v1843 = vadd.f32 %v1599, %v1740
      %v1844 = vadd.f32 %v1600, %v1743
      %v1845 = vadd.f32 %v1601, %v1745
      %v1846 = vadd.f32 %v1602, %v1748
      %v1847 = vadd.f32 %v1603, %v1750
      %v1848 = vadd.f32 %v1604, %v1753
      %v1849 = vadd.f32 %v1605, %v1755
      %v1850 = vadd.f32 %v1606, %v1758
      %v1851 = vadd.f32 %v1607, %v1760
      %v1852 = vadd.f32 %v1608, %v1763
      %v1853 = vadd.f32 %v1609, %v1765
      %v1854 = vadd.f32 %v1610, %v1768
      %v1855 = vadd.f32 %v1611, %v1770
      %v1856 = vadd.f32 %v1612, %v1773
      %v1857 = vadd.f32 %v1613, %v1775
      %v1858 = vadd.f32 %v1614, %v1778
      %v1859 = vadd.f32 %v1615, %v1780
      %v1860 = vadd.f32 %v1616, %v1783
      %v1861 = vadd.f32 %v1617, %v1785
      %v1862 = vadd.f32 %v1618, %v1788
      %v1863 = vadd.f32 %v1619, %v1790
      %v1864 = vadd.f32 %v1620, %v1793
      %v1865 = vadd.f32 %v1621, %v1795
      %v1866 = vadd.f32 %v1622, %v1798
      %v1867 = vadd.f32 %v1623, %v1800
      %v1868 = vadd.f32 %v1624, %v1803
      %v1869 = vadd.f32 %v1625, %v1805
      %v1870 = vlaneseq
      %v1871 = vshrl.u32 %v1870, 7
      %v1872 = vsub.s32 2, %v1871
      %v1873 = vrot.slane %v443, %v1872
      %v1874 = vmul.f32 %v390, %v1873
      %v1875 = vmul.f32 %v391, %v1873
      %v1876 = vmul.f32 %v392, %v1873
      %v1877 = vmul.f32 %v393, %v1873
      %v1878 = vmul.f32 %v394, %v1873
      %v1879 = vmul.f32 %v395, %v1873
      %v1880 = vmul.f32 %v396, %v1873
      %v1881 = vmul.f32 %v397, %v1873
      %v1882 = vmul.f32 %v398, %v1873
      %v1883 = vmul.f32 %v399, %v1873
      %v1884 = vmul.f32 %v400, %v1873
      %v1885 = vmul.f32 %v401, %v1873
      %v1886 = vmul.f32 %v402, %v1873
      %v1887 = vmul.f32 %v403, %v1873
      %v1888 = vmul.f32 %v404, %v1873
      %v1889 = vmul.f32 %v405, %v1873
      %v1890 = vmul.f32 %v406, %v1873
      %v1891 = vmul.f32 %v407, %v1873
      %v1892 = vmul.f32 %v408, %v1873
      %v1893 = vmul.f32 %v409, %v1873
      %v1894 = vmul.f32 %v410, %v1873
      %v1895 = vmul.f32 %v411, %v1873
      %v1896 = vmul.f32 %v412, %v1873
      %v1897 = vmul.f32 %v413, %v1873
      %v1898 = vmul.f32 %v414, %v1873
      %v1899 = vmul.f32 %v415, %v1873
      %v1900 = vmul.f32 %v416, %v1873
      %v1901 = vmul.f32 %v417, %v1873
      %v1902 = vmul.f32 %v418, %v1873
      %v1903 = vmul.f32 %v419, %v1873
      %v1904 = vmul.f32 %v420, %v1873
      %v1905 = vmul.f32 %v421, %v1873
      %v1906 = vmul.f32 %v422, %v1873
      %v1907 = vmul.f32 %v423, %v1873
      %v1908 = vmul.f32 %v424, %v1873
      %v1909 = vmul.f32 %v425, %v1873
      %v1910 = vmul.f32 %v426, %v1873
      %v1911 = vmul.f32 %v427, %v1873
      %v1912 = vmul.f32 %v428, %v1873
      %v1913 = vmul.f32 %v429, %v1873
      %v1914 = vmul.f32 %v430, %v1873
      %v1915 = vmul.f32 %v431, %v1873
      %v1916 = vmul.f32 %v432, %v1873
      %v1917 = vmul.f32 %v433, %v1873
      %v1918 = vmul.f32 %v434, %v1873
      %v1919 = vmul.f32 %v435, %v1873
      %v1920 = vmul.f32 %v436, %v1873
      %v1921 = vmul.f32 %v437, %v1873
      %v1970 = vrot.slane %v1874, 2
      %v1971 = vrot.slane %v1875, 2
      %v1972 = vsel %vm857, %v1970, %v1971
      %v1973 = vrot.slane %v1876, 2
      %v1974 = vsel %vm857, %v1971, %v1973
      %v1975 = vrot.slane %v1877, 2
      %v1976 = vrot.slane %v1878, 2
      %v1977 = vsel %vm857, %v1975, %v1976
      %v1978 = vrot.slane %v1879, 2
      %v1979 = vsel %vm857, %v1976, %v1978
      %v1980 = vrot.slane %v1880, 2
      %v1981 = vrot.slane %v1881, 2
      %v1982 = vsel %vm857, %v1980, %v1981
      %v1983 = vrot.slane %v1882, 2
      %v1984 = vsel %vm857, %v1981, %v1983
      %v1985 = vrot.slane %v1883, 2
      %v1986 = vrot.slane %v1884, 2
      %v1987 = vsel %vm857, %v1985, %v1986
      %v1988 = vrot.slane %v1885, 2
      %v1989 = vsel %vm857, %v1986, %v1988
      %v1990 = vrot.slane %v1886, 2
      %v1991 = vrot.slane %v1887, 2
      %v1992 = vsel %vm857, %v1990, %v1991
      %v1993 = vrot.slane %v1888, 2
      %v1994 = vsel %vm857, %v1991, %v1993
      %v1995 = vrot.slane %v1889, 2
      %v1996 = vrot.slane %v1890, 2
      %v1997 = vsel %vm857, %v1995, %v1996
      %v1998 = vrot.slane %v1891, 2
      %v1999 = vsel %vm857, %v1996, %v1998
      %v2000 = vrot.slane %v1892, 2
      %v2001 = vrot.slane %v1893, 2
      %v2002 = vsel %vm857, %v2000, %v2001
      %v2003 = vrot.slane %v1894, 2
      %v2004 = vsel %vm857, %v2001, %v2003
      %v2005 = vrot.slane %v1895, 2
      %v2006 = vrot.slane %v1896, 2
      %v2007 = vsel %vm857, %v2005, %v2006
      %v2008 = vrot.slane %v1897, 2
      %v2009 = vsel %vm857, %v2006, %v2008
      %v2010 = vrot.slane %v1898, 2
      %v2011 = vrot.slane %v1899, 2
      %v2012 = vsel %vm857, %v2010, %v2011
      %v2013 = vrot.slane %v1900, 2
      %v2014 = vsel %vm857, %v2011, %v2013
      %v2015 = vrot.slane %v1901, 2
      %v2016 = vrot.slane %v1902, 2
      %v2017 = vsel %vm857, %v2015, %v2016
      %v2018 = vrot.slane %v1903, 2
      %v2019 = vsel %vm857, %v2016, %v2018
      %v2020 = vrot.slane %v1904, 2
      %v2021 = vrot.slane %v1905, 2
      %v2022 = vsel %vm857, %v2020, %v2021
      %v2023 = vrot.slane %v1906, 2
      %v2024 = vsel %vm857, %v2021, %v2023
      %v2025 = vrot.slane %v1907, 2
      %v2026 = vrot.slane %v1908, 2
      %v2027 = vsel %vm857, %v2025, %v2026
      %v2028 = vrot.slane %v1909, 2
      %v2029 = vsel %vm857, %v2026, %v2028
      %v2030 = vrot.slane %v1910, 2
      %v2031 = vrot.slane %v1911, 2
      %v2032 = vsel %vm857, %v2030, %v2031
      %v2033 = vrot.slane %v1912, 2
      %v2034 = vsel %vm857, %v2031, %v2033
      %v2035 = vrot.slane %v1913, 2
      %v2036 = vrot.slane %v1914, 2
      %v2037 = vsel %vm857, %v2035, %v2036
      %v2038 = vrot.slane %v1915, 2
      %v2039 = vsel %vm857, %v2036, %v2038
      %v2040 = vrot.slane %v1916, 2
      %v2041 = vrot.slane %v1917, 2
      %v2042 = vsel %vm857, %v2040, %v2041
      %v2043 = vrot.slane %v1918, 2
      %v2044 = vsel %vm857, %v2041, %v2043
      %v2045 = vrot.slane %v1919, 2
      %v2046 = vrot.slane %v1920, 2
      %v2047 = vsel %vm857, %v2045, %v2046
      %v2048 = vrot.slane %v1921, 2
      %v2049 = vsel %vm857, %v2046, %v2048
      %v2082 = vadd.f32 %v1838, %v1972
      %v2083 = vadd.f32 %v1839, %v1974
      %v2084 = vadd.f32 %v1840, %v1977
      %v2085 = vadd.f32 %v1841, %v1979
      %v2086 = vadd.f32 %v1842, %v1982
      %v2087 = vadd.f32 %v1843, %v1984
      %v2088 = vadd.f32 %v1844, %v1987
      %v2089 = vadd.f32 %v1845, %v1989
      %v2090 = vadd.f32 %v1846, %v1992
      %v2091 = vadd.f32 %v1847, %v1994
      %v2092 = vadd.f32 %v1848, %v1997
      %v2093 = vadd.f32 %v1849, %v1999
      %v2094 = vadd.f32 %v1850, %v2002
      %v2095 = vadd.f32 %v1851, %v2004
      %v2096 = vadd.f32 %v1852, %v2007
      %v2097 = vadd.f32 %v1853, %v2009
      %v2098 = vadd.f32 %v1854, %v2012
      %v2099 = vadd.f32 %v1855, %v2014
      %v2100 = vadd.f32 %v1856, %v2017
      %v2101 = vadd.f32 %v1857, %v2019
      %v2102 = vadd.f32 %v1858, %v2022
      %v2103 = vadd.f32 %v1859, %v2024
      %v2104 = vadd.f32 %v1860, %v2027
      %v2105 = vadd.f32 %v1861, %v2029
      %v2106 = vadd.f32 %v1862, %v2032
      %v2107 = vadd.f32 %v1863, %v2034
      %v2108 = vadd.f32 %v1864, %v2037
      %v2109 = vadd.f32 %v1865, %v2039
      %v2110 = vadd.f32 %v1866, %v2042
      %v2111 = vadd.f32 %v1867, %v2044
      %v2112 = vadd.f32 %v1868, %v2047
      %v2113 = vadd.f32 %v1869, %v2049
      %v2114 = vld [vmem:[%s224] sm:$0x1]
      %v2116 = vlaneseq
      %v2117 = vshrl.u32 %v2116, 7
      %v2118 = vsub.s32 0, %v2117
      %v2119 = vrot.slane %v2114, %v2118
      %v2121 = vadd.f32 %v2082, %v2119
      %v2122 = vadd.f32 %v2083, %v2119
      %v2123 = vadd.f32 %v2084, %v2119
      %v2124 = vadd.f32 %v2085, %v2119
      %v2125 = vadd.f32 %v2086, %v2119
      %v2126 = vadd.f32 %v2087, %v2119
      %v2127 = vadd.f32 %v2088, %v2119
      %v2128 = vadd.f32 %v2089, %v2119
      %v2129 = vadd.f32 %v2090, %v2119
      %v2130 = vadd.f32 %v2091, %v2119
      %v2131 = vadd.f32 %v2092, %v2119
      %v2132 = vadd.f32 %v2093, %v2119
      %v2133 = vadd.f32 %v2094, %v2119
      %v2134 = vadd.f32 %v2095, %v2119
      %v2135 = vadd.f32 %v2096, %v2119
      %v2136 = vadd.f32 %v2097, %v2119
      %v2137 = vadd.f32 %v2098, %v2119
      %v2138 = vadd.f32 %v2099, %v2119
      %v2139 = vadd.f32 %v2100, %v2119
      %v2140 = vadd.f32 %v2101, %v2119
      %v2141 = vadd.f32 %v2102, %v2119
      %v2142 = vadd.f32 %v2103, %v2119
      %v2143 = vadd.f32 %v2104, %v2119
      %v2144 = vadd.f32 %v2105, %v2119
      %v2145 = vadd.f32 %v2106, %v2119
      %v2146 = vadd.f32 %v2107, %v2119
      %v2147 = vadd.f32 %v2108, %v2119
      %v2148 = vadd.f32 %v2109, %v2119
      %v2149 = vadd.f32 %v2110, %v2119
      %v2150 = vadd.f32 %v2111, %v2119
      %v2151 = vadd.f32 %v2112, %v2119
      %v2152 = vadd.f32 %v2113, %v2119
      %v2153 = vmax.f32 %v2121, 0.0
      %v2154 = vmax.f32 %v2122, 0.0
      %v2155 = vmax.f32 %v2123, 0.0
      %v2156 = vmax.f32 %v2124, 0.0
      %v2157 = vmax.f32 %v2125, 0.0
      %v2158 = vmax.f32 %v2126, 0.0
      %v2159 = vmax.f32 %v2127, 0.0
      %v2160 = vmax.f32 %v2128, 0.0
      %v2161 = vmax.f32 %v2129, 0.0
      %v2162 = vmax.f32 %v2130, 0.0
      %v2163 = vmax.f32 %v2131, 0.0
      %v2164 = vmax.f32 %v2132, 0.0
      %v2165 = vmax.f32 %v2133, 0.0
      %v2166 = vmax.f32 %v2134, 0.0
      %v2167 = vmax.f32 %v2135, 0.0
      %v2168 = vmax.f32 %v2136, 0.0
      %v2169 = vmax.f32 %v2137, 0.0
      %v2170 = vmax.f32 %v2138, 0.0
      %v2171 = vmax.f32 %v2139, 0.0
      %v2172 = vmax.f32 %v2140, 0.0
      %v2173 = vmax.f32 %v2141, 0.0
      %v2174 = vmax.f32 %v2142, 0.0
      %v2175 = vmax.f32 %v2143, 0.0
      %v2176 = vmax.f32 %v2144, 0.0
      %v2177 = vmax.f32 %v2145, 0.0
      %v2178 = vmax.f32 %v2146, 0.0
      %v2179 = vmax.f32 %v2147, 0.0
      %v2180 = vmax.f32 %v2148, 0.0
      %v2181 = vmax.f32 %v2149, 0.0
      %v2182 = vmax.f32 %v2150, 0.0
      %v2183 = vmax.f32 %v2151, 0.0
      %v2184 = vmax.f32 %v2152, 0.0
      %v2185 = vpack.c.bf16 %v2154, %v2153
      %v2186 = vpack.c.bf16 %v2156, %v2155
      %v2187 = vpack.c.bf16 %v2158, %v2157
      %v2188 = vpack.c.bf16 %v2160, %v2159
      %v2189 = vpack.c.bf16 %v2162, %v2161
      %v2190 = vpack.c.bf16 %v2164, %v2163
      %v2191 = vpack.c.bf16 %v2166, %v2165
      %v2192 = vpack.c.bf16 %v2168, %v2167
      %v2193 = vpack.c.bf16 %v2170, %v2169
      %v2194 = vpack.c.bf16 %v2172, %v2171
      %v2195 = vpack.c.bf16 %v2174, %v2173
      %v2196 = vpack.c.bf16 %v2176, %v2175
      %v2197 = vpack.c.bf16 %v2178, %v2177
      %v2198 = vpack.c.bf16 %v2180, %v2179
      %v2199 = vpack.c.bf16 %v2182, %v2181
      %v2200 = vpack.c.bf16 %v2184, %v2183
      %v2217 = vunpack.c.l.b16 %v2185
      %v2218 = vunpack.c.h.b16 %v2185
      %v2219 = vunpack.c.l.b16 %v2186
      %v2220 = vunpack.c.h.b16 %v2186
      %v2221 = vunpack.c.l.b16 %v2187
      %v2222 = vunpack.c.h.b16 %v2187
      %v2223 = vunpack.c.l.b16 %v2188
      %v2224 = vunpack.c.h.b16 %v2188
      %v2225 = vunpack.c.l.b16 %v2189
      %v2226 = vunpack.c.h.b16 %v2189
      %v2227 = vunpack.c.l.b16 %v2190
      %v2228 = vunpack.c.h.b16 %v2190
      %v2229 = vunpack.c.l.b16 %v2191
      %v2230 = vunpack.c.h.b16 %v2191
      %v2231 = vunpack.c.l.b16 %v2192
      %v2232 = vunpack.c.h.b16 %v2192
      %v2233 = vunpack.c.l.b16 %v2193
      %v2234 = vunpack.c.h.b16 %v2193
      %v2235 = vunpack.c.l.b16 %v2194
      %v2236 = vunpack.c.h.b16 %v2194
      %v2237 = vunpack.c.l.b16 %v2195
      %v2238 = vunpack.c.h.b16 %v2195
      %v2239 = vunpack.c.l.b16 %v2196
      %v2240 = vunpack.c.h.b16 %v2196
      %v2241 = vunpack.c.l.b16 %v2197
      %v2242 = vunpack.c.h.b16 %v2197
      %v2243 = vunpack.c.l.b16 %v2198
      %v2244 = vunpack.c.h.b16 %v2198
      %v2245 = vunpack.c.l.b16 %v2199
      %v2246 = vunpack.c.h.b16 %v2199
      %v2247 = vunpack.c.l.b16 %v2200
      %v2248 = vunpack.c.h.b16 %v2200
      %v2249 = vpack.c.b16 %v2217, %v2217
      %v2250 = vpack.c.b16 %v2218, %v2218
      %v2251 = vpack.c.b16 %v2219, %v2219
      %v2252 = vpack.c.b16 %v2220, %v2220
      %v2253 = vpack.c.b16 %v2221, %v2221
      %v2254 = vpack.c.b16 %v2222, %v2222
      %v2255 = vpack.c.b16 %v2223, %v2223
      %v2256 = vpack.c.b16 %v2224, %v2224
      %v2257 = vpack.c.b16 %v2225, %v2225
      %v2258 = vpack.c.b16 %v2226, %v2226
      %v2259 = vpack.c.b16 %v2227, %v2227
      %v2260 = vpack.c.b16 %v2228, %v2228
      %v2261 = vpack.c.b16 %v2229, %v2229
      %v2262 = vpack.c.b16 %v2230, %v2230
      %v2263 = vpack.c.b16 %v2231, %v2231
      %v2264 = vpack.c.b16 %v2232, %v2232
      %v2265 = vpack.c.b16 %v2233, %v2233
      %v2266 = vpack.c.b16 %v2234, %v2234
      %v2267 = vpack.c.b16 %v2235, %v2235
      %v2268 = vpack.c.b16 %v2236, %v2236
      %v2269 = vpack.c.b16 %v2237, %v2237
      %v2270 = vpack.c.b16 %v2238, %v2238
      %v2271 = vpack.c.b16 %v2239, %v2239
      %v2272 = vpack.c.b16 %v2240, %v2240
      %v2273 = vpack.c.b16 %v2241, %v2241
      %v2274 = vpack.c.b16 %v2242, %v2242
      %v2275 = vpack.c.b16 %v2243, %v2243
      %v2276 = vpack.c.b16 %v2244, %v2244
      %v2277 = vpack.c.b16 %v2245, %v2245
      %v2278 = vpack.c.b16 %v2246, %v2246
      %v2279 = vpack.c.b16 %v2247, %v2247
      %v2280 = vpack.c.b16 %v2248, %v2248
      %2313 = vst [vmem:[%s232] sm:$0xf] %v2249
      %2314 = vst [vmem:[%s232 + $0x4] sm:$0xf] %v2250
      %2315 = vst [vmem:[%s232 + $0x8] sm:$0xf] %v2251
      %2316 = vst [vmem:[%s232 + $0xc] sm:$0xf] %v2252
      %2317 = vst [vmem:[%s232 + $0x10] sm:$0xf] %v2253
      %2318 = vst [vmem:[%s232 + $0x14] sm:$0xf] %v2254
      %2319 = vst [vmem:[%s232 + $0x18] sm:$0xf] %v2255
      %2320 = vst [vmem:[%s232 + $0x1c] sm:$0xf] %v2256
      %2321 = vst [vmem:[%s232 + $0x20] sm:$0xf] %v2257
      %2322 = vst [vmem:[%s232 + $0x24] sm:$0xf] %v2258
      %2323 = vst [vmem:[%s232 + $0x28] sm:$0xf] %v2259
      %2324 = vst [vmem:[%s232 + $0x2c] sm:$0xf] %v2260
      %2325 = vst [vmem:[%s232 + $0x30] sm:$0xf] %v2261
      %2326 = vst [vmem:[%s232 + $0x34] sm:$0xf] %v2262
      %2327 = vst [vmem:[%s232 + $0x38] sm:$0xf] %v2263
      %2328 = vst [vmem:[%s232 + $0x3c] sm:$0xf] %v2264
      %2329 = vst [vmem:[%s232 + $0x40] sm:$0xf] %v2265
      %2330 = vst [vmem:[%s232 + $0x44] sm:$0xf] %v2266
      %2331 = vst [vmem:[%s232 + $0x48] sm:$0xf] %v2267
      %2332 = vst [vmem:[%s232 + $0x4c] sm:$0xf] %v2268
      %2333 = vst [vmem:[%s232 + $0x50] sm:$0xf] %v2269
      %2334 = vst [vmem:[%s232 + $0x54] sm:$0xf] %v2270
      %2335 = vst [vmem:[%s232 + $0x58] sm:$0xf] %v2271
      %2336 = vst [vmem:[%s232 + $0x5c] sm:$0xf] %v2272
      %2337 = vst [vmem:[%s232 + $0x60] sm:$0xf] %v2273
      %2338 = vst [vmem:[%s232 + $0x64] sm:$0xf] %v2274
      %2339 = vst [vmem:[%s232 + $0x68] sm:$0xf] %v2275
      %2340 = vst [vmem:[%s232 + $0x6c] sm:$0xf] %v2276
      %2341 = vst [vmem:[%s232 + $0x70] sm:$0xf] %v2277
      %2342 = vst [vmem:[%s232 + $0x74] sm:$0xf] %v2278
      %2343 = vst [vmem:[%s232 + $0x78] sm:$0xf] %v2279
      %2344 = vst [vmem:[%s232 + $0x7c] sm:$0xf] %v2280
      %p2345 = scmp.lt.s32.totalorder %s18, 1
      %s2346 = scalar_select %p2345, %s18, 1
      %p2347 = scmp.lt.s32.totalorder %s19, 0
      %s2348 = scalar_select %p2347, %s19, 0
      %s2349 = smul.addr %s2346, 32
      %s2350 = sadd.s32 %s2348, %s2349
      %s2351 = smul.addr %s2350, 4
      %s2352 = scalar_lea.vmem %s3, %s2351
      // Predicated region
      $region33: #{block_forward.4} parent=31 // pred_check
        %p2353 = pneg %p126
      $region34: #{block_forward.4} parent=31 // pred_check_branch
        %2355 = sbr.rel (%p2353) target = $region36
      $region35: #{block_forward.4} parent=31 // pred_region
        _
      $region36: #{block_forward.4} parent=31 // pred_fallthru
        _
    $region32: #{block_forward.4} parent=5 // pred_fallthru
      _
    %p2356 = scmp.le.s32.totalorder 2, %s9
    // Predicated region
    $region37: #{block_forward.4} parent=5 // pred_check
      %p2357 = pneg %p2356
    $region38: #{block_forward.4} parent=5 // pred_check_branch
      %2359 = sbr.rel (%p2357) target = $region40
    $region39: #{block_forward.4} parent=5 // pred_region
      %s2360 = ssub.s32 %s9, 2
      // Predicated region
      $region41: #{block_forward.4} parent=39 // pred_check
        %p2361 = pneg %p132
      $region42: #{block_forward.4} parent=39 // pred_check_branch
        %2363 = sbr.rel (%p2361) target = $region44
      $region43: #{block_forward.4} parent=39 // pred_region
        %p2364 = scmp.lt.s32.totalorder %s20, 1
        %s2365 = scalar_select %p2364, %s20, 1
        %p2366 = scmp.lt.s32.totalorder %s21, 0
        %s2367 = scalar_select %p2366, %s21, 0
        %s2368 = smul.addr %s2365, 32
        %s2369 = sadd.s32 %s2367, %s2368
        %s2370 = smul.addr %s2369, 4
        %s2371 = scalar_lea.vmem %s3, %s2370
      $region44: #{block_forward.4} parent=39 // pred_fallthru
        _
    $region40: #{block_forward.4} parent=5 // pred_fallthru
      _
  $region6: #{block_forward.4} parent=0 // loop_footer
    %s13 = sadd.s32 1, %s9
  $region7: #{block_forward.4} parent=0 // loop_footer_branch
    %8 = sbr.rel target = $region3
  $region8: #{block_forward.4} parent=0 // loop_exit
    _

</llo_original>
